<compile_context>
chip_gen: v7x
topology: tpu7x:2x2x1
jax: 0.10.0
libtpu: 0.0.40
codegen_flags: <defaults>
</compile_context>

<pallas_src>
import math
import functools

import jax
import jax.numpy as jnp
from jax.experimental import pallas as pl
from jax.experimental.pallas import tpu as pltpu


# --------------------------- generation-aware sizing ------------------------

def _vmem_capacity_bytes():
    try:
        return int(pltpu.get_tpu_info().vmem_capacity_bytes)
    except Exception:            # interpret mode / older jax — be conservative
        return 64 * 1024 * 1024


_VMEM_CAP = _vmem_capacity_bytes()
# ~20% headroom for Mosaic internal scratch, semaphores and the extra
# double-buffers BlockSpec adds (don't request the full 64 MiB on v7x).
VMEM_LIMIT = min(int(_VMEM_CAP * 0.80), 112 * 1024 * 1024)
# Bigger M-tiles on the 128-MiB-VMEM parts (v5e/v6e) where the projection
# GEMMs are furthest below the roofline; more conservative on v7x (64 MiB).
TM_CAP = 1024 if _VMEM_CAP >= 100 * 1024 * 1024 else 512
TN_CAP = 512            # multiple of 256 (v6e MXU width)
TK_CAP = 512


def _tile(dim, cap):
    """Largest tile <= cap dividing dim, preferring 128-aligned sizes.

    Ragged lane dims (e.g. vocab) should be padded to a multiple of 128 by the
    caller (see prepare_params) so this never degrades to lane-sparse tiles.
    """
    if dim <= cap:
        return dim
    for align in (128, 8, 1):
        t = (cap // align) * align
        while t >= align:
            if dim % t == 0:
                return t
            t -= align
    return 1


# --------------------------- tiled linear (+bias) ---------------------------

def _matmul_kernel(x_ref, w_ref, b_ref, o_ref, acc_ref, *, activation):
    k = pl.program_id(2)

    @pl.when(k == 0)
    def _():
        acc_ref[...] = jnp.zeros(acc_ref.shape, acc_ref.dtype)

    acc_ref[...] += jnp.dot(x_ref[...], w_ref[...],
                            preferred_element_type=jnp.float32)

    @pl.when(k == pl.num_programs(2) - 1)
    def _():
        y = acc_ref[...] + b_ref[...]
        if activation == "relu":
            y = jnp.maximum(y, 0.0)
        o_ref[...] = y.astype(o_ref.dtype)


def linear(x, w, b, *, activation=None, out_dtype=None,
           tm_cap=None, tn_cap=TN_CAP, tk_cap=TK_CAP):
    """(M, K) @ (K, N) + b.  Tiled, pipelined, fp32 accumulation."""
    M, K = x.shape
    N = w.shape[1]
    out_dtype = out_dtype or x.dtype
    tm_cap = tm_cap or TM_CAP
    tm, tn, tk = _tile(M, tm_cap), _tile(N, tn_cap), _tile(K, tk_cap)
    kernel = functools.partial(_matmul_kernel, activation=activation)
    return pl.pallas_call(
        kernel,
        out_shape=jax.ShapeDtypeStruct((M, N), out_dtype),
        grid_spec=pltpu.PrefetchScalarGridSpec(
            num_scalar_prefetch=0,
            grid=(M // tm, N // tn, K // tk),
            in_specs=[
                pl.BlockSpec((tm, tk), lambda i, j, k: (i, k)),
                pl.BlockSpec((tk, tn), lambda i, j, k: (k, j)),
                pl.BlockSpec((1, tn), lambda i, j, k: (0, j)),
            ],
            out_specs=pl.BlockSpec((tm, tn), lambda i, j, k: (i, j)),
            scratch_shapes=[pltpu.VMEM((tm, tn), jnp.float32)],
        ),
        compiler_params=pltpu.CompilerParams(
            dimension_semantics=("parallel", "parallel", "arbitrary"),
            vmem_limit_bytes=VMEM_LIMIT,
        ),
    )(x, w, b.reshape(1, N))


# ------------------ fused multi-output projection (Q/K/V) -------------------

def _multi_matmul_kernel(*refs, n_out):
    x_ref = refs[0]
    w_refs = refs[1:1 + n_out]
    b_refs = refs[1 + n_out:1 + 2 * n_out]
    o_refs = refs[1 + 2 * n_out:1 + 3 * n_out]
    acc_refs = refs[1 + 3 * n_out:]
    k = pl.program_id(1)

    @pl.when(k == 0)
    def _():
        for acc in acc_refs:
            acc[...] = jnp.zeros(acc.shape, acc.dtype)

    x = x_ref[...]
    for w_ref, acc in zip(w_refs, acc_refs):
        acc[...] += jnp.dot(x, w_ref[...], preferred_element_type=jnp.float32)

    @pl.when(k == pl.num_programs(1) - 1)
    def _():
        for o_ref, acc, b_ref in zip(o_refs, acc_refs, b_refs):
            o_ref[...] = (acc[...] + b_ref[...]).astype(o_ref.dtype)


def multi_linear(x, ws, bs, *, out_dtype=None, tm_cap=None, tk_cap=TK_CAP):
    """Several x @ w_i + b_i with x streamed from HBM once (fused Q/K/V)."""
    ws, bs = tuple(ws), tuple(bs)
    n = len(ws)
    M, K = x.shape
    Ns = [w.shape[1] for w in ws]
    out_dtype = out_dtype or x.dtype
    tm_cap = tm_cap or TM_CAP
    tm, tk = _tile(M, tm_cap), _tile(K, tk_cap)
    kernel = functools.partial(_multi_matmul_kernel, n_out=n)
    in_specs = ([pl.BlockSpec((tm, tk), lambda i, k: (i, k))]
                + [pl.BlockSpec((tk, N), lambda i, k: (k, 0)) for N in Ns]
                + [pl.BlockSpec((1, N), lambda i, k: (0, 0)) for N in Ns])
    out_specs = [pl.BlockSpec((tm, N), lambda i, k: (i, 0)) for N in Ns]
    return pl.pallas_call(
        kernel,
        out_shape=[jax.ShapeDtypeStruct((M, N), out_dtype) for N in Ns],
        grid_spec=pltpu.PrefetchScalarGridSpec(
            num_scalar_prefetch=0,
            grid=(M // tm, K // tk),
            in_specs=in_specs,
            out_specs=out_specs,
            scratch_shapes=[pltpu.VMEM((tm, N), jnp.float32) for N in Ns],
        ),
        compiler_params=pltpu.CompilerParams(
            dimension_semantics=("parallel", "arbitrary"),
            vmem_limit_bytes=VMEM_LIMIT,
        ),
    )(x, *ws, *[b.reshape(1, -1) for b in bs])


# ------------------- linear + bias + residual + LayerNorm -------------------

def _matmul_add_ln_kernel(x_ref, w_ref, b_ref, r_ref, g_ref, be_ref, o_ref,
                          acc_ref):
    k = pl.program_id(1)

    @pl.when(k == 0)
    def _():
        acc_ref[...] = jnp.zeros(acc_ref.shape, acc_ref.dtype)

    acc_ref[...] += jnp.dot(x_ref[...], w_ref[...],
                            preferred_element_type=jnp.float32)

    @pl.when(k == pl.num_programs(1) - 1)
    def _():
        y = acc_ref[...] + b_ref[...] + r_ref[...].astype(jnp.float32)
        mu = jnp.mean(y, axis=-1, keepdims=True)
        var = jnp.mean(jnp.square(y - mu), axis=-1, keepdims=True)
        y = (y - mu) * jax.lax.rsqrt(var + 1e-5)
        o_ref[...] = (y * g_ref[...] + be_ref[...]).astype(o_ref.dtype)


def linear_add_layernorm(x, w, b, res, gamma, beta, *, tm_cap=None,
                         tk_cap=TK_CAP):
    """LayerNorm(res + x @ w + b) with fp32 statistics (eps=1e-5)."""
    M, K = x.shape
    N = w.shape[1]
    tm_cap = tm_cap or TM_CAP
    tm, tk = _tile(M, tm_cap), _tile(K, tk_cap)
    return pl.pallas_call(
        _matmul_add_ln_kernel,
        out_shape=jax.ShapeDtypeStruct((M, N), res.dtype),
        grid_spec=pltpu.PrefetchScalarGridSpec(
            num_scalar_prefetch=0,
            grid=(M // tm, K // tk),
            in_specs=[
                pl.BlockSpec((tm, tk), lambda i, k: (i, k)),
                pl.BlockSpec((tk, N), lambda i, k: (k, 0)),
                pl.BlockSpec((1, N), lambda i, k: (0, 0)),
                pl.BlockSpec((tm, N), lambda i, k: (i, 0)),
                pl.BlockSpec((1, N), lambda i, k: (0, 0)),
                pl.BlockSpec((1, N), lambda i, k: (0, 0)),
            ],
            out_specs=pl.BlockSpec((tm, N), lambda i, k: (i, 0)),
            scratch_shapes=[pltpu.VMEM((tm, N), jnp.float32)],
        ),
        compiler_params=pltpu.CompilerParams(
            dimension_semantics=("parallel", "arbitrary"),
            vmem_limit_bytes=VMEM_LIMIT,
        ),
    )(x, w, b.reshape(1, N), res, gamma.reshape(1, N), beta.reshape(1, N))


# --------------- fused feed-forward: FF1 + ReLU + FF2 + add + LN ------------

def _ffn_kernel(x_ref, w1_ref, b1_ref, w2_ref, b2_ref, g_ref, be_ref, o_ref,
                acc_ref):
    f = pl.program_id(1)

    @pl.when(f == 0)
    def _():
        acc_ref[...] = jnp.zeros(acc_ref.shape, acc_ref.dtype)

    h = jnp.dot(x_ref[...], w1_ref[...], preferred_element_type=jnp.float32)
    h = jnp.maximum(h + b1_ref[...], 0.0)
    acc_ref[...] += jnp.dot(h.astype(x_ref.dtype), w2_ref[...],
                            preferred_element_type=jnp.float32)

    @pl.when(f == pl.num_programs(1) - 1)
    def _():
        y = acc_ref[...] + b2_ref[...] + x_ref[...].astype(jnp.float32)
        mu = jnp.mean(y, axis=-1, keepdims=True)
        var = jnp.mean(jnp.square(y - mu), axis=-1, keepdims=True)
        y = (y - mu) * jax.lax.rsqrt(var + 1e-5)
        o_ref[...] = (y * g_ref[...] + be_ref[...]).astype(o_ref.dtype)


def ffn_add_layernorm(x, w1, b1, w2, b2, gamma, beta, *, tm_cap=None,
                      tf_cap=TN_CAP):
    """LayerNorm(x + ReLU(x@w1 + b1)@w2 + b2) streaming the ff dim in chunks;
    the (M, ff) intermediate never leaves VMEM."""
    M, D = x.shape
    F = w1.shape[1]
    tm_cap = tm_cap or TM_CAP
    tm, tf = _tile(M, tm_cap), _tile(F, tf_cap)
    return pl.pallas_call(
        _ffn_kernel,
        out_shape=jax.ShapeDtypeStruct((M, D), x.dtype),
        grid_spec=pltpu.PrefetchScalarGridSpec(
            num_scalar_prefetch=0,
            grid=(M // tm, F // tf),
            in_specs=[
                pl.BlockSpec((tm, D), lambda i, f: (i, 0)),
                pl.BlockSpec((D, tf), lambda i, f: (0, f)),
                pl.BlockSpec((1, tf), lambda i, f: (0, f)),
                pl.BlockSpec((tf, D), lambda i, f: (f, 0)),
                pl.BlockSpec((1, D), lambda i, f: (0, 0)),
                pl.BlockSpec((1, D), lambda i, f: (0, 0)),
                pl.BlockSpec((1, D), lambda i, f: (0, 0)),
            ],
            out_specs=pl.BlockSpec((tm, D), lambda i, f: (i, 0)),
            scratch_shapes=[pltpu.VMEM((tm, D), jnp.float32)],
        ),
        compiler_params=pltpu.CompilerParams(
            dimension_semantics=("parallel", "arbitrary"),
            vmem_limit_bytes=VMEM_LIMIT,
        ),
    )(x, w1, b1.reshape(1, F), w2, b2.reshape(1, D),
      gamma.reshape(1, D), beta.reshape(1, D))


# ------------------- flash attention (all heads per batch) ------------------

def _flash_attn_kernel(q_ref, k_ref, v_ref, o_ref,
                       qh_sc, kh_sc, vh_sc, m_sc, l_sc, acc_sc, *,
                       num_heads, head_dim, causal):
    qi = pl.program_id(1)
    ki = pl.program_id(2)
    tq = q_ref.shape[1]
    tk = k_ref.shape[1]
    H, Dh = num_heads, head_dim

    @pl.when(ki == 0)
    def _():
        # init stats and repack the resident Q tile into head-major scratch
        m_sc[...] = jnp.full(m_sc.shape, -jnp.inf, jnp.float32)
        l_sc[...] = jnp.zeros(l_sc.shape, jnp.float32)
        acc_sc[...] = jnp.zeros(acc_sc.shape, jnp.float32)
        q = q_ref[0]
        for h in range(H):
            qh_sc[h] = q[:, h * Dh:(h + 1) * Dh]

    def repack_kv():
        k = k_ref[0]
        v = v_ref[0]
        for h in range(H):
            kh_sc[h] = k[:, h * Dh:(h + 1) * Dh]
            vh_sc[h] = v[:, h * Dh:(h + 1) * Dh]

    def heads_loop(bias):
        # fori_loop (not an unrolled Python loop) bounds the (tq, tk) fp32
        # live ranges to one head at a time -> no vreg-spill blowup; all
        # dynamic indexing is on the leading (head) axis of VMEM scratch.
        def body(h, carry):
            s = jax.lax.dot_general(qh_sc[h], kh_sc[h],
                                    (((1,), (1,)), ((), ())),
                                    preferred_element_type=jnp.float32)
            # NOTE: 1/sqrt(head_dim) is folded into the Q projection weights.
            if bias is not None:
                s = s + bias
            m_prev = m_sc[h]
            m_new = jnp.maximum(m_prev, jnp.max(s, axis=-1, keepdims=True))
            alpha = jnp.exp(m_prev - m_new)
            p = jnp.exp(s - m_new)
            l_sc[h] = alpha * l_sc[h] + jnp.sum(p, axis=-1, keepdims=True)
            acc_sc[h] = alpha * acc_sc[h] + jnp.dot(
                p.astype(vh_sc.dtype), vh_sc[h],
                preferred_element_type=jnp.float32)
            m_sc[h] = m_new
            return carry
        jax.lax.fori_loop(0, H, body, 0)

    if causal:
        row0 = qi * tq
        row1 = row0 + tq - 1
        col0 = ki * tk
        col1 = col0 + tk - 1
        not_skipped = col0 <= row1        # block has >= 1 unmasked key
        full_block = col1 <= row0         # strictly lower: no mask needed
        diag_block = jnp.logical_and(not_skipped, jnp.logical_not(full_block))

        # KV block 0 always satisfies not_skipped, so every query row gets at
        # least one finite score before any fully-masked diagonal rows occur.
        @pl.when(not_skipped)
        def _():
            repack_kv()

        @pl.when(full_block)
        def _():
            heads_loop(None)

        @pl.when(diag_block)
        def _():
            rows = row0 + jax.lax.broadcasted_iota(jnp.int32, (tq, tk), 0)
            cols = col0 + jax.lax.broadcasted_iota(jnp.int32, (tq, tk), 1)
            bias = jnp.where(cols > rows, -jnp.inf, 0.0).astype(jnp.float32)
            heads_loop(bias)
    else:
        repack_kv()
        heads_loop(None)

    @pl.when(ki == pl.num_programs(2) - 1)
    def _():
        # exact division (not approx reciprocal) for parity with torch softmax
        for h in range(H):
            o_ref[0, :, h * Dh:(h + 1) * Dh] = (
                acc_sc[h] / l_sc[h]).astype(o_ref.dtype)


def attention(q, k, v, *, num_heads, causal, tq_cap=512, tk_cap=512):
    """q: (B, Sq, D), k/v: (B, Sk, D) -> (B, Sq, D); D = num_heads*head_dim.

    Flash-style online softmax over KV tiles; all heads of a batch element are
    handled in one grid step (lane-dense (tq, D) I/O blocks, no head transpose
    between kernels); heads iterate via fori_loop over head-major scratch.
    """
    B, Sq, D = q.shape
    Sk = k.shape[1]
    Dh = D // num_heads
    tq, tk = _tile(Sq, tq_cap), _tile(Sk, tk_cap)
    kernel = functools.partial(_flash_attn_kernel, num_heads=num_heads,
                               head_dim=Dh, causal=causal)
    return pl.pallas_call(
        kernel,
        out_shape=jax.ShapeDtypeStruct((B, Sq, D), q.dtype),
        grid_spec=pltpu.PrefetchScalarGridSpec(
            num_scalar_prefetch=0,
            grid=(B, Sq // tq, Sk // tk),
            in_specs=[
                pl.BlockSpec((1, tq, D), lambda b, i, j: (b, i, 0)),
                pl.BlockSpec((1, tk, D), lambda b, i, j: (b, j, 0)),
                pl.BlockSpec((1, tk, D), lambda b, i, j: (b, j, 0)),
            ],
            out_specs=pl.BlockSpec((1, tq, D), lambda b, i, j: (b, i, 0)),
            scratch_shapes=[
                pltpu.VMEM((num_heads, tq, Dh), q.dtype),     # Q head-major
                pltpu.VMEM((num_heads, tk, Dh), q.dtype),     # K head-major
                pltpu.VMEM((num_heads, tk, Dh), q.dtype),     # V head-major
                pltpu.VMEM((num_heads, tq, 1), jnp.float32),  # running max
                pltpu.VMEM((num_heads, tq, 1), jnp.float32),  # running sum
                pltpu.VMEM((num_heads, tq, Dh), jnp.float32),  # accumulator
            ],
        ),
        compiler_params=pltpu.CompilerParams(
            dimension_semantics=("parallel", "parallel", "arbitrary"),
            vmem_limit_bytes=VMEM_LIMIT,
        ),
    )(q, k, v)


# ------------------------------ model glue ----------------------------------

def positional_encoding(max_len, d_model):
    position = jnp.arange(max_len, dtype=jnp.float32)[:, None]
    div_term = jnp.exp(
        jnp.arange(0, d_model, 2, dtype=jnp.float32)
        * (-math.log(10000.0) / d_model))
    pe = jnp.zeros((max_len, d_model), dtype=jnp.float32)
    pe = pe.at[:, 0::2].set(jnp.sin(position * div_term))
    pe = pe.at[:, 1::2].set(jnp.cos(position * div_term))
    return pe


def encoder_layer(x, p, B, S, H):
    D = x.shape[-1]
    # fused projection: x streamed from HBM once, 3 separate outputs
    q, k, v = multi_linear(x, (p["wq"], p["wk"], p["wv"]),
                           (p["bq"], p["bk"], p["bv"]))
    q, k, v = (t.reshape(B, S, D) for t in (q, k, v))
    # NOTE: the reference forward() passes a causal src_mask to the encoder.
    a = attention(q, k, v, num_heads=H, causal=True).reshape(B * S, D)
    x = linear_add_layernorm(a, p["wo"], p["bo"], x, p["ln1_g"], p["ln1_b"])
    x = ffn_add_layernorm(x, p["ff1_w"], p["ff1_b"], p["ff2_w"], p["ff2_b"],
                          p["ln2_g"], p["ln2_b"])
    return x


def decoder_layer(x, mem, p, B, St, Ss, H):
    D = x.shape[-1]
    # masked self-attention
    q, k, v = multi_linear(x, (p["sa_wq"], p["sa_wk"], p["sa_wv"]),
                           (p["sa_bq"], p["sa_bk"], p["sa_bv"]))
    q, k, v = (t.reshape(B, St, D) for t in (q, k, v))
    a = attention(q, k, v, num_heads=H, causal=True).reshape(B * St, D)
    x = linear_add_layernorm(a, p["sa_wo"], p["sa_bo"], x,
                             p["ln1_g"], p["ln1_b"])
    # cross-attention (no memory mask in the spec)
    q = linear(x, p["ca_wq"], p["ca_bq"]).reshape(B, St, D)
    k, v = multi_linear(mem, (p["ca_wk"], p["ca_wv"]),
                        (p["ca_bk"], p["ca_bv"]))
    k, v = (t.reshape(B, Ss, D) for t in (k, v))
    a = attention(q, k, v, num_heads=H, causal=False).reshape(B * St, D)
    x = linear_add_layernorm(a, p["ca_wo"], p["ca_bo"], x,
                             p["ln2_g"], p["ln2_b"])
    # feed-forward
    x = ffn_add_layernorm(x, p["ff1_w"], p["ff1_b"], p["ff2_w"], p["ff2_b"],
                          p["ln3_g"], p["ln3_b"])
    return x


def transformer_forward(params, src, tgt, pe, *, d_model, num_heads,
                        tgt_vocab):
    B, Ss = src.shape
    _, St = tgt.shape
    src_emb = (params["enc_emb"][src] + pe[None, :Ss]).astype(jnp.bfloat16)
    tgt_emb = (params["dec_emb"][tgt] + pe[None, :St]).astype(jnp.bfloat16)

    x = src_emb.reshape(B * Ss, d_model)
    for p in params["enc_layers"]:
        x = encoder_layer(x, p, B, Ss, num_heads)
    mem = x

    y = tgt_emb.reshape(B * St, d_model)
    for p in params["dec_layers"]:
        y = decoder_layer(y, mem, p, B, St, Ss, num_heads)

    logits = linear(y, params["fc_w"], params["fc_b"], out_dtype=jnp.float32)
    return logits[:, :tgt_vocab].reshape(B, St, tgt_vocab)


# ------------------------------ parameter prep ------------------------------

def init_params(key, src_vocab, tgt_vocab, d, H, L, ff):
    keys = iter(jax.random.split(key, 1024))

    def w(shape, dtype=jnp.bfloat16):
        return (0.02 * jax.random.normal(next(keys), shape, jnp.float32)
                ).astype(dtype)

    def zeros(shape):
        return jnp.zeros(shape, jnp.float32)

    def ones(shape):
        return jnp.ones(shape, jnp.float32)

    params = {
        "enc_emb": w((src_vocab, d), jnp.float32),
        "dec_emb": w((tgt_vocab, d), jnp.float32),
        "fc_w": w((d, tgt_vocab)),
        "fc_b": zeros((tgt_vocab,)),
        "enc_layers": [],
        "dec_layers": [],
    }
    for _ in range(L):
        params["enc_layers"].append({
            "wq": w((d, d)), "bq": zeros((d,)),
            "wk": w((d, d)), "bk": zeros((d,)),
            "wv": w((d, d)), "bv": zeros((d,)),
            "wo": w((d, d)), "bo": zeros((d,)),
            "ln1_g": ones((d,)), "ln1_b": zeros((d,)),
            "ff1_w": w((d, ff)), "ff1_b": zeros((ff,)),
            "ff2_w": w((ff, d)), "ff2_b": zeros((d,)),
            "ln2_g": ones((d,)), "ln2_b": zeros((d,)),
        })
    for _ in range(L):
        params["dec_layers"].append({
            "sa_wq": w((d, d)), "sa_bq": zeros((d,)),
            "sa_wk": w((d, d)), "sa_bk": zeros((d,)),
            "sa_wv": w((d, d)), "sa_bv": zeros((d,)),
            "sa_wo": w((d, d)), "sa_bo": zeros((d,)),
            "ln1_g": ones((d,)), "ln1_b": zeros((d,)),
            "ca_wq": w((d, d)), "ca_bq": zeros((d,)),
            "ca_wk": w((d, d)), "ca_bk": zeros((d,)),
            "ca_wv": w((d, d)), "ca_bv": zeros((d,)),
            "ca_wo": w((d, d)), "ca_bo": zeros((d,)),
            "ln2_g": ones((d,)), "ln2_b": zeros((d,)),
            "ff1_w": w((d, ff)), "ff1_b": zeros((ff,)),
            "ff2_w": w((ff, d)), "ff2_b": zeros((d,)),
            "ln3_g": ones((d,)), "ln3_b": zeros((d,)),
        })
    return params


def prepare_params(params, num_heads, d_model):
    """One-time (outside jit) parameter prep:
      * fold 1/sqrt(head_dim) into the Q projections (drops the per-KV-step
        score multiply inside the flash kernel)
      * pad the vocab projection to a multiple of 128 lanes so the logits GEMM
        keeps lane-dense tiles even for ragged vocab sizes."""
    scale = 1.0 / math.sqrt(d_model // num_heads)

    def fold(p, wname, bname):
        p[wname] = (p[wname].astype(jnp.float32) * scale).astype(p[wname].dtype)
        p[bname] = (p[bname] * scale).astype(p[bname].dtype)

    for p in params["enc_layers"]:
        fold(p, "wq", "bq")
    for p in params["dec_layers"]:
        fold(p, "sa_wq", "sa_bq")
        fold(p, "ca_wq", "ca_bq")

    v = params["fc_b"].shape[0]
    v_pad = ((v + 127) // 128) * 128
    if v_pad != v:
        params["fc_w"] = jnp.pad(params["fc_w"], ((0, 0), (0, v_pad - v)))
        params["fc_b"] = jnp.pad(params["fc_b"], ((0, v_pad - v),))
    return params


# ----------------------------------- main -----------------------------------

if __name__ == "__main__":
    # Small, module-consistent shapes.
    SRC_VOCAB, TGT_VOCAB = 16, 20
    D_MODEL, NUM_HEADS, NUM_LAYERS, FF_DIM, MAX_LEN = 32, 4, 2, 64, 16
    B, S_SRC, S_TGT = 2, 8, 8
    assert D_MODEL % NUM_HEADS == 0

    root = jax.random.PRNGKey(0)
    k_params, k_src, k_tgt = jax.random.split(root, 3)

    params = init_params(k_params, SRC_VOCAB, TGT_VOCAB, D_MODEL, NUM_HEADS,
                         NUM_LAYERS, FF_DIM)
    params = prepare_params(params, NUM_HEADS, D_MODEL)
    pe = positional_encoding(MAX_LEN, D_MODEL)

    src = jax.random.randint(k_src, (B, S_SRC), 0, SRC_VOCAB, dtype=jnp.int32)
    tgt = jax.random.randint(k_tgt, (B, S_TGT), 0, TGT_VOCAB, dtype=jnp.int32)

    fwd = jax.jit(functools.partial(transformer_forward,
                                    d_model=D_MODEL, num_heads=NUM_HEADS,
                                    tgt_vocab=TGT_VOCAB))
    logits = fwd(params, src, tgt, pe)
    logits = jax.block_until_ready(logits)

    assert logits.shape == (B, S_TGT, TGT_VOCAB), logits.shape
    assert bool(jnp.all(jnp.isfinite(logits)))
    print("KERNEL_OK")
</pallas_src>

<mosaic_0001>
module attributes {stable_mosaic.version = 11 : i64} {
  func.func @_matmul_add_ln_kernel(%arg0: i32, %arg1: i32, %arg2: memref<16x32xbf16, #tpu.memory_space<vmem>>, %arg3: memref<32x32xbf16, #tpu.memory_space<vmem>>, %arg4: memref<1x32xf32, #tpu.memory_space<vmem>>, %arg5: memref<16x32xbf16, #tpu.memory_space<vmem>>, %arg6: memref<1x32xf32, #tpu.memory_space<vmem>>, %arg7: memref<1x32xf32, #tpu.memory_space<vmem>>, %arg8: memref<16x32xbf16, #tpu.memory_space<vmem>>, %arg9: memref<16x32xf32, #tpu.memory_space<vmem>>) attributes {dimension_semantics = [#tpu.dimension_semantics<parallel>, #tpu.dimension_semantics<arbitrary>], iteration_bounds = array<i64: 1, 1>, scalar_prefetch = 0 : i64, scratch_operands = 1 : i64, tpu.core_type = #tpu.core_type<tc>, window_params = [{transform_indices = @transform_0, window_bounds = array<i64: 16, 32>}, {transform_indices = @transform_1, window_bounds = array<i64: 32, 32>}, {pipeline_mode = #tpu.pipeline_mode<synchronous>, transform_indices = @transform_2, window_bounds = array<i64: 1, 32>}, {transform_indices = @transform_3, window_bounds = array<i64: 16, 32>}, {pipeline_mode = #tpu.pipeline_mode<synchronous>, transform_indices = @transform_4, window_bounds = array<i64: 1, 32>}, {pipeline_mode = #tpu.pipeline_mode<synchronous>, transform_indices = @transform_5, window_bounds = array<i64: 1, 32>}, {transform_indices = @transform_6, window_bounds = array<i64: 16, 32>}]} {
    %c0_i32 = arith.constant 0 : i32
    %0 = arith.cmpi eq, %arg1, %c0_i32 : i32
    %1 = arith.extui %0 : i1 to i32
    %c0_i32_0 = arith.constant 0 : i32
    %2 = arith.cmpi ne, %1, %c0_i32_0 : i32
    scf.if %2 {
      %cst_10 = arith.constant 0.000000e+00 : f32
      %12 = vector.broadcast %cst_10 : f32 to vector<16x32xf32>
      %c0_11 = arith.constant 0 : index
      %c0_12 = arith.constant 0 : index
      %13 = vector.load %arg9[%c0_11, %c0_12] : memref<16x32xf32, #tpu.memory_space<vmem>>, vector<16x32xf32>
      tpu.vector_store %arg9[%c0_11, %c0_12], %12 {strides = array<i32>} : memref<16x32xf32, #tpu.memory_space<vmem>>, vector<16x32xf32>,
    } else {
    }
    %c0 = arith.constant 0 : index
    %c0_1 = arith.constant 0 : index
    %3 = vector.load %arg9[%c0, %c0_1] : memref<16x32xf32, #tpu.memory_space<vmem>>, vector<16x32xf32>
    %c0_2 = arith.constant 0 : index
    %c0_3 = arith.constant 0 : index
    %4 = vector.load %arg2[%c0_2, %c0_3] : memref<16x32xbf16, #tpu.memory_space<vmem>>, vector<16x32xbf16>
    %c0_4 = arith.constant 0 : index
    %c0_5 = arith.constant 0 : index
    %5 = vector.load %arg3[%c0_4, %c0_5] : memref<32x32xbf16, #tpu.memory_space<vmem>>, vector<32x32xbf16>
    %cst = arith.constant dense<0.000000e+00> : vector<16x32xf32>
    %6 = tpu.matmul %4, %5, %cst {dimension_numbers = #tpu.dot_dimension_numbers<[1], [0], [0], [1], [0, 0, 1, 1], [], []>} : vector<16x32xbf16>, vector<32x32xbf16>, vector<16x32xf32> -> vector<16x32xf32>
    %7 = arith.addf %3, %6 : vector<16x32xf32>
    %c0_6 = arith.constant 0 : index
    %c0_7 = arith.constant 0 : index
    %8 = vector.load %arg9[%c0_6, %c0_7] : memref<16x32xf32, #tpu.memory_space<vmem>>, vector<16x32xf32>
    tpu.vector_store %arg9[%c0_6, %c0_7], %7 {strides = array<i32>} : memref<16x32xf32, #tpu.memory_space<vmem>>, vector<16x32xf32>,
    %c0_i32_8 = arith.constant 0 : i32
    %9 = arith.cmpi eq, %arg1, %c0_i32_8 : i32
    %10 = arith.extui %9 : i1 to i32
    %c0_i32_9 = arith.constant 0 : i32
    %11 = arith.cmpi ne, %10, %c0_i32_9 : i32
    scf.if %11 {
      %c0_10 = arith.constant 0 : index
      %c0_11 = arith.constant 0 : index
      %12 = vector.load %arg9[%c0_10, %c0_11] : memref<16x32xf32, #tpu.memory_space<vmem>>, vector<16x32xf32>
      %c0_12 = arith.constant 0 : index
      %c0_13 = arith.constant 0 : index
      %13 = vector.load %arg4[%c0_12, %c0_13] : memref<1x32xf32, #tpu.memory_space<vmem>>, vector<1x32xf32>
      %14 = vector.broadcast %13 : vector<1x32xf32> to vector<16x32xf32>
      %15 = arith.addf %12, %14 : vector<16x32xf32>
      %c0_14 = arith.constant 0 : index
      %c0_15 = arith.constant 0 : index
      %16 = vector.load %arg5[%c0_14, %c0_15] : memref<16x32xbf16, #tpu.memory_space<vmem>>, vector<16x32xbf16>
      %17 = arith.extf %16 : vector<16x32xbf16> to vector<16x32xf32>
      %18 = arith.addf %15, %17 : vector<16x32xf32>
      %cst_16 = arith.constant dense<0.000000e+00> : vector<16xf32>
      %19 = vector.multi_reduction <add>, %18, %cst_16 [1] : vector<16x32xf32> to vector<16xf32>
      %20 = vector.shape_cast %19 : vector<16xf32> to vector<16x1xf32>
      %cst_17 = arith.constant 3.200000e+01 : f32
      %21 = vector.broadcast %cst_17 : f32 to vector<16x1xf32>
      %22 = arith.divf %20, %21 : vector<16x1xf32>
      %23 = vector.broadcast %22 : vector<16x1xf32> to vector<16x32xf32>
      %24 = arith.subf %18, %23 : vector<16x32xf32>
      %25 = arith.mulf %24, %24 : vector<16x32xf32>
      %cst_18 = arith.constant dense<0.000000e+00> : vector<16xf32>
      %26 = vector.multi_reduction <add>, %25, %cst_18 [1] : vector<16x32xf32> to vector<16xf32>
      %27 = vector.shape_cast %26 : vector<16xf32> to vector<16x1xf32>
      %cst_19 = arith.constant 3.200000e+01 : f32
      %28 = vector.broadcast %cst_19 : f32 to vector<16x1xf32>
      %29 = arith.divf %27, %28 : vector<16x1xf32>
      %30 = vector.broadcast %22 : vector<16x1xf32> to vector<16x32xf32>
      %31 = arith.subf %18, %30 : vector<16x32xf32>
      %cst_20 = arith.constant 9.99999974E-6 : f32
      %32 = vector.broadcast %cst_20 : f32 to vector<16x1xf32>
      %33 = arith.addf %29, %32 : vector<16x1xf32>
      %34 = math.rsqrt %33 : vector<16x1xf32>
      %35 = vector.broadcast %34 : vector<16x1xf32> to vector<16x32xf32>
      %36 = arith.mulf %31, %35 : vector<16x32xf32>
      %c0_21 = arith.constant 0 : index
      %c0_22 = arith.constant 0 : index
      %37 = vector.load %arg6[%c0_21, %c0_22] : memref<1x32xf32, #tpu.memory_space<vmem>>, vector<1x32xf32>
      %38 = vector.broadcast %37 : vector<1x32xf32> to vector<16x32xf32>
      %39 = arith.mulf %36, %38 : vector<16x32xf32>
      %c0_23 = arith.constant 0 : index
      %c0_24 = arith.constant 0 : index
      %40 = vector.load %arg7[%c0_23, %c0_24] : memref<1x32xf32, #tpu.memory_space<vmem>>, vector<1x32xf32>
      %41 = vector.broadcast %40 : vector<1x32xf32> to vector<16x32xf32>
      %42 = arith.addf %39, %41 : vector<16x32xf32>
      %43 = arith.truncf %42 : vector<16x32xf32> to vector<16x32xbf16>
      %c0_25 = arith.constant 0 : index
      %c0_26 = arith.constant 0 : index
      %44 = vector.load %arg8[%c0_25, %c0_26] : memref<16x32xbf16, #tpu.memory_space<vmem>>, vector<16x32xbf16>
      tpu.vector_store %arg8[%c0_25, %c0_26], %43 {strides = array<i32>} : memref<16x32xbf16, #tpu.memory_space<vmem>>, vector<16x32xbf16>,
    } else {
    }
    return
  }
  func.func @transform_0(%arg0: i32, %arg1: i32) -> (i32, i32) {
    %c0_i32 = arith.constant 0 : i32
    return %arg0, %arg1 : i32, i32
  }
  func.func @transform_1(%arg0: i32, %arg1: i32) -> (i32, i32) {
    %c0_i32 = arith.constant 0 : i32
    %c0_i32_0 = arith.constant 0 : i32
    return %arg1, %c0_i32 : i32, i32
  }
  func.func @transform_2(%arg0: i32, %arg1: i32) -> (i32, i32) {
    %c0_i32 = arith.constant 0 : i32
    %c0_i32_0 = arith.constant 0 : i32
    %c0_i32_1 = arith.constant 0 : i32
    return %c0_i32, %c0_i32_0 : i32, i32
  }
  func.func @transform_3(%arg0: i32, %arg1: i32) -> (i32, i32) {
    %c0_i32 = arith.constant 0 : i32
    %c0_i32_0 = arith.constant 0 : i32
    return %arg0, %c0_i32 : i32, i32
  }
  func.func @transform_4(%arg0: i32, %arg1: i32) -> (i32, i32) {
    %c0_i32 = arith.constant 0 : i32
    %c0_i32_0 = arith.constant 0 : i32
    %c0_i32_1 = arith.constant 0 : i32
    return %c0_i32, %c0_i32_0 : i32, i32
  }
  func.func @transform_5(%arg0: i32, %arg1: i32) -> (i32, i32) {
    %c0_i32 = arith.constant 0 : i32
    %c0_i32_0 = arith.constant 0 : i32
    %c0_i32_1 = arith.constant 0 : i32
    return %c0_i32, %c0_i32_0 : i32, i32
  }
  func.func @transform_6(%arg0: i32, %arg1: i32) -> (i32, i32) {
    %c0_i32 = arith.constant 0 : i32
    %c0_i32_0 = arith.constant 0 : i32
    return %arg0, %c0_i32 : i32, i32
  }
}

module attributes {stable_mosaic.version = 11 : i64} {
  func.func @_multi_matmul_kernel(%arg0: i32, %arg1: i32, %arg2: memref<16x32xbf16, #tpu.memory_space<vmem>>, %arg3: memref<32x32xbf16, #tpu.memory_space<vmem>>, %arg4: memref<32x32xbf16, #tpu.memory_space<vmem>>, %arg5: memref<32x32xbf16, #tpu.memory_space<vmem>>, %arg6: memref<1x32xf32, #tpu.memory_space<vmem>>, %arg7: memref<1x32xf32, #tpu.memory_space<vmem>>, %arg8: memref<1x32xf32, #tpu.memory_space<vmem>>, %arg9: memref<16x32xbf16, #tpu.memory_space<vmem>>, %arg10: memref<16x32xbf16, #tpu.memory_space<vmem>>, %arg11: memref<16x32xbf16, #tpu.memory_space<vmem>>, %arg12: memref<16x32xf32, #tpu.memory_space<vmem>>, %arg13: memref<16x32xf32, #tpu.memory_space<vmem>>, %arg14: memref<16x32xf32, #tpu.memory_space<vmem>>) attributes {dimension_semantics = [#tpu.dimension_semantics<parallel>, #tpu.dimension_semantics<arbitrary>], iteration_bounds = array<i64: 1, 1>, scalar_prefetch = 0 : i64, scratch_operands = 3 : i64, tpu.core_type = #tpu.core_type<tc>, window_params = [{transform_indices = @transform_0, window_bounds = array<i64: 16, 32>}, {transform_indices = @transform_1, window_bounds = array<i64: 32, 32>}, {transform_indices = @transform_2, window_bounds = array<i64: 32, 32>}, {transform_indices = @transform_3, window_bounds = array<i64: 32, 32>}, {pipeline_mode = #tpu.pipeline_mode<synchronous>, transform_indices = @transform_4, window_bounds = array<i64: 1, 32>}, {pipeline_mode = #tpu.pipeline_mode<synchronous>, transform_indices = @transform_5, window_bounds = array<i64: 1, 32>}, {pipeline_mode = #tpu.pipeline_mode<synchronous>, transform_indices = @transform_6, window_bounds = array<i64: 1, 32>}, {transform_indices = @transform_7, window_bounds = array<i64: 16, 32>}, {transform_indices = @transform_8, window_bounds = array<i64: 16, 32>}, {transform_indices = @transform_9, window_bounds = array<i64: 16, 32>}]} {
    %c0_i32 = arith.constant 0 : i32
    %0 = arith.cmpi eq, %arg1, %c0_i32 : i32
    %1 = arith.extui %0 : i1 to i32
    %c0_i32_0 = arith.constant 0 : i32
    %2 = arith.cmpi ne, %1, %c0_i32_0 : i32
    scf.if %2 {
      %cst_24 = arith.constant 0.000000e+00 : f32
      %22 = vector.broadcast %cst_24 : f32 to vector<16x32xf32>
      %c0_25 = arith.constant 0 : index
      %c0_26 = arith.constant 0 : index
      %23 = vector.load %arg12[%c0_25, %c0_26] : memref<16x32xf32, #tpu.memory_space<vmem>>, vector<16x32xf32>
      tpu.vector_store %arg12[%c0_25, %c0_26], %22 {strides = array<i32>} : memref<16x32xf32, #tpu.memory_space<vmem>>, vector<16x32xf32>,
      %cst_27 = arith.constant 0.000000e+00 : f32
      %24 = vector.broadcast %cst_27 : f32 to vector<16x32xf32>
      %c0_28 = arith.constant 0 : index
      %c0_29 = arith.constant 0 : index
      %25 = vector.load %arg13[%c0_28, %c0_29] : memref<16x32xf32, #tpu.memory_space<vmem>>, vector<16x32xf32>
      tpu.vector_store %arg13[%c0_28, %c0_29], %24 {strides = array<i32>} : memref<16x32xf32, #tpu.memory_space<vmem>>, vector<16x32xf32>,
      %cst_30 = arith.constant 0.000000e+00 : f32
      %26 = vector.broadcast %cst_30 : f32 to vector<16x32xf32>
      %c0_31 = arith.constant 0 : index
      %c0_32 = arith.constant 0 : index
      %27 = vector.load %arg14[%c0_31, %c0_32] : memref<16x32xf32, #tpu.memory_space<vmem>>, vector<16x32xf32>
      tpu.vector_store %arg14[%c0_31, %c0_32], %26 {strides = array<i32>} : memref<16x32xf32, #tpu.memory_space<vmem>>, vector<16x32xf32>,
    } else {
    }
    %c0 = arith.constant 0 : index
    %c0_1 = arith.constant 0 : index
    %3 = vector.load %arg2[%c0, %c0_1] : memref<16x32xbf16, #tpu.memory_space<vmem>>, vector<16x32xbf16>
    %c0_2 = arith.constant 0 : index
    %c0_3 = arith.constant 0 : index
    %4 = vector.load %arg12[%c0_2, %c0_3] : memref<16x32xf32, #tpu.memory_space<vmem>>, vector<16x32xf32>
    %c0_4 = arith.constant 0 : index
    %c0_5 = arith.constant 0 : index
    %5 = vector.load %arg3[%c0_4, %c0_5] : memref<32x32xbf16, #tpu.memory_space<vmem>>, vector<32x32xbf16>
    %cst = arith.constant dense<0.000000e+00> : vector<16x32xf32>
    %6 = tpu.matmul %3, %5, %cst {dimension_numbers = #tpu.dot_dimension_numbers<[1], [0], [0], [1], [0, 0, 1, 1], [], []>} : vector<16x32xbf16>, vector<32x32xbf16>, vector<16x32xf32> -> vector<16x32xf32>
    %7 = arith.addf %4, %6 : vector<16x32xf32>
    %c0_6 = arith.constant 0 : index
    %c0_7 = arith.constant 0 : index
    %8 = vector.load %arg12[%c0_6, %c0_7] : memref<16x32xf32, #tpu.memory_space<vmem>>, vector<16x32xf32>
    tpu.vector_store %arg12[%c0_6, %c0_7], %7 {strides = array<i32>} : memref<16x32xf32, #tpu.memory_space<vmem>>, vector<16x32xf32>,
    %c0_8 = arith.constant 0 : index
    %c0_9 = arith.constant 0 : index
    %9 = vector.load %arg13[%c0_8, %c0_9] : memref<16x32xf32, #tpu.memory_space<vmem>>, vector<16x32xf32>
    %c0_10 = arith.constant 0 : index
    %c0_11 = arith.constant 0 : index
    %10 = vector.load %arg4[%c0_10, %c0_11] : memref<32x32xbf16, #tpu.memory_space<vmem>>, vector<32x32xbf16>
    %cst_12 = arith.constant dense<0.000000e+00> : vector<16x32xf32>
    %11 = tpu.matmul %3, %10, %cst_12 {dimension_numbers = #tpu.dot_dimension_numbers<[1], [0], [0], [1], [0, 0, 1, 1], [], []>} : vector<16x32xbf16>, vector<32x32xbf16>, vector<16x32xf32> -> vector<16x32xf32>
    %12 = arith.addf %9, %11 : vector<16x32xf32>
    %c0_13 = arith.constant 0 : index
    %c0_14 = arith.constant 0 : index
    %13 = vector.load %arg13[%c0_13, %c0_14] : memref<16x32xf32, #tpu.memory_space<vmem>>, vector<16x32xf32>
    tpu.vector_store %arg13[%c0_13, %c0_14], %12 {strides = array<i32>} : memref<16x32xf32, #tpu.memory_space<vmem>>, vector<16x32xf32>,
    %c0_15 = arith.constant 0 : index
    %c0_16 = arith.constant 0 : index
    %14 = vector.load %arg14[%c0_15, %c0_16] : memref<16x32xf32, #tpu.memory_space<vmem>>, vector<16x32xf32>
    %c0_17 = arith.constant 0 : index
    %c0_18 = arith.constant 0 : index
    %15 = vector.load %arg5[%c0_17, %c0_18] : memref<32x32xbf16, #tpu.memory_space<vmem>>, vector<32x32xbf16>
    %cst_19 = arith.constant dense<0.000000e+00> : vector<16x32xf32>
    %16 = tpu.matmul %3, %15, %cst_19 {dimension_numbers = #tpu.dot_dimension_numbers<[1], [0], [0], [1], [0, 0, 1, 1], [], []>} : vector<16x32xbf16>, vector<32x32xbf16>, vector<16x32xf32> -> vector<16x32xf32>
    %17 = arith.addf %14, %16 : vector<16x32xf32>
    %c0_20 = arith.constant 0 : index
    %c0_21 = arith.constant 0 : index
    %18 = vector.load %arg14[%c0_20, %c0_21] : memref<16x32xf32, #tpu.memory_space<vmem>>, vector<16x32xf32>
    tpu.vector_store %arg14[%c0_20, %c0_21], %17 {strides = array<i32>} : memref<16x32xf32, #tpu.memory_space<vmem>>, vector<16x32xf32>,
    %c0_i32_22 = arith.constant 0 : i32
    %19 = arith.cmpi eq, %arg1, %c0_i32_22 : i32
    %20 = arith.extui %19 : i1 to i32
    %c0_i32_23 = arith.constant 0 : i32
    %21 = arith.cmpi ne, %20, %c0_i32_23 : i32
    scf.if %21 {
      %c0_24 = arith.constant 0 : index
      %c0_25 = arith.constant 0 : index
      %22 = vector.load %arg12[%c0_24, %c0_25] : memref<16x32xf32, #tpu.memory_space<vmem>>, vector<16x32xf32>
      %c0_26 = arith.constant 0 : index
      %c0_27 = arith.constant 0 : index
      %23 = vector.load %arg6[%c0_26, %c0_27] : memref<1x32xf32, #tpu.memory_space<vmem>>, vector<1x32xf32>
      %24 = vector.broadcast %23 : vector<1x32xf32> to vector<16x32xf32>
      %25 = arith.addf %22, %24 : vector<16x32xf32>
      %26 = arith.truncf %25 : vector<16x32xf32> to vector<16x32xbf16>
      %c0_28 = arith.constant 0 : index
      %c0_29 = arith.constant 0 : index
      %27 = vector.load %arg9[%c0_28, %c0_29] : memref<16x32xbf16, #tpu.memory_space<vmem>>, vector<16x32xbf16>
      tpu.vector_store %arg9[%c0_28, %c0_29], %26 {strides = array<i32>} : memref<16x32xbf16, #tpu.memory_space<vmem>>, vector<16x32xbf16>,
      %c0_30 = arith.constant 0 : index
      %c0_31 = arith.constant 0 : index
      %28 = vector.load %arg13[%c0_30, %c0_31] : memref<16x32xf32, #tpu.memory_space<vmem>>, vector<16x32xf32>
      %c0_32 = arith.constant 0 : index
      %c0_33 = arith.constant 0 : index
      %29 = vector.load %arg7[%c0_32, %c0_33] : memref<1x32xf32, #tpu.memory_space<vmem>>, vector<1x32xf32>
      %30 = vector.broadcast %29 : vector<1x32xf32> to vector<16x32xf32>
      %31 = arith.addf %28, %30 : vector<16x32xf32>
      %32 = arith.truncf %31 : vector<16x32xf32> to vector<16x32xbf16>
      %c0_34 = arith.constant 0 : index
      %c0_35 = arith.constant 0 : index
      %33 = vector.load %arg10[%c0_34, %c0_35] : memref<16x32xbf16, #tpu.memory_space<vmem>>, vector<16x32xbf16>
      tpu.vector_store %arg10[%c0_34, %c0_35], %32 {strides = array<i32>} : memref<16x32xbf16, #tpu.memory_space<vmem>>, vector<16x32xbf16>,
      %c0_36 = arith.constant 0 : index
      %c0_37 = arith.constant 0 : index
      %34 = vector.load %arg14[%c0_36, %c0_37] : memref<16x32xf32, #tpu.memory_space<vmem>>, vector<16x32xf32>
      %c0_38 = arith.constant 0 : index
      %c0_39 = arith.constant 0 : index
      %35 = vector.load %arg8[%c0_38, %c0_39] : memref<1x32xf32, #tpu.memory_space<vmem>>, vector<1x32xf32>
      %36 = vector.broadcast %35 : vector<1x32xf32> to vector<16x32xf32>
      %37 = arith.addf %34, %36 : vector<16x32xf32>
      %38 = arith.truncf %37 : vector<16x32xf32> to vector<16x32xbf16>
      %c0_40 = arith.constant 0 : index
      %c0_41 = arith.constant 0 : index
      %39 = vector.load %arg11[%c0_40, %c0_41] : memref<16x32xbf16, #tpu.memory_space<vmem>>, vector<16x32xbf16>
      tpu.vector_store %arg11[%c0_40, %c0_41], %38 {strides = array<i32>} : memref<16x32xbf16, #tpu.memory_space<vmem>>, vector<16x32xbf16>,
    } else {
    }
    return
  }
  func.func @transform_0(%arg0: i32, %arg1: i32) -> (i32, i32) {
    %c0_i32 = arith.constant 0 : i32
    return %arg0, %arg1 : i32, i32
  }
  func.func @transform_1(%arg0: i32, %arg1: i32) -> (i32, i32) {
    %c0_i32 = arith.constant 0 : i32
    %c0_i32_0 = arith.constant 0 : i32
    return %arg1, %c0_i32 : i32, i32
  }
  func.func @transform_2(%arg0: i32, %arg1: i32) -> (i32, i32) {
    %c0_i32 = arith.constant 0 : i32
    %c0_i32_0 = arith.constant 0 : i32
    return %arg1, %c0_i32 : i32, i32
  }
  func.func @transform_3(%arg0: i32, %arg1: i32) -> (i32, i32) {
    %c0_i32 = arith.constant 0 : i32
    %c0_i32_0 = arith.constant 0 : i32
    return %arg1, %c0_i32 : i32, i32
  }
  func.func @transform_4(%arg0: i32, %arg1: i32) -> (i32, i32) {
    %c0_i32 = arith.constant 0 : i32
    %c0_i32_0 = arith.constant 0 : i32
    %c0_i32_1 = arith.constant 0 : i32
    return %c0_i32, %c0_i32_0 : i32, i32
  }
  func.func @transform_5(%arg0: i32, %arg1: i32) -> (i32, i32) {
    %c0_i32 = arith.constant 0 : i32
    %c0_i32_0 = arith.constant 0 : i32
    %c0_i32_1 = arith.constant 0 : i32
    return %c0_i32, %c0_i32_0 : i32, i32
  }
  func.func @transform_6(%arg0: i32, %arg1: i32) -> (i32, i32) {
    %c0_i32 = arith.constant 0 : i32
    %c0_i32_0 = arith.constant 0 : i32
    %c0_i32_1 = arith.constant 0 : i32
    return %c0_i32, %c0_i32_0 : i32, i32
  }
  func.func @transform_7(%arg0: i32, %arg1: i32) -> (i32, i32) {
    %c0_i32 = arith.constant 0 : i32
    %c0_i32_0 = arith.constant 0 : i32
    return %arg0, %c0_i32 : i32, i32
  }
  func.func @transform_8(%arg0: i32, %arg1: i32) -> (i32, i32) {
    %c0_i32 = arith.constant 0 : i32
    %c0_i32_0 = arith.constant 0 : i32
    return %arg0, %c0_i32 : i32, i32
  }
  func.func @transform_9(%arg0: i32, %arg1: i32) -> (i32, i32) {
    %c0_i32 = arith.constant 0 : i32
    %c0_i32_0 = arith.constant 0 : i32
    return %arg0, %c0_i32 : i32, i32
  }
}

module attributes {stable_mosaic.version = 11 : i64} {
  func.func @_flash_attn_kernel(%arg0: i32, %arg1: i32, %arg2: i32, %arg3: memref<1x8x32xbf16, #tpu.memory_space<vmem>>, %arg4: memref<1x8x32xbf16, #tpu.memory_space<vmem>>, %arg5: memref<1x8x32xbf16, #tpu.memory_space<vmem>>, %arg6: memref<1x8x32xbf16, #tpu.memory_space<vmem>>, %arg7: memref<4x8x8xbf16, #tpu.memory_space<vmem>>, %arg8: memref<4x8x8xbf16, #tpu.memory_space<vmem>>, %arg9: memref<4x8x8xbf16, #tpu.memory_space<vmem>>, %arg10: memref<4x8x1xf32, #tpu.memory_space<vmem>>, %arg11: memref<4x8x1xf32, #tpu.memory_space<vmem>>, %arg12: memref<4x8x8xf32, #tpu.memory_space<vmem>>) attributes {dimension_semantics = [#tpu.dimension_semantics<parallel>, #tpu.dimension_semantics<parallel>, #tpu.dimension_semantics<arbitrary>], iteration_bounds = array<i64: 2, 1, 1>, scalar_prefetch = 0 : i64, scratch_operands = 6 : i64, tpu.core_type = #tpu.core_type<tc>, window_params = [{transform_indices = @transform_0, window_bounds = array<i64: 1, 8, 32>}, {transform_indices = @transform_1, window_bounds = array<i64: 1, 8, 32>}, {transform_indices = @transform_2, window_bounds = array<i64: 1, 8, 32>}, {transform_indices = @transform_3, window_bounds = array<i64: 1, 8, 32>}]} {
    %c0_i32 = arith.constant 0 : i32
    %0 = arith.cmpi eq, %arg2, %c0_i32 : i32
    %1 = arith.extui %0 : i1 to i32
    %c0_i32_0 = arith.constant 0 : i32
    %2 = arith.cmpi ne, %1, %c0_i32_0 : i32
    scf.if %2 {
      %cst = arith.constant 0xFF800000 : f32
      %22 = vector.broadcast %cst : f32 to vector<4x8x1xf32>
      %c0 = arith.constant 0 : index
      %c0_10 = arith.constant 0 : index
      %c0_11 = arith.constant 0 : index
      %23 = vector.load %arg10[%c0, %c0_10, %c0_11] : memref<4x8x1xf32, #tpu.memory_space<vmem>>, vector<4x8x1xf32>
      tpu.vector_store %arg10[%c0, %c0_10, %c0_11], %22 {strides = array<i32>} : memref<4x8x1xf32, #tpu.memory_space<vmem>>, vector<4x8x1xf32>,
      %cst_12 = arith.constant 0.000000e+00 : f32
      %24 = vector.broadcast %cst_12 : f32 to vector<4x8x1xf32>
      %c0_13 = arith.constant 0 : index
      %c0_14 = arith.constant 0 : index
      %c0_15 = arith.constant 0 : index
      %25 = vector.load %arg11[%c0_13, %c0_14, %c0_15] : memref<4x8x1xf32, #tpu.memory_space<vmem>>, vector<4x8x1xf32>
      tpu.vector_store %arg11[%c0_13, %c0_14, %c0_15], %24 {strides = array<i32>} : memref<4x8x1xf32, #tpu.memory_space<vmem>>, vector<4x8x1xf32>,
      %cst_16 = arith.constant 0.000000e+00 : f32
      %26 = vector.broadcast %cst_16 : f32 to vector<4x8x8xf32>
      %c0_17 = arith.constant 0 : index
      %c0_18 = arith.constant 0 : index
      %c0_19 = arith.constant 0 : index
      %27 = vector.load %arg12[%c0_17, %c0_18, %c0_19] : memref<4x8x8xf32, #tpu.memory_space<vmem>>, vector<4x8x8xf32>
      tpu.vector_store %arg12[%c0_17, %c0_18, %c0_19], %26 {strides = array<i32>} : memref<4x8x8xf32, #tpu.memory_space<vmem>>, vector<4x8x8xf32>,
      %c0_20 = arith.constant 0 : index
      %c0_21 = arith.constant 0 : index
      %c0_22 = arith.constant 0 : index
      %28 = vector.load %arg3[%c0_20, %c0_21, %c0_22] : memref<1x8x32xbf16, #tpu.memory_space<vmem>>, vector<1x8x32xbf16>
      %29 = vector.shape_cast %28 : vector<1x8x32xbf16> to vector<8x32xbf16>
      %30 = vector.extract_strided_slice %29 {offsets = [0, 0], sizes = [8, 8], strides = [1, 1]} : vector<8x32xbf16> to vector<8x8xbf16>
      %c0_23 = arith.constant 0 : index
      %c0_24 = arith.constant 0 : index
      %c0_25 = arith.constant 0 : index
      %31 = vector.load %arg7[%c0_23, %c0_24, %c0_25] : memref<4x8x8xbf16, #tpu.memory_space<vmem>>, vector<1x8x8xbf16>
      %32 = vector.shape_cast %31 : vector<1x8x8xbf16> to vector<8x8xbf16>
      %33 = vector.shape_cast %30 : vector<8x8xbf16> to vector<1x8x8xbf16>
      tpu.vector_store %arg7[%c0_23, %c0_24, %c0_25], %33 {strides = array<i32>} : memref<4x8x8xbf16, #tpu.memory_space<vmem>>, vector<1x8x8xbf16>,
      %34 = vector.extract_strided_slice %29 {offsets = [0, 8], sizes = [8, 8], strides = [1, 1]} : vector<8x32xbf16> to vector<8x8xbf16>
      %c1 = arith.constant 1 : index
      %c0_26 = arith.constant 0 : index
      %c0_27 = arith.constant 0 : index
      %35 = vector.load %arg7[%c1, %c0_26, %c0_27] : memref<4x8x8xbf16, #tpu.memory_space<vmem>>, vector<1x8x8xbf16>
      %36 = vector.shape_cast %35 : vector<1x8x8xbf16> to vector<8x8xbf16>
      %37 = vector.shape_cast %34 : vector<8x8xbf16> to vector<1x8x8xbf16>
      tpu.vector_store %arg7[%c1, %c0_26, %c0_27], %37 {strides = array<i32>} : memref<4x8x8xbf16, #tpu.memory_space<vmem>>, vector<1x8x8xbf16>,
      %38 = vector.extract_strided_slice %29 {offsets = [0, 16], sizes = [8, 8], strides = [1, 1]} : vector<8x32xbf16> to vector<8x8xbf16>
      %c2 = arith.constant 2 : index
      %c0_28 = arith.constant 0 : index
      %c0_29 = arith.constant 0 : index
      %39 = vector.load %arg7[%c2, %c0_28, %c0_29] : memref<4x8x8xbf16, #tpu.memory_space<vmem>>, vector<1x8x8xbf16>
      %40 = vector.shape_cast %39 : vector<1x8x8xbf16> to vector<8x8xbf16>
      %41 = vector.shape_cast %38 : vector<8x8xbf16> to vector<1x8x8xbf16>
      tpu.vector_store %arg7[%c2, %c0_28, %c0_29], %41 {strides = array<i32>} : memref<4x8x8xbf16, #tpu.memory_space<vmem>>, vector<1x8x8xbf16>,
      %42 = vector.extract_strided_slice %29 {offsets = [0, 24], sizes = [8, 8], strides = [1, 1]} : vector<8x32xbf16> to vector<8x8xbf16>
      %c3 = arith.constant 3 : index
      %c0_30 = arith.constant 0 : index
      %c0_31 = arith.constant 0 : index
      %43 = vector.load %arg7[%c3, %c0_30, %c0_31] : memref<4x8x8xbf16, #tpu.memory_space<vmem>>, vector<1x8x8xbf16>
      %44 = vector.shape_cast %43 : vector<1x8x8xbf16> to vector<8x8xbf16>
      %45 = vector.shape_cast %42 : vector<8x8xbf16> to vector<1x8x8xbf16>
      tpu.vector_store %arg7[%c3, %c0_30, %c0_31], %45 {strides = array<i32>} : memref<4x8x8xbf16, #tpu.memory_space<vmem>>, vector<1x8x8xbf16>,
    } else {
    }
    %c8_i32 = arith.constant 8 : i32
    %3 = arith.muli %arg1, %c8_i32 : i32
    %c8_i32_1 = arith.constant 8 : i32
    %4 = arith.addi %3, %c8_i32_1 : i32
    %c1_i32 = arith.constant 1 : i32
    %5 = arith.subi %4, %c1_i32 : i32
    %c8_i32_2 = arith.constant 8 : i32
    %6 = arith.muli %arg2, %c8_i32_2 : i32
    %c8_i32_3 = arith.constant 8 : i32
    %7 = arith.addi %6, %c8_i32_3 : i32
    %c1_i32_4 = arith.constant 1 : i32
    %8 = arith.subi %7, %c1_i32_4 : i32
    %9 = arith.cmpi sle, %6, %5 : i32
    %10 = arith.cmpi sle, %8, %3 : i32
    %true = arith.constant true
    %11 = arith.xori %10, %true : i1
    %12 = arith.andi %9, %11 : i1
    %13 = arith.extui %9 : i1 to i32
    %c0_i32_5 = arith.constant 0 : i32
    %14 = arith.cmpi ne, %13, %c0_i32_5 : i32
    scf.if %14 {
      %c0 = arith.constant 0 : index
      %c0_10 = arith.constant 0 : index
      %c0_11 = arith.constant 0 : index
      %22 = vector.load %arg4[%c0, %c0_10, %c0_11] : memref<1x8x32xbf16, #tpu.memory_space<vmem>>, vector<1x8x32xbf16>
      %23 = vector.shape_cast %22 : vector<1x8x32xbf16> to vector<8x32xbf16>
      %c0_12 = arith.constant 0 : index
      %c0_13 = arith.constant 0 : index
      %c0_14 = arith.constant 0 : index
      %24 = vector.load %arg5[%c0_12, %c0_13, %c0_14] : memref<1x8x32xbf16, #tpu.memory_space<vmem>>, vector<1x8x32xbf16>
      %25 = vector.shape_cast %24 : vector<1x8x32xbf16> to vector<8x32xbf16>
      %26 = vector.extract_strided_slice %23 {offsets = [0, 0], sizes = [8, 8], strides = [1, 1]} : vector<8x32xbf16> to vector<8x8xbf16>
      %c0_15 = arith.constant 0 : index
      %c0_16 = arith.constant 0 : index
      %c0_17 = arith.constant 0 : index
      %27 = vector.load %arg8[%c0_15, %c0_16, %c0_17] : memref<4x8x8xbf16, #tpu.memory_space<vmem>>, vector<1x8x8xbf16>
      %28 = vector.shape_cast %27 : vector<1x8x8xbf16> to vector<8x8xbf16>
      %29 = vector.shape_cast %26 : vector<8x8xbf16> to vector<1x8x8xbf16>
      tpu.vector_store %arg8[%c0_15, %c0_16, %c0_17], %29 {strides = array<i32>} : memref<4x8x8xbf16, #tpu.memory_space<vmem>>, vector<1x8x8xbf16>,
      %30 = vector.extract_strided_slice %25 {offsets = [0, 0], sizes = [8, 8], strides = [1, 1]} : vector<8x32xbf16> to vector<8x8xbf16>
      %c0_18 = arith.constant 0 : index
      %c0_19 = arith.constant 0 : index
      %c0_20 = arith.constant 0 : index
      %31 = vector.load %arg9[%c0_18, %c0_19, %c0_20] : memref<4x8x8xbf16, #tpu.memory_space<vmem>>, vector<1x8x8xbf16>
      %32 = vector.shape_cast %31 : vector<1x8x8xbf16> to vector<8x8xbf16>
      %33 = vector.shape_cast %30 : vector<8x8xbf16> to vector<1x8x8xbf16>
      tpu.vector_store %arg9[%c0_18, %c0_19, %c0_20], %33 {strides = array<i32>} : memref<4x8x8xbf16, #tpu.memory_space<vmem>>, vector<1x8x8xbf16>,
      %34 = vector.extract_strided_slice %23 {offsets = [0, 8], sizes = [8, 8], strides = [1, 1]} : vector<8x32xbf16> to vector<8x8xbf16>
      %c1 = arith.constant 1 : index
      %c0_21 = arith.constant 0 : index
      %c0_22 = arith.constant 0 : index
      %35 = vector.load %arg8[%c1, %c0_21, %c0_22] : memref<4x8x8xbf16, #tpu.memory_space<vmem>>, vector<1x8x8xbf16>
      %36 = vector.shape_cast %35 : vector<1x8x8xbf16> to vector<8x8xbf16>
      %37 = vector.shape_cast %34 : vector<8x8xbf16> to vector<1x8x8xbf16>
      tpu.vector_store %arg8[%c1, %c0_21, %c0_22], %37 {strides = array<i32>} : memref<4x8x8xbf16, #tpu.memory_space<vmem>>, vector<1x8x8xbf16>,
      %38 = vector.extract_strided_slice %25 {offsets = [0, 8], sizes = [8, 8], strides = [1, 1]} : vector<8x32xbf16> to vector<8x8xbf16>
      %c1_23 = arith.constant 1 : index
      %c0_24 = arith.constant 0 : index
      %c0_25 = arith.constant 0 : index
      %39 = vector.load %arg9[%c1_23, %c0_24, %c0_25] : memref<4x8x8xbf16, #tpu.memory_space<vmem>>, vector<1x8x8xbf16>
      %40 = vector.shape_cast %39 : vector<1x8x8xbf16> to vector<8x8xbf16>
      %41 = vector.shape_cast %38 : vector<8x8xbf16> to vector<1x8x8xbf16>
      tpu.vector_store %arg9[%c1_23, %c0_24, %c0_25], %41 {strides = array<i32>} : memref<4x8x8xbf16, #tpu.memory_space<vmem>>, vector<1x8x8xbf16>,
      %42 = vector.extract_strided_slice %23 {offsets = [0, 16], sizes = [8, 8], strides = [1, 1]} : vector<8x32xbf16> to vector<8x8xbf16>
      %c2 = arith.constant 2 : index
      %c0_26 = arith.constant 0 : index
      %c0_27 = arith.constant 0 : index
      %43 = vector.load %arg8[%c2, %c0_26, %c0_27] : memref<4x8x8xbf16, #tpu.memory_space<vmem>>, vector<1x8x8xbf16>
      %44 = vector.shape_cast %43 : vector<1x8x8xbf16> to vector<8x8xbf16>
      %45 = vector.shape_cast %42 : vector<8x8xbf16> to vector<1x8x8xbf16>
      tpu.vector_store %arg8[%c2, %c0_26, %c0_27], %45 {strides = array<i32>} : memref<4x8x8xbf16, #tpu.memory_space<vmem>>, vector<1x8x8xbf16>,
      %46 = vector.extract_strided_slice %25 {offsets = [0, 16], sizes = [8, 8], strides = [1, 1]} : vector<8x32xbf16> to vector<8x8xbf16>
      %c2_28 = arith.constant 2 : index
      %c0_29 = arith.constant 0 : index
      %c0_30 = arith.constant 0 : index
      %47 = vector.load %arg9[%c2_28, %c0_29, %c0_30] : memref<4x8x8xbf16, #tpu.memory_space<vmem>>, vector<1x8x8xbf16>
      %48 = vector.shape_cast %47 : vector<1x8x8xbf16> to vector<8x8xbf16>
      %49 = vector.shape_cast %46 : vector<8x8xbf16> to vector<1x8x8xbf16>
      tpu.vector_store %arg9[%c2_28, %c0_29, %c0_30], %49 {strides = array<i32>} : memref<4x8x8xbf16, #tpu.memory_space<vmem>>, vector<1x8x8xbf16>,
      %50 = vector.extract_strided_slice %23 {offsets = [0, 24], sizes = [8, 8], strides = [1, 1]} : vector<8x32xbf16> to vector<8x8xbf16>
      %c3 = arith.constant 3 : index
      %c0_31 = arith.constant 0 : index
      %c0_32 = arith.constant 0 : index
      %51 = vector.load %arg8[%c3, %c0_31, %c0_32] : memref<4x8x8xbf16, #tpu.memory_space<vmem>>, vector<1x8x8xbf16>
      %52 = vector.shape_cast %51 : vector<1x8x8xbf16> to vector<8x8xbf16>
      %53 = vector.shape_cast %50 : vector<8x8xbf16> to vector<1x8x8xbf16>
      tpu.vector_store %arg8[%c3, %c0_31, %c0_32], %53 {strides = array<i32>} : memref<4x8x8xbf16, #tpu.memory_space<vmem>>, vector<1x8x8xbf16>,
      %54 = vector.extract_strided_slice %25 {offsets = [0, 24], sizes = [8, 8], strides = [1, 1]} : vector<8x32xbf16> to vector<8x8xbf16>
      %c3_33 = arith.constant 3 : index
      %c0_34 = arith.constant 0 : index
      %c0_35 = arith.constant 0 : index
      %55 = vector.load %arg9[%c3_33, %c0_34, %c0_35] : memref<4x8x8xbf16, #tpu.memory_space<vmem>>, vector<1x8x8xbf16>
      %56 = vector.shape_cast %55 : vector<1x8x8xbf16> to vector<8x8xbf16>
      %57 = vector.shape_cast %54 : vector<8x8xbf16> to vector<1x8x8xbf16>
      tpu.vector_store %arg9[%c3_33, %c0_34, %c0_35], %57 {strides = array<i32>} : memref<4x8x8xbf16, #tpu.memory_space<vmem>>, vector<1x8x8xbf16>,
    } else {
    }
    %15 = arith.extui %10 : i1 to i32
    %c0_i32_6 = arith.constant 0 : i32
    %16 = arith.cmpi ne, %15, %c0_i32_6 : i32
    scf.if %16 {
      %c0_i32_10 = arith.constant 0 : i32
      %c4_i32 = arith.constant 4 : i32
      %22 = arith.addi %c0_i32_10, %c4_i32 : i32
      %c1_i32_11 = arith.constant 1 : i32
      scf.for %arg13 = %c0_i32_10 to %22 step %c1_i32_11  : i32 {
        %23 = arith.index_cast %arg13 : i32 to index
        %c0 = arith.constant 0 : index
        %c0_13 = arith.constant 0 : index
        %24 = vector.load %arg7[%23, %c0, %c0_13] : memref<4x8x8xbf16, #tpu.memory_space<vmem>>, vector<1x8x8xbf16>
        %25 = vector.shape_cast %24 : vector<1x8x8xbf16> to vector<8x8xbf16>
        %26 = arith.index_cast %arg13 : i32 to index
        %c0_14 = arith.constant 0 : index
        %c0_15 = arith.constant 0 : index
        %27 = vector.load %arg8[%26, %c0_14, %c0_15] : memref<4x8x8xbf16, #tpu.memory_space<vmem>>, vector<1x8x8xbf16>
        %28 = vector.shape_cast %27 : vector<1x8x8xbf16> to vector<8x8xbf16>
        %cst = arith.constant dense<0.000000e+00> : vector<8x8xf32>
        %29 = tpu.matmul %25, %28, %cst {dimension_numbers = #tpu.dot_dimension_numbers<[1], [1], [0], [0], [0, 0, 1, 0], [], []>} : vector<8x8xbf16>, vector<8x8xbf16>, vector<8x8xf32> -> vector<8x8xf32>
        %30 = arith.index_cast %arg13 : i32 to index
        %c0_16 = arith.constant 0 : index
        %c0_17 = arith.constant 0 : index
        %31 = vector.load %arg10[%30, %c0_16, %c0_17] : memref<4x8x1xf32, #tpu.memory_space<vmem>>, vector<1x8x1xf32>
        %32 = vector.shape_cast %31 : vector<1x8x1xf32> to vector<8x1xf32>
        %cst_18 = arith.constant dense<0xFF800000> : vector<8xf32>
        %33 = vector.multi_reduction <maximumf>, %29, %cst_18 [1] : vector<8x8xf32> to vector<8xf32>
        %34 = vector.shape_cast %33 : vector<8xf32> to vector<8x1xf32>
        %35 = arith.maximumf %32, %34 : vector<8x1xf32>
        %36 = arith.subf %32, %35 : vector<8x1xf32>
        %37 = math.exp %36 : vector<8x1xf32>
        %38 = vector.broadcast %35 : vector<8x1xf32> to vector<8x8xf32>
        %39 = arith.subf %29, %38 : vector<8x8xf32>
        %40 = math.exp %39 : vector<8x8xf32>
        %41 = arith.index_cast %arg13 : i32 to index
        %c0_19 = arith.constant 0 : index
        %c0_20 = arith.constant 0 : index
        %42 = vector.load %arg11[%41, %c0_19, %c0_20] : memref<4x8x1xf32, #tpu.memory_space<vmem>>, vector<1x8x1xf32>
        %43 = vector.shape_cast %42 : vector<1x8x1xf32> to vector<8x1xf32>
        %44 = arith.mulf %37, %43 : vector<8x1xf32>
        %cst_21 = arith.constant dense<0.000000e+00> : vector<8xf32>
        %45 = vector.multi_reduction <add>, %40, %cst_21 [1] : vector<8x8xf32> to vector<8xf32>
        %46 = vector.shape_cast %45 : vector<8xf32> to vector<8x1xf32>
        %47 = arith.addf %44, %46 : vector<8x1xf32>
        %48 = arith.index_cast %arg13 : i32 to index
        %c0_22 = arith.constant 0 : index
        %c0_23 = arith.constant 0 : index
        %49 = vector.load %arg11[%48, %c0_22, %c0_23] : memref<4x8x1xf32, #tpu.memory_space<vmem>>, vector<1x8x1xf32>
        %50 = vector.shape_cast %49 : vector<1x8x1xf32> to vector<8x1xf32>
        %51 = vector.shape_cast %47 : vector<8x1xf32> to vector<1x8x1xf32>
        tpu.vector_store %arg11[%48, %c0_22, %c0_23], %51 {strides = array<i32>} : memref<4x8x1xf32, #tpu.memory_space<vmem>>, vector<1x8x1xf32>,
        %52 = arith.index_cast %arg13 : i32 to index
        %c0_24 = arith.constant 0 : index
        %c0_25 = arith.constant 0 : index
        %53 = vector.load %arg12[%52, %c0_24, %c0_25] : memref<4x8x8xf32, #tpu.memory_space<vmem>>, vector<1x8x8xf32>
        %54 = vector.shape_cast %53 : vector<1x8x8xf32> to vector<8x8xf32>
        %55 = vector.broadcast %37 : vector<8x1xf32> to vector<8x8xf32>
        %56 = arith.mulf %55, %54 : vector<8x8xf32>
        %57 = arith.truncf %40 : vector<8x8xf32> to vector<8x8xbf16>
        %58 = arith.index_cast %arg13 : i32 to index
        %c0_26 = arith.constant 0 : index
        %c0_27 = arith.constant 0 : index
        %59 = vector.load %arg9[%58, %c0_26, %c0_27] : memref<4x8x8xbf16, #tpu.memory_space<vmem>>, vector<1x8x8xbf16>
        %60 = vector.shape_cast %59 : vector<1x8x8xbf16> to vector<8x8xbf16>
        %cst_28 = arith.constant dense<0.000000e+00> : vector<8x8xf32>
        %61 = tpu.matmul %57, %60, %cst_28 {dimension_numbers = #tpu.dot_dimension_numbers<[1], [0], [0], [1], [0, 0, 1, 1], [], []>} : vector<8x8xbf16>, vector<8x8xbf16>, vector<8x8xf32> -> vector<8x8xf32>
        %62 = arith.addf %56, %61 : vector<8x8xf32>
        %63 = arith.index_cast %arg13 : i32 to index
        %c0_29 = arith.constant 0 : index
        %c0_30 = arith.constant 0 : index
        %64 = vector.load %arg12[%63, %c0_29, %c0_30] : memref<4x8x8xf32, #tpu.memory_space<vmem>>, vector<1x8x8xf32>
        %65 = vector.shape_cast %64 : vector<1x8x8xf32> to vector<8x8xf32>
        %66 = vector.shape_cast %62 : vector<8x8xf32> to vector<1x8x8xf32>
        tpu.vector_store %arg12[%63, %c0_29, %c0_30], %66 {strides = array<i32>} : memref<4x8x8xf32, #tpu.memory_space<vmem>>, vector<1x8x8xf32>,
        %67 = arith.index_cast %arg13 : i32 to index
        %c0_31 = arith.constant 0 : index
        %c0_32 = arith.constant 0 : index
        %68 = vector.load %arg10[%67, %c0_31, %c0_32] : memref<4x8x1xf32, #tpu.memory_space<vmem>>, vector<1x8x1xf32>
        %69 = vector.shape_cast %68 : vector<1x8x1xf32> to vector<8x1xf32>
        %70 = vector.shape_cast %35 : vector<8x1xf32> to vector<1x8x1xf32>
        tpu.vector_store %arg10[%67, %c0_31, %c0_32], %70 {strides = array<i32>} : memref<4x8x1xf32, #tpu.memory_space<vmem>>, vector<1x8x1xf32>,
      }
      %c4_i32_12 = arith.constant 4 : i32
    } else {
    }
    %17 = arith.extui %12 : i1 to i32
    %c0_i32_7 = arith.constant 0 : i32
    %18 = arith.cmpi ne, %17, %c0_i32_7 : i32
    scf.if %18 {
      %22 = tpu.iota {dimensions = array<i32: 0>} : vector<8x8xi32>
      %23 = vector.broadcast %3 : i32 to vector<8x8xi32>
      %24 = arith.addi %23, %22 : vector<8x8xi32>
      %25 = tpu.iota {dimensions = array<i32: 1>} : vector<8x8xi32>
      %26 = vector.broadcast %6 : i32 to vector<8x8xi32>
      %27 = arith.addi %26, %25 : vector<8x8xi32>
      %28 = arith.cmpi sgt, %27, %24 : vector<8x8xi32>
      %cst = arith.constant 0xFF800000 : f32
      %cst_10 = arith.constant 0.000000e+00 : f32
      %29 = vector.broadcast %cst : f32 to vector<8x8xf32>
      %30 = vector.broadcast %cst_10 : f32 to vector<8x8xf32>
      %31 = arith.select %28, %29, %30 : vector<8x8xi1>, vector<8x8xf32>
      %c0_i32_11 = arith.constant 0 : i32
      %c4_i32 = arith.constant 4 : i32
      %32 = arith.addi %c0_i32_11, %c4_i32 : i32
      %c1_i32_12 = arith.constant 1 : i32
      scf.for %arg13 = %c0_i32_11 to %32 step %c1_i32_12  : i32 {
        %33 = arith.index_cast %arg13 : i32 to index
        %c0 = arith.constant 0 : index
        %c0_14 = arith.constant 0 : index
        %34 = vector.load %arg7[%33, %c0, %c0_14] : memref<4x8x8xbf16, #tpu.memory_space<vmem>>, vector<1x8x8xbf16>
        %35 = vector.shape_cast %34 : vector<1x8x8xbf16> to vector<8x8xbf16>
        %36 = arith.index_cast %arg13 : i32 to index
        %c0_15 = arith.constant 0 : index
        %c0_16 = arith.constant 0 : index
        %37 = vector.load %arg8[%36, %c0_15, %c0_16] : memref<4x8x8xbf16, #tpu.memory_space<vmem>>, vector<1x8x8xbf16>
        %38 = vector.shape_cast %37 : vector<1x8x8xbf16> to vector<8x8xbf16>
        %cst_17 = arith.constant dense<0.000000e+00> : vector<8x8xf32>
        %39 = tpu.matmul %35, %38, %cst_17 {dimension_numbers = #tpu.dot_dimension_numbers<[1], [1], [0], [0], [0, 0, 1, 0], [], []>} : vector<8x8xbf16>, vector<8x8xbf16>, vector<8x8xf32> -> vector<8x8xf32>
        %40 = arith.addf %39, %31 : vector<8x8xf32>
        %41 = arith.index_cast %arg13 : i32 to index
        %c0_18 = arith.constant 0 : index
        %c0_19 = arith.constant 0 : index
        %42 = vector.load %arg10[%41, %c0_18, %c0_19] : memref<4x8x1xf32, #tpu.memory_space<vmem>>, vector<1x8x1xf32>
        %43 = vector.shape_cast %42 : vector<1x8x1xf32> to vector<8x1xf32>
        %cst_20 = arith.constant dense<0xFF800000> : vector<8xf32>
        %44 = vector.multi_reduction <maximumf>, %40, %cst_20 [1] : vector<8x8xf32> to vector<8xf32>
        %45 = vector.shape_cast %44 : vector<8xf32> to vector<8x1xf32>
        %46 = arith.maximumf %43, %45 : vector<8x1xf32>
        %47 = arith.subf %43, %46 : vector<8x1xf32>
        %48 = math.exp %47 : vector<8x1xf32>
        %49 = vector.broadcast %46 : vector<8x1xf32> to vector<8x8xf32>
        %50 = arith.subf %40, %49 : vector<8x8xf32>
        %51 = math.exp %50 : vector<8x8xf32>
        %52 = arith.index_cast %arg13 : i32 to index
        %c0_21 = arith.constant 0 : index
        %c0_22 = arith.constant 0 : index
        %53 = vector.load %arg11[%52, %c0_21, %c0_22] : memref<4x8x1xf32, #tpu.memory_space<vmem>>, vector<1x8x1xf32>
        %54 = vector.shape_cast %53 : vector<1x8x1xf32> to vector<8x1xf32>
        %55 = arith.mulf %48, %54 : vector<8x1xf32>
        %cst_23 = arith.constant dense<0.000000e+00> : vector<8xf32>
        %56 = vector.multi_reduction <add>, %51, %cst_23 [1] : vector<8x8xf32> to vector<8xf32>
        %57 = vector.shape_cast %56 : vector<8xf32> to vector<8x1xf32>
        %58 = arith.addf %55, %57 : vector<8x1xf32>
        %59 = arith.index_cast %arg13 : i32 to index
        %c0_24 = arith.constant 0 : index
        %c0_25 = arith.constant 0 : index
        %60 = vector.load %arg11[%59, %c0_24, %c0_25] : memref<4x8x1xf32, #tpu.memory_space<vmem>>, vector<1x8x1xf32>
        %61 = vector.shape_cast %60 : vector<1x8x1xf32> to vector<8x1xf32>
        %62 = vector.shape_cast %58 : vector<8x1xf32> to vector<1x8x1xf32>
        tpu.vector_store %arg11[%59, %c0_24, %c0_25], %62 {strides = array<i32>} : memref<4x8x1xf32, #tpu.memory_space<vmem>>, vector<1x8x1xf32>,
        %63 = arith.index_cast %arg13 : i32 to index
        %c0_26 = arith.constant 0 : index
        %c0_27 = arith.constant 0 : index
        %64 = vector.load %arg12[%63, %c0_26, %c0_27] : memref<4x8x8xf32, #tpu.memory_space<vmem>>, vector<1x8x8xf32>
        %65 = vector.shape_cast %64 : vector<1x8x8xf32> to vector<8x8xf32>
        %66 = vector.broadcast %48 : vector<8x1xf32> to vector<8x8xf32>
        %67 = arith.mulf %66, %65 : vector<8x8xf32>
        %68 = arith.truncf %51 : vector<8x8xf32> to vector<8x8xbf16>
        %69 = arith.index_cast %arg13 : i32 to index
        %c0_28 = arith.constant 0 : index
        %c0_29 = arith.constant 0 : index
        %70 = vector.load %arg9[%69, %c0_28, %c0_29] : memref<4x8x8xbf16, #tpu.memory_space<vmem>>, vector<1x8x8xbf16>
        %71 = vector.shape_cast %70 : vector<1x8x8xbf16> to vector<8x8xbf16>
        %cst_30 = arith.constant dense<0.000000e+00> : vector<8x8xf32>
        %72 = tpu.matmul %68, %71, %cst_30 {dimension_numbers = #tpu.dot_dimension_numbers<[1], [0], [0], [1], [0, 0, 1, 1], [], []>} : vector<8x8xbf16>, vector<8x8xbf16>, vector<8x8xf32> -> vector<8x8xf32>
        %73 = arith.addf %67, %72 : vector<8x8xf32>
        %74 = arith.index_cast %arg13 : i32 to index
        %c0_31 = arith.constant 0 : index
        %c0_32 = arith.constant 0 : index
        %75 = vector.load %arg12[%74, %c0_31, %c0_32] : memref<4x8x8xf32, #tpu.memory_space<vmem>>, vector<1x8x8xf32>
        %76 = vector.shape_cast %75 : vector<1x8x8xf32> to vector<8x8xf32>
        %77 = vector.shape_cast %73 : vector<8x8xf32> to vector<1x8x8xf32>
        tpu.vector_store %arg12[%74, %c0_31, %c0_32], %77 {strides = array<i32>} : memref<4x8x8xf32, #tpu.memory_space<vmem>>, vector<1x8x8xf32>,
        %78 = arith.index_cast %arg13 : i32 to index
        %c0_33 = arith.constant 0 : index
        %c0_34 = arith.constant 0 : index
        %79 = vector.load %arg10[%78, %c0_33, %c0_34] : memref<4x8x1xf32, #tpu.memory_space<vmem>>, vector<1x8x1xf32>
        %80 = vector.shape_cast %79 : vector<1x8x1xf32> to vector<8x1xf32>
        %81 = vector.shape_cast %46 : vector<8x1xf32> to vector<1x8x1xf32>
        tpu.vector_store %arg10[%78, %c0_33, %c0_34], %81 {strides = array<i32>} : memref<4x8x1xf32, #tpu.memory_space<vmem>>, vector<1x8x1xf32>,
      }
      %c4_i32_13 = arith.constant 4 : i32
    } else {
    }
    %c0_i32_8 = arith.constant 0 : i32
    %19 = arith.cmpi eq, %arg2, %c0_i32_8 : i32
    %20 = arith.extui %19 : i1 to i32
    %c0_i32_9 = arith.constant 0 : i32
    %21 = arith.cmpi ne, %20, %c0_i32_9 : i32
    scf.if %21 {
      %c0 = arith.constant 0 : index
      %c0_10 = arith.constant 0 : index
      %c0_11 = arith.constant 0 : index
      %22 = vector.load %arg12[%c0, %c0_10, %c0_11] : memref<4x8x8xf32, #tpu.memory_space<vmem>>, vector<1x8x8xf32>
      %23 = vector.shape_cast %22 : vector<1x8x8xf32> to vector<8x8xf32>
      %c0_12 = arith.constant 0 : index
      %c0_13 = arith.constant 0 : index
      %c0_14 = arith.constant 0 : index
      %24 = vector.load %arg11[%c0_12, %c0_13, %c0_14] : memref<4x8x1xf32, #tpu.memory_space<vmem>>, vector<1x8x1xf32>
      %25 = vector.shape_cast %24 : vector<1x8x1xf32> to vector<8x1xf32>
      %26 = vector.broadcast %25 : vector<8x1xf32> to vector<8x8xf32>
      %27 = arith.divf %23, %26 : vector<8x8xf32>
      %28 = arith.truncf %27 : vector<8x8xf32> to vector<8x8xbf16>
      %c0_15 = arith.constant 0 : index
      %c0_16 = arith.constant 0 : index
      %c0_17 = arith.constant 0 : index
      %29 = vector.load %arg6[%c0_15, %c0_16, %c0_17] : memref<1x8x32xbf16, #tpu.memory_space<vmem>>, vector<1x8x8xbf16>
      %30 = vector.shape_cast %29 : vector<1x8x8xbf16> to vector<8x8xbf16>
      %31 = vector.shape_cast %28 : vector<8x8xbf16> to vector<1x8x8xbf16>
      tpu.vector_store %arg6[%c0_15, %c0_16, %c0_17], %31 {strides = array<i32>} : memref<1x8x32xbf16, #tpu.memory_space<vmem>>, vector<1x8x8xbf16>,
      %c1 = arith.constant 1 : index
      %c0_18 = arith.constant 0 : index
      %c0_19 = arith.constant 0 : index
      %32 = vector.load %arg12[%c1, %c0_18, %c0_19] : memref<4x8x8xf32, #tpu.memory_space<vmem>>, vector<1x8x8xf32>
      %33 = vector.shape_cast %32 : vector<1x8x8xf32> to vector<8x8xf32>
      %c1_20 = arith.constant 1 : index
      %c0_21 = arith.constant 0 : index
      %c0_22 = arith.constant 0 : index
      %34 = vector.load %arg11[%c1_20, %c0_21, %c0_22] : memref<4x8x1xf32, #tpu.memory_space<vmem>>, vector<1x8x1xf32>
      %35 = vector.shape_cast %34 : vector<1x8x1xf32> to vector<8x1xf32>
      %36 = vector.broadcast %35 : vector<8x1xf32> to vector<8x8xf32>
      %37 = arith.divf %33, %36 : vector<8x8xf32>
      %38 = arith.truncf %37 : vector<8x8xf32> to vector<8x8xbf16>
      %c0_23 = arith.constant 0 : index
      %c0_24 = arith.constant 0 : index
      %c8 = arith.constant 8 : index
      %39 = vector.load %arg6[%c0_23, %c0_24, %c8] : memref<1x8x32xbf16, #tpu.memory_space<vmem>>, vector<1x8x8xbf16>
      %40 = vector.shape_cast %39 : vector<1x8x8xbf16> to vector<8x8xbf16>
      %41 = vector.shape_cast %38 : vector<8x8xbf16> to vector<1x8x8xbf16>
      tpu.vector_store %arg6[%c0_23, %c0_24, %c8], %41 {strides = array<i32>} : memref<1x8x32xbf16, #tpu.memory_space<vmem>>, vector<1x8x8xbf16>,
      %c2 = arith.constant 2 : index
      %c0_25 = arith.constant 0 : index
      %c0_26 = arith.constant 0 : index
      %42 = vector.load %arg12[%c2, %c0_25, %c0_26] : memref<4x8x8xf32, #tpu.memory_space<vmem>>, vector<1x8x8xf32>
      %43 = vector.shape_cast %42 : vector<1x8x8xf32> to vector<8x8xf32>
      %c2_27 = arith.constant 2 : index
      %c0_28 = arith.constant 0 : index
      %c0_29 = arith.constant 0 : index
      %44 = vector.load %arg11[%c2_27, %c0_28, %c0_29] : memref<4x8x1xf32, #tpu.memory_space<vmem>>, vector<1x8x1xf32>
      %45 = vector.shape_cast %44 : vector<1x8x1xf32> to vector<8x1xf32>
      %46 = vector.broadcast %45 : vector<8x1xf32> to vector<8x8xf32>
      %47 = arith.divf %43, %46 : vector<8x8xf32>
      %48 = arith.truncf %47 : vector<8x8xf32> to vector<8x8xbf16>
      %c0_30 = arith.constant 0 : index
      %c0_31 = arith.constant 0 : index
      %c16 = arith.constant 16 : index
      %49 = vector.load %arg6[%c0_30, %c0_31, %c16] : memref<1x8x32xbf16, #tpu.memory_space<vmem>>, vector<1x8x8xbf16>
      %50 = vector.shape_cast %49 : vector<1x8x8xbf16> to vector<8x8xbf16>
      %51 = vector.shape_cast %48 : vector<8x8xbf16> to vector<1x8x8xbf16>
      tpu.vector_store %arg6[%c0_30, %c0_31, %c16], %51 {strides = array<i32>} : memref<1x8x32xbf16, #tpu.memory_space<vmem>>, vector<1x8x8xbf16>,
      %c3 = arith.constant 3 : index
      %c0_32 = arith.constant 0 : index
      %c0_33 = arith.constant 0 : index
      %52 = vector.load %arg12[%c3, %c0_32, %c0_33] : memref<4x8x8xf32, #tpu.memory_space<vmem>>, vector<1x8x8xf32>
      %53 = vector.shape_cast %52 : vector<1x8x8xf32> to vector<8x8xf32>
      %c3_34 = arith.constant 3 : index
      %c0_35 = arith.constant 0 : index
      %c0_36 = arith.constant 0 : index
      %54 = vector.load %arg11[%c3_34, %c0_35, %c0_36] : memref<4x8x1xf32, #tpu.memory_space<vmem>>, vector<1x8x1xf32>
      %55 = vector.shape_cast %54 : vector<1x8x1xf32> to vector<8x1xf32>
      %56 = vector.broadcast %55 : vector<8x1xf32> to vector<8x8xf32>
      %57 = arith.divf %53, %56 : vector<8x8xf32>
      %58 = arith.truncf %57 : vector<8x8xf32> to vector<8x8xbf16>
      %c0_37 = arith.constant 0 : index
      %c0_38 = arith.constant 0 : index
      %c24 = arith.constant 24 : index
      %59 = vector.load %arg6[%c0_37, %c0_38, %c24] : memref<1x8x32xbf16, #tpu.memory_space<vmem>>, vector<1x8x8xbf16>
      %60 = vector.shape_cast %59 : vector<1x8x8xbf16> to vector<8x8xbf16>
      %61 = vector.shape_cast %58 : vector<8x8xbf16> to vector<1x8x8xbf16>
      tpu.vector_store %arg6[%c0_37, %c0_38, %c24], %61 {strides = array<i32>} : memref<1x8x32xbf16, #tpu.memory_space<vmem>>, vector<1x8x8xbf16>,
    } else {
    }
    return
  }
  func.func @transform_0(%arg0: i32, %arg1: i32, %arg2: i32) -> (i32, i32, i32) {
    %c0_i32 = arith.constant 0 : i32
    %c0_i32_0 = arith.constant 0 : i32
    return %arg0, %arg1, %c0_i32 : i32, i32, i32
  }
  func.func @transform_1(%arg0: i32, %arg1: i32, %arg2: i32) -> (i32, i32, i32) {
    %c0_i32 = arith.constant 0 : i32
    %c0_i32_0 = arith.constant 0 : i32
    return %arg0, %arg2, %c0_i32 : i32, i32, i32
  }
  func.func @transform_2(%arg0: i32, %arg1: i32, %arg2: i32) -> (i32, i32, i32) {
    %c0_i32 = arith.constant 0 : i32
    %c0_i32_0 = arith.constant 0 : i32
    return %arg0, %arg2, %c0_i32 : i32, i32, i32
  }
  func.func @transform_3(%arg0: i32, %arg1: i32, %arg2: i32) -> (i32, i32, i32) {
    %c0_i32 = arith.constant 0 : i32
    %c0_i32_0 = arith.constant 0 : i32
    return %arg0, %arg1, %c0_i32 : i32, i32, i32
  }
}

module attributes {stable_mosaic.version = 11 : i64} {
  func.func @_ffn_kernel(%arg0: i32, %arg1: i32, %arg2: memref<16x32xbf16, #tpu.memory_space<vmem>>, %arg3: memref<32x64xbf16, #tpu.memory_space<vmem>>, %arg4: memref<1x64xf32, #tpu.memory_space<vmem>>, %arg5: memref<64x32xbf16, #tpu.memory_space<vmem>>, %arg6: memref<1x32xf32, #tpu.memory_space<vmem>>, %arg7: memref<1x32xf32, #tpu.memory_space<vmem>>, %arg8: memref<1x32xf32, #tpu.memory_space<vmem>>, %arg9: memref<16x32xbf16, #tpu.memory_space<vmem>>, %arg10: memref<16x32xf32, #tpu.memory_space<vmem>>) attributes {dimension_semantics = [#tpu.dimension_semantics<parallel>, #tpu.dimension_semantics<arbitrary>], iteration_bounds = array<i64: 1, 1>, scalar_prefetch = 0 : i64, scratch_operands = 1 : i64, tpu.core_type = #tpu.core_type<tc>, window_params = [{transform_indices = @transform_0, window_bounds = array<i64: 16, 32>}, {transform_indices = @transform_1, window_bounds = array<i64: 32, 64>}, {transform_indices = @transform_2, window_bounds = array<i64: 1, 64>}, {transform_indices = @transform_3, window_bounds = array<i64: 64, 32>}, {pipeline_mode = #tpu.pipeline_mode<synchronous>, transform_indices = @transform_4, window_bounds = array<i64: 1, 32>}, {pipeline_mode = #tpu.pipeline_mode<synchronous>, transform_indices = @transform_5, window_bounds = array<i64: 1, 32>}, {pipeline_mode = #tpu.pipeline_mode<synchronous>, transform_indices = @transform_6, window_bounds = array<i64: 1, 32>}, {transform_indices = @transform_7, window_bounds = array<i64: 16, 32>}]} {
    %c0_i32 = arith.constant 0 : i32
    %0 = arith.cmpi eq, %arg1, %c0_i32 : i32
    %1 = arith.extui %0 : i1 to i32
    %c0_i32_0 = arith.constant 0 : i32
    %2 = arith.cmpi ne, %1, %c0_i32_0 : i32
    scf.if %2 {
      %cst_16 = arith.constant 0.000000e+00 : f32
      %20 = vector.broadcast %cst_16 : f32 to vector<16x32xf32>
      %c0_17 = arith.constant 0 : index
      %c0_18 = arith.constant 0 : index
      %21 = vector.load %arg10[%c0_17, %c0_18] : memref<16x32xf32, #tpu.memory_space<vmem>>, vector<16x32xf32>
      tpu.vector_store %arg10[%c0_17, %c0_18], %20 {strides = array<i32>} : memref<16x32xf32, #tpu.memory_space<vmem>>, vector<16x32xf32>,
    } else {
    }
    %c0 = arith.constant 0 : index
    %c0_1 = arith.constant 0 : index
    %3 = vector.load %arg2[%c0, %c0_1] : memref<16x32xbf16, #tpu.memory_space<vmem>>, vector<16x32xbf16>
    %c0_2 = arith.constant 0 : index
    %c0_3 = arith.constant 0 : index
    %4 = vector.load %arg3[%c0_2, %c0_3] : memref<32x64xbf16, #tpu.memory_space<vmem>>, vector<32x64xbf16>
    %cst = arith.constant dense<0.000000e+00> : vector<16x64xf32>
    %5 = tpu.matmul %3, %4, %cst {dimension_numbers = #tpu.dot_dimension_numbers<[1], [0], [0], [1], [0, 0, 1, 1], [], []>} : vector<16x32xbf16>, vector<32x64xbf16>, vector<16x64xf32> -> vector<16x64xf32>
    %c0_4 = arith.constant 0 : index
    %c0_5 = arith.constant 0 : index
    %6 = vector.load %arg4[%c0_4, %c0_5] : memref<1x64xf32, #tpu.memory_space<vmem>>, vector<1x64xf32>
    %7 = vector.broadcast %6 : vector<1x64xf32> to vector<16x64xf32>
    %8 = arith.addf %5, %7 : vector<16x64xf32>
    %cst_6 = arith.constant 0.000000e+00 : f32
    %9 = vector.broadcast %cst_6 : f32 to vector<16x64xf32>
    %10 = arith.maximumf %8, %9 : vector<16x64xf32>
    %c0_7 = arith.constant 0 : index
    %c0_8 = arith.constant 0 : index
    %11 = vector.load %arg10[%c0_7, %c0_8] : memref<16x32xf32, #tpu.memory_space<vmem>>, vector<16x32xf32>
    %12 = arith.truncf %10 : vector<16x64xf32> to vector<16x64xbf16>
    %c0_9 = arith.constant 0 : index
    %c0_10 = arith.constant 0 : index
    %13 = vector.load %arg5[%c0_9, %c0_10] : memref<64x32xbf16, #tpu.memory_space<vmem>>, vector<64x32xbf16>
    %cst_11 = arith.constant dense<0.000000e+00> : vector<16x32xf32>
    %14 = tpu.matmul %12, %13, %cst_11 {dimension_numbers = #tpu.dot_dimension_numbers<[1], [0], [0], [1], [0, 0, 1, 1], [], []>} : vector<16x64xbf16>, vector<64x32xbf16>, vector<16x32xf32> -> vector<16x32xf32>
    %15 = arith.addf %11, %14 : vector<16x32xf32>
    %c0_12 = arith.constant 0 : index
    %c0_13 = arith.constant 0 : index
    %16 = vector.load %arg10[%c0_12, %c0_13] : memref<16x32xf32, #tpu.memory_space<vmem>>, vector<16x32xf32>
    tpu.vector_store %arg10[%c0_12, %c0_13], %15 {strides = array<i32>} : memref<16x32xf32, #tpu.memory_space<vmem>>, vector<16x32xf32>,
    %c0_i32_14 = arith.constant 0 : i32
    %17 = arith.cmpi eq, %arg1, %c0_i32_14 : i32
    %18 = arith.extui %17 : i1 to i32
    %c0_i32_15 = arith.constant 0 : i32
    %19 = arith.cmpi ne, %18, %c0_i32_15 : i32
    scf.if %19 {
      %c0_16 = arith.constant 0 : index
      %c0_17 = arith.constant 0 : index
      %20 = vector.load %arg10[%c0_16, %c0_17] : memref<16x32xf32, #tpu.memory_space<vmem>>, vector<16x32xf32>
      %c0_18 = arith.constant 0 : index
      %c0_19 = arith.constant 0 : index
      %21 = vector.load %arg6[%c0_18, %c0_19] : memref<1x32xf32, #tpu.memory_space<vmem>>, vector<1x32xf32>
      %22 = vector.broadcast %21 : vector<1x32xf32> to vector<16x32xf32>
      %23 = arith.addf %20, %22 : vector<16x32xf32>
      %c0_20 = arith.constant 0 : index
      %c0_21 = arith.constant 0 : index
      %24 = vector.load %arg2[%c0_20, %c0_21] : memref<16x32xbf16, #tpu.memory_space<vmem>>, vector<16x32xbf16>
      %25 = arith.extf %24 : vector<16x32xbf16> to vector<16x32xf32>
      %26 = arith.addf %23, %25 : vector<16x32xf32>
      %cst_22 = arith.constant dense<0.000000e+00> : vector<16xf32>
      %27 = vector.multi_reduction <add>, %26, %cst_22 [1] : vector<16x32xf32> to vector<16xf32>
      %28 = vector.shape_cast %27 : vector<16xf32> to vector<16x1xf32>
      %cst_23 = arith.constant 3.200000e+01 : f32
      %29 = vector.broadcast %cst_23 : f32 to vector<16x1xf32>
      %30 = arith.divf %28, %29 : vector<16x1xf32>
      %31 = vector.broadcast %30 : vector<16x1xf32> to vector<16x32xf32>
      %32 = arith.subf %26, %31 : vector<16x32xf32>
      %33 = arith.mulf %32, %32 : vector<16x32xf32>
      %cst_24 = arith.constant dense<0.000000e+00> : vector<16xf32>
      %34 = vector.multi_reduction <add>, %33, %cst_24 [1] : vector<16x32xf32> to vector<16xf32>
      %35 = vector.shape_cast %34 : vector<16xf32> to vector<16x1xf32>
      %cst_25 = arith.constant 3.200000e+01 : f32
      %36 = vector.broadcast %cst_25 : f32 to vector<16x1xf32>
      %37 = arith.divf %35, %36 : vector<16x1xf32>
      %38 = vector.broadcast %30 : vector<16x1xf32> to vector<16x32xf32>
      %39 = arith.subf %26, %38 : vector<16x32xf32>
      %cst_26 = arith.constant 9.99999974E-6 : f32
      %40 = vector.broadcast %cst_26 : f32 to vector<16x1xf32>
      %41 = arith.addf %37, %40 : vector<16x1xf32>
      %42 = math.rsqrt %41 : vector<16x1xf32>
      %43 = vector.broadcast %42 : vector<16x1xf32> to vector<16x32xf32>
      %44 = arith.mulf %39, %43 : vector<16x32xf32>
      %c0_27 = arith.constant 0 : index
      %c0_28 = arith.constant 0 : index
      %45 = vector.load %arg7[%c0_27, %c0_28] : memref<1x32xf32, #tpu.memory_space<vmem>>, vector<1x32xf32>
      %46 = vector.broadcast %45 : vector<1x32xf32> to vector<16x32xf32>
      %47 = arith.mulf %44, %46 : vector<16x32xf32>
      %c0_29 = arith.constant 0 : index
      %c0_30 = arith.constant 0 : index
      %48 = vector.load %arg8[%c0_29, %c0_30] : memref<1x32xf32, #tpu.memory_space<vmem>>, vector<1x32xf32>
      %49 = vector.broadcast %48 : vector<1x32xf32> to vector<16x32xf32>
      %50 = arith.addf %47, %49 : vector<16x32xf32>
      %51 = arith.truncf %50 : vector<16x32xf32> to vector<16x32xbf16>
      %c0_31 = arith.constant 0 : index
      %c0_32 = arith.constant 0 : index
      %52 = vector.load %arg9[%c0_31, %c0_32] : memref<16x32xbf16, #tpu.memory_space<vmem>>, vector<16x32xbf16>
      tpu.vector_store %arg9[%c0_31, %c0_32], %51 {strides = array<i32>} : memref<16x32xbf16, #tpu.memory_space<vmem>>, vector<16x32xbf16>,
    } else {
    }
    return
  }
  func.func @transform_0(%arg0: i32, %arg1: i32) -> (i32, i32) {
    %c0_i32 = arith.constant 0 : i32
    %c0_i32_0 = arith.constant 0 : i32
    return %arg0, %c0_i32 : i32, i32
  }
  func.func @transform_1(%arg0: i32, %arg1: i32) -> (i32, i32) {
    %c0_i32 = arith.constant 0 : i32
    %c0_i32_0 = arith.constant 0 : i32
    return %c0_i32, %arg1 : i32, i32
  }
  func.func @transform_2(%arg0: i32, %arg1: i32) -> (i32, i32) {
    %c0_i32 = arith.constant 0 : i32
    %c0_i32_0 = arith.constant 0 : i32
    return %c0_i32, %arg1 : i32, i32
  }
  func.func @transform_3(%arg0: i32, %arg1: i32) -> (i32, i32) {
    %c0_i32 = arith.constant 0 : i32
    %c0_i32_0 = arith.constant 0 : i32
    return %arg1, %c0_i32 : i32, i32
  }
  func.func @transform_4(%arg0: i32, %arg1: i32) -> (i32, i32) {
    %c0_i32 = arith.constant 0 : i32
    %c0_i32_0 = arith.constant 0 : i32
    %c0_i32_1 = arith.constant 0 : i32
    return %c0_i32, %c0_i32_0 : i32, i32
  }
  func.func @transform_5(%arg0: i32, %arg1: i32) -> (i32, i32) {
    %c0_i32 = arith.constant 0 : i32
    %c0_i32_0 = arith.constant 0 : i32
    %c0_i32_1 = arith.constant 0 : i32
    return %c0_i32, %c0_i32_0 : i32, i32
  }
  func.func @transform_6(%arg0: i32, %arg1: i32) -> (i32, i32) {
    %c0_i32 = arith.constant 0 : i32
    %c0_i32_0 = arith.constant 0 : i32
    %c0_i32_1 = arith.constant 0 : i32
    return %c0_i32, %c0_i32_0 : i32, i32
  }
  func.func @transform_7(%arg0: i32, %arg1: i32) -> (i32, i32) {
    %c0_i32 = arith.constant 0 : i32
    %c0_i32_0 = arith.constant 0 : i32
    return %arg0, %c0_i32 : i32, i32
  }
}

module attributes {stable_mosaic.version = 11 : i64} {
  func.func @_multi_matmul_kernel(%arg0: i32, %arg1: i32, %arg2: memref<16x32xbf16, #tpu.memory_space<vmem>>, %arg3: memref<32x32xbf16, #tpu.memory_space<vmem>>, %arg4: memref<32x32xbf16, #tpu.memory_space<vmem>>, %arg5: memref<1x32xf32, #tpu.memory_space<vmem>>, %arg6: memref<1x32xf32, #tpu.memory_space<vmem>>, %arg7: memref<16x32xbf16, #tpu.memory_space<vmem>>, %arg8: memref<16x32xbf16, #tpu.memory_space<vmem>>, %arg9: memref<16x32xf32, #tpu.memory_space<vmem>>, %arg10: memref<16x32xf32, #tpu.memory_space<vmem>>) attributes {dimension_semantics = [#tpu.dimension_semantics<parallel>, #tpu.dimension_semantics<arbitrary>], iteration_bounds = array<i64: 1, 1>, scalar_prefetch = 0 : i64, scratch_operands = 2 : i64, tpu.core_type = #tpu.core_type<tc>, window_params = [{transform_indices = @transform_0, window_bounds = array<i64: 16, 32>}, {transform_indices = @transform_1, window_bounds = array<i64: 32, 32>}, {transform_indices = @transform_2, window_bounds = array<i64: 32, 32>}, {pipeline_mode = #tpu.pipeline_mode<synchronous>, transform_indices = @transform_3, window_bounds = array<i64: 1, 32>}, {pipeline_mode = #tpu.pipeline_mode<synchronous>, transform_indices = @transform_4, window_bounds = array<i64: 1, 32>}, {transform_indices = @transform_5, window_bounds = array<i64: 16, 32>}, {transform_indices = @transform_6, window_bounds = array<i64: 16, 32>}]} {
    %c0_i32 = arith.constant 0 : i32
    %0 = arith.cmpi eq, %arg1, %c0_i32 : i32
    %1 = arith.extui %0 : i1 to i32
    %c0_i32_0 = arith.constant 0 : i32
    %2 = arith.cmpi ne, %1, %c0_i32_0 : i32
    scf.if %2 {
      %cst_17 = arith.constant 0.000000e+00 : f32
      %17 = vector.broadcast %cst_17 : f32 to vector<16x32xf32>
      %c0_18 = arith.constant 0 : index
      %c0_19 = arith.constant 0 : index
      %18 = vector.load %arg9[%c0_18, %c0_19] : memref<16x32xf32, #tpu.memory_space<vmem>>, vector<16x32xf32>
      tpu.vector_store %arg9[%c0_18, %c0_19], %17 {strides = array<i32>} : memref<16x32xf32, #tpu.memory_space<vmem>>, vector<16x32xf32>,
      %cst_20 = arith.constant 0.000000e+00 : f32
      %19 = vector.broadcast %cst_20 : f32 to vector<16x32xf32>
      %c0_21 = arith.constant 0 : index
      %c0_22 = arith.constant 0 : index
      %20 = vector.load %arg10[%c0_21, %c0_22] : memref<16x32xf32, #tpu.memory_space<vmem>>, vector<16x32xf32>
      tpu.vector_store %arg10[%c0_21, %c0_22], %19 {strides = array<i32>} : memref<16x32xf32, #tpu.memory_space<vmem>>, vector<16x32xf32>,
    } else {
    }
    %c0 = arith.constant 0 : index
    %c0_1 = arith.constant 0 : index
    %3 = vector.load %arg2[%c0, %c0_1] : memref<16x32xbf16, #tpu.memory_space<vmem>>, vector<16x32xbf16>
    %c0_2 = arith.constant 0 : index
    %c0_3 = arith.constant 0 : index
    %4 = vector.load %arg9[%c0_2, %c0_3] : memref<16x32xf32, #tpu.memory_space<vmem>>, vector<16x32xf32>
    %c0_4 = arith.constant 0 : index
    %c0_5 = arith.constant 0 : index
    %5 = vector.load %arg3[%c0_4, %c0_5] : memref<32x32xbf16, #tpu.memory_space<vmem>>, vector<32x32xbf16>
    %cst = arith.constant dense<0.000000e+00> : vector<16x32xf32>
    %6 = tpu.matmul %3, %5, %cst {dimension_numbers = #tpu.dot_dimension_numbers<[1], [0], [0], [1], [0, 0, 1, 1], [], []>} : vector<16x32xbf16>, vector<32x32xbf16>, vector<16x32xf32> -> vector<16x32xf32>
    %7 = arith.addf %4, %6 : vector<16x32xf32>
    %c0_6 = arith.constant 0 : index
    %c0_7 = arith.constant 0 : index
    %8 = vector.load %arg9[%c0_6, %c0_7] : memref<16x32xf32, #tpu.memory_space<vmem>>, vector<16x32xf32>
    tpu.vector_store %arg9[%c0_6, %c0_7], %7 {strides = array<i32>} : memref<16x32xf32, #tpu.memory_space<vmem>>, vector<16x32xf32>,
    %c0_8 = arith.constant 0 : index
    %c0_9 = arith.constant 0 : index
    %9 = vector.load %arg10[%c0_8, %c0_9] : memref<16x32xf32, #tpu.memory_space<vmem>>, vector<16x32xf32>
    %c0_10 = arith.constant 0 : index
    %c0_11 = arith.constant 0 : index
    %10 = vector.load %arg4[%c0_10, %c0_11] : memref<32x32xbf16, #tpu.memory_space<vmem>>, vector<32x32xbf16>
    %cst_12 = arith.constant dense<0.000000e+00> : vector<16x32xf32>
    %11 = tpu.matmul %3, %10, %cst_12 {dimension_numbers = #tpu.dot_dimension_numbers<[1], [0], [0], [1], [0, 0, 1, 1], [], []>} : vector<16x32xbf16>, vector<32x32xbf16>, vector<16x32xf32> -> vector<16x32xf32>
    %12 = arith.addf %9, %11 : vector<16x32xf32>
    %c0_13 = arith.constant 0 : index
    %c0_14 = arith.constant 0 : index
    %13 = vector.load %arg10[%c0_13, %c0_14] : memref<16x32xf32, #tpu.memory_space<vmem>>, vector<16x32xf32>
    tpu.vector_store %arg10[%c0_13, %c0_14], %12 {strides = array<i32>} : memref<16x32xf32, #tpu.memory_space<vmem>>, vector<16x32xf32>,
    %c0_i32_15 = arith.constant 0 : i32
    %14 = arith.cmpi eq, %arg1, %c0_i32_15 : i32
    %15 = arith.extui %14 : i1 to i32
    %c0_i32_16 = arith.constant 0 : i32
    %16 = arith.cmpi ne, %15, %c0_i32_16 : i32
    scf.if %16 {
      %c0_17 = arith.constant 0 : index
      %c0_18 = arith.constant 0 : index
      %17 = vector.load %arg9[%c0_17, %c0_18] : memref<16x32xf32, #tpu.memory_space<vmem>>, vector<16x32xf32>
      %c0_19 = arith.constant 0 : index
      %c0_20 = arith.constant 0 : index
      %18 = vector.load %arg5[%c0_19, %c0_20] : memref<1x32xf32, #tpu.memory_space<vmem>>, vector<1x32xf32>
      %19 = vector.broadcast %18 : vector<1x32xf32> to vector<16x32xf32>
      %20 = arith.addf %17, %19 : vector<16x32xf32>
      %21 = arith.truncf %20 : vector<16x32xf32> to vector<16x32xbf16>
      %c0_21 = arith.constant 0 : index
      %c0_22 = arith.constant 0 : index
      %22 = vector.load %arg7[%c0_21, %c0_22] : memref<16x32xbf16, #tpu.memory_space<vmem>>, vector<16x32xbf16>
      tpu.vector_store %arg7[%c0_21, %c0_22], %21 {strides = array<i32>} : memref<16x32xbf16, #tpu.memory_space<vmem>>, vector<16x32xbf16>,
      %c0_23 = arith.constant 0 : index
      %c0_24 = arith.constant 0 : index
      %23 = vector.load %arg10[%c0_23, %c0_24] : memref<16x32xf32, #tpu.memory_space<vmem>>, vector<16x32xf32>
      %c0_25 = arith.constant 0 : index
      %c0_26 = arith.constant 0 : index
      %24 = vector.load %arg6[%c0_25, %c0_26] : memref<1x32xf32, #tpu.memory_space<vmem>>, vector<1x32xf32>
      %25 = vector.broadcast %24 : vector<1x32xf32> to vector<16x32xf32>
      %26 = arith.addf %23, %25 : vector<16x32xf32>
      %27 = arith.truncf %26 : vector<16x32xf32> to vector<16x32xbf16>
      %c0_27 = arith.constant 0 : index
      %c0_28 = arith.constant 0 : index
      %28 = vector.load %arg8[%c0_27, %c0_28] : memref<16x32xbf16, #tpu.memory_space<vmem>>, vector<16x32xbf16>
      tpu.vector_store %arg8[%c0_27, %c0_28], %27 {strides = array<i32>} : memref<16x32xbf16, #tpu.memory_space<vmem>>, vector<16x32xbf16>,
    } else {
    }
    return
  }
  func.func @transform_0(%arg0: i32, %arg1: i32) -> (i32, i32) {
    %c0_i32 = arith.constant 0 : i32
    return %arg0, %arg1 : i32, i32
  }
  func.func @transform_1(%arg0: i32, %arg1: i32) -> (i32, i32) {
    %c0_i32 = arith.constant 0 : i32
    %c0_i32_0 = arith.constant 0 : i32
    return %arg1, %c0_i32 : i32, i32
  }
  func.func @transform_2(%arg0: i32, %arg1: i32) -> (i32, i32) {
    %c0_i32 = arith.constant 0 : i32
    %c0_i32_0 = arith.constant 0 : i32
    return %arg1, %c0_i32 : i32, i32
  }
  func.func @transform_3(%arg0: i32, %arg1: i32) -> (i32, i32) {
    %c0_i32 = arith.constant 0 : i32
    %c0_i32_0 = arith.constant 0 : i32
    %c0_i32_1 = arith.constant 0 : i32
    return %c0_i32, %c0_i32_0 : i32, i32
  }
  func.func @transform_4(%arg0: i32, %arg1: i32) -> (i32, i32) {
    %c0_i32 = arith.constant 0 : i32
    %c0_i32_0 = arith.constant 0 : i32
    %c0_i32_1 = arith.constant 0 : i32
    return %c0_i32, %c0_i32_0 : i32, i32
  }
  func.func @transform_5(%arg0: i32, %arg1: i32) -> (i32, i32) {
    %c0_i32 = arith.constant 0 : i32
    %c0_i32_0 = arith.constant 0 : i32
    return %arg0, %c0_i32 : i32, i32
  }
  func.func @transform_6(%arg0: i32, %arg1: i32) -> (i32, i32) {
    %c0_i32 = arith.constant 0 : i32
    %c0_i32_0 = arith.constant 0 : i32
    return %arg0, %c0_i32 : i32, i32
  }
}

module attributes {stable_mosaic.version = 11 : i64} {
  func.func @_matmul_kernel(%arg0: i32, %arg1: i32, %arg2: i32, %arg3: memref<16x32xbf16, #tpu.memory_space<vmem>>, %arg4: memref<32x32xbf16, #tpu.memory_space<vmem>>, %arg5: memref<1x32xf32, #tpu.memory_space<vmem>>, %arg6: memref<16x32xbf16, #tpu.memory_space<vmem>>, %arg7: memref<16x32xf32, #tpu.memory_space<vmem>>) attributes {dimension_semantics = [#tpu.dimension_semantics<parallel>, #tpu.dimension_semantics<parallel>, #tpu.dimension_semantics<arbitrary>], iteration_bounds = array<i64: 1, 1, 1>, scalar_prefetch = 0 : i64, scratch_operands = 1 : i64, tpu.core_type = #tpu.core_type<tc>, window_params = [{transform_indices = @transform_0, window_bounds = array<i64: 16, 32>}, {transform_indices = @transform_1, window_bounds = array<i64: 32, 32>}, {transform_indices = @transform_2, window_bounds = array<i64: 1, 32>}, {transform_indices = @transform_3, window_bounds = array<i64: 16, 32>}]} {
    %c0_i32 = arith.constant 0 : i32
    %0 = arith.cmpi eq, %arg2, %c0_i32 : i32
    %1 = arith.extui %0 : i1 to i32
    %c0_i32_0 = arith.constant 0 : i32
    %2 = arith.cmpi ne, %1, %c0_i32_0 : i32
    scf.if %2 {
      %cst_10 = arith.constant 0.000000e+00 : f32
      %12 = vector.broadcast %cst_10 : f32 to vector<16x32xf32>
      %c0_11 = arith.constant 0 : index
      %c0_12 = arith.constant 0 : index
      %13 = vector.load %arg7[%c0_11, %c0_12] : memref<16x32xf32, #tpu.memory_space<vmem>>, vector<16x32xf32>
      tpu.vector_store %arg7[%c0_11, %c0_12], %12 {strides = array<i32>} : memref<16x32xf32, #tpu.memory_space<vmem>>, vector<16x32xf32>,
    } else {
    }
    %c0 = arith.constant 0 : index
    %c0_1 = arith.constant 0 : index
    %3 = vector.load %arg7[%c0, %c0_1] : memref<16x32xf32, #tpu.memory_space<vmem>>, vector<16x32xf32>
    %c0_2 = arith.constant 0 : index
    %c0_3 = arith.constant 0 : index
    %4 = vector.load %arg3[%c0_2, %c0_3] : memref<16x32xbf16, #tpu.memory_space<vmem>>, vector<16x32xbf16>
    %c0_4 = arith.constant 0 : index
    %c0_5 = arith.constant 0 : index
    %5 = vector.load %arg4[%c0_4, %c0_5] : memref<32x32xbf16, #tpu.memory_space<vmem>>, vector<32x32xbf16>
    %cst = arith.constant dense<0.000000e+00> : vector<16x32xf32>
    %6 = tpu.matmul %4, %5, %cst {dimension_numbers = #tpu.dot_dimension_numbers<[1], [0], [0], [1], [0, 0, 1, 1], [], []>} : vector<16x32xbf16>, vector<32x32xbf16>, vector<16x32xf32> -> vector<16x32xf32>
    %7 = arith.addf %3, %6 : vector<16x32xf32>
    %c0_6 = arith.constant 0 : index
    %c0_7 = arith.constant 0 : index
    %8 = vector.load %arg7[%c0_6, %c0_7] : memref<16x32xf32, #tpu.memory_space<vmem>>, vector<16x32xf32>
    tpu.vector_store %arg7[%c0_6, %c0_7], %7 {strides = array<i32>} : memref<16x32xf32, #tpu.memory_space<vmem>>, vector<16x32xf32>,
    %c0_i32_8 = arith.constant 0 : i32
    %9 = arith.cmpi eq, %arg2, %c0_i32_8 : i32
    %10 = arith.extui %9 : i1 to i32
    %c0_i32_9 = arith.constant 0 : i32
    %11 = arith.cmpi ne, %10, %c0_i32_9 : i32
    scf.if %11 {
      %c0_10 = arith.constant 0 : index
      %c0_11 = arith.constant 0 : index
      %12 = vector.load %arg7[%c0_10, %c0_11] : memref<16x32xf32, #tpu.memory_space<vmem>>, vector<16x32xf32>
      %c0_12 = arith.constant 0 : index
      %c0_13 = arith.constant 0 : index
      %13 = vector.load %arg5[%c0_12, %c0_13] : memref<1x32xf32, #tpu.memory_space<vmem>>, vector<1x32xf32>
      %14 = vector.broadcast %13 : vector<1x32xf32> to vector<16x32xf32>
      %15 = arith.addf %12, %14 : vector<16x32xf32>
      %16 = arith.truncf %15 : vector<16x32xf32> to vector<16x32xbf16>
      %c0_14 = arith.constant 0 : index
      %c0_15 = arith.constant 0 : index
      %17 = vector.load %arg6[%c0_14, %c0_15] : memref<16x32xbf16, #tpu.memory_space<vmem>>, vector<16x32xbf16>
      tpu.vector_store %arg6[%c0_14, %c0_15], %16 {strides = array<i32>} : memref<16x32xbf16, #tpu.memory_space<vmem>>, vector<16x32xbf16>,
    } else {
    }
    return
  }
  func.func @transform_0(%arg0: i32, %arg1: i32, %arg2: i32) -> (i32, i32) {
    %c0_i32 = arith.constant 0 : i32
    return %arg0, %arg2 : i32, i32
  }
  func.func @transform_1(%arg0: i32, %arg1: i32, %arg2: i32) -> (i32, i32) {
    %c0_i32 = arith.constant 0 : i32
    return %arg2, %arg1 : i32, i32
  }
  func.func @transform_2(%arg0: i32, %arg1: i32, %arg2: i32) -> (i32, i32) {
    %c0_i32 = arith.constant 0 : i32
    %c0_i32_0 = arith.constant 0 : i32
    return %c0_i32, %arg1 : i32, i32
  }
  func.func @transform_3(%arg0: i32, %arg1: i32, %arg2: i32) -> (i32, i32) {
    %c0_i32 = arith.constant 0 : i32
    return %arg0, %arg1 : i32, i32
  }
}

module attributes {stable_mosaic.version = 11 : i64} {
  func.func @_flash_attn_kernel(%arg0: i32, %arg1: i32, %arg2: i32, %arg3: memref<1x8x32xbf16, #tpu.memory_space<vmem>>, %arg4: memref<1x8x32xbf16, #tpu.memory_space<vmem>>, %arg5: memref<1x8x32xbf16, #tpu.memory_space<vmem>>, %arg6: memref<1x8x32xbf16, #tpu.memory_space<vmem>>, %arg7: memref<4x8x8xbf16, #tpu.memory_space<vmem>>, %arg8: memref<4x8x8xbf16, #tpu.memory_space<vmem>>, %arg9: memref<4x8x8xbf16, #tpu.memory_space<vmem>>, %arg10: memref<4x8x1xf32, #tpu.memory_space<vmem>>, %arg11: memref<4x8x1xf32, #tpu.memory_space<vmem>>, %arg12: memref<4x8x8xf32, #tpu.memory_space<vmem>>) attributes {dimension_semantics = [#tpu.dimension_semantics<parallel>, #tpu.dimension_semantics<parallel>, #tpu.dimension_semantics<arbitrary>], iteration_bounds = array<i64: 2, 1, 1>, scalar_prefetch = 0 : i64, scratch_operands = 6 : i64, tpu.core_type = #tpu.core_type<tc>, window_params = [{transform_indices = @transform_0, window_bounds = array<i64: 1, 8, 32>}, {transform_indices = @transform_1, window_bounds = array<i64: 1, 8, 32>}, {transform_indices = @transform_2, window_bounds = array<i64: 1, 8, 32>}, {transform_indices = @transform_3, window_bounds = array<i64: 1, 8, 32>}]} {
    %c0_i32 = arith.constant 0 : i32
    %0 = arith.cmpi eq, %arg2, %c0_i32 : i32
    %1 = arith.extui %0 : i1 to i32
    %c0_i32_0 = arith.constant 0 : i32
    %2 = arith.cmpi ne, %1, %c0_i32_0 : i32
    scf.if %2 {
      %cst = arith.constant 0xFF800000 : f32
      %43 = vector.broadcast %cst : f32 to vector<4x8x1xf32>
      %c0_31 = arith.constant 0 : index
      %c0_32 = arith.constant 0 : index
      %c0_33 = arith.constant 0 : index
      %44 = vector.load %arg10[%c0_31, %c0_32, %c0_33] : memref<4x8x1xf32, #tpu.memory_space<vmem>>, vector<4x8x1xf32>
      tpu.vector_store %arg10[%c0_31, %c0_32, %c0_33], %43 {strides = array<i32>} : memref<4x8x1xf32, #tpu.memory_space<vmem>>, vector<4x8x1xf32>,
      %cst_34 = arith.constant 0.000000e+00 : f32
      %45 = vector.broadcast %cst_34 : f32 to vector<4x8x1xf32>
      %c0_35 = arith.constant 0 : index
      %c0_36 = arith.constant 0 : index
      %c0_37 = arith.constant 0 : index
      %46 = vector.load %arg11[%c0_35, %c0_36, %c0_37] : memref<4x8x1xf32, #tpu.memory_space<vmem>>, vector<4x8x1xf32>
      tpu.vector_store %arg11[%c0_35, %c0_36, %c0_37], %45 {strides = array<i32>} : memref<4x8x1xf32, #tpu.memory_space<vmem>>, vector<4x8x1xf32>,
      %cst_38 = arith.constant 0.000000e+00 : f32
      %47 = vector.broadcast %cst_38 : f32 to vector<4x8x8xf32>
      %c0_39 = arith.constant 0 : index
      %c0_40 = arith.constant 0 : index
      %c0_41 = arith.constant 0 : index
      %48 = vector.load %arg12[%c0_39, %c0_40, %c0_41] : memref<4x8x8xf32, #tpu.memory_space<vmem>>, vector<4x8x8xf32>
      tpu.vector_store %arg12[%c0_39, %c0_40, %c0_41], %47 {strides = array<i32>} : memref<4x8x8xf32, #tpu.memory_space<vmem>>, vector<4x8x8xf32>,
      %c0_42 = arith.constant 0 : index
      %c0_43 = arith.constant 0 : index
      %c0_44 = arith.constant 0 : index
      %49 = vector.load %arg3[%c0_42, %c0_43, %c0_44] : memref<1x8x32xbf16, #tpu.memory_space<vmem>>, vector<1x8x32xbf16>
      %50 = vector.shape_cast %49 : vector<1x8x32xbf16> to vector<8x32xbf16>
      %51 = vector.extract_strided_slice %50 {offsets = [0, 0], sizes = [8, 8], strides = [1, 1]} : vector<8x32xbf16> to vector<8x8xbf16>
      %c0_45 = arith.constant 0 : index
      %c0_46 = arith.constant 0 : index
      %c0_47 = arith.constant 0 : index
      %52 = vector.load %arg7[%c0_45, %c0_46, %c0_47] : memref<4x8x8xbf16, #tpu.memory_space<vmem>>, vector<1x8x8xbf16>
      %53 = vector.shape_cast %52 : vector<1x8x8xbf16> to vector<8x8xbf16>
      %54 = vector.shape_cast %51 : vector<8x8xbf16> to vector<1x8x8xbf16>
      tpu.vector_store %arg7[%c0_45, %c0_46, %c0_47], %54 {strides = array<i32>} : memref<4x8x8xbf16, #tpu.memory_space<vmem>>, vector<1x8x8xbf16>,
      %55 = vector.extract_strided_slice %50 {offsets = [0, 8], sizes = [8, 8], strides = [1, 1]} : vector<8x32xbf16> to vector<8x8xbf16>
      %c1_48 = arith.constant 1 : index
      %c0_49 = arith.constant 0 : index
      %c0_50 = arith.constant 0 : index
      %56 = vector.load %arg7[%c1_48, %c0_49, %c0_50] : memref<4x8x8xbf16, #tpu.memory_space<vmem>>, vector<1x8x8xbf16>
      %57 = vector.shape_cast %56 : vector<1x8x8xbf16> to vector<8x8xbf16>
      %58 = vector.shape_cast %55 : vector<8x8xbf16> to vector<1x8x8xbf16>
      tpu.vector_store %arg7[%c1_48, %c0_49, %c0_50], %58 {strides = array<i32>} : memref<4x8x8xbf16, #tpu.memory_space<vmem>>, vector<1x8x8xbf16>,
      %59 = vector.extract_strided_slice %50 {offsets = [0, 16], sizes = [8, 8], strides = [1, 1]} : vector<8x32xbf16> to vector<8x8xbf16>
      %c2_51 = arith.constant 2 : index
      %c0_52 = arith.constant 0 : index
      %c0_53 = arith.constant 0 : index
      %60 = vector.load %arg7[%c2_51, %c0_52, %c0_53] : memref<4x8x8xbf16, #tpu.memory_space<vmem>>, vector<1x8x8xbf16>
      %61 = vector.shape_cast %60 : vector<1x8x8xbf16> to vector<8x8xbf16>
      %62 = vector.shape_cast %59 : vector<8x8xbf16> to vector<1x8x8xbf16>
      tpu.vector_store %arg7[%c2_51, %c0_52, %c0_53], %62 {strides = array<i32>} : memref<4x8x8xbf16, #tpu.memory_space<vmem>>, vector<1x8x8xbf16>,
      %63 = vector.extract_strided_slice %50 {offsets = [0, 24], sizes = [8, 8], strides = [1, 1]} : vector<8x32xbf16> to vector<8x8xbf16>
      %c3_54 = arith.constant 3 : index
      %c0_55 = arith.constant 0 : index
      %c0_56 = arith.constant 0 : index
      %64 = vector.load %arg7[%c3_54, %c0_55, %c0_56] : memref<4x8x8xbf16, #tpu.memory_space<vmem>>, vector<1x8x8xbf16>
      %65 = vector.shape_cast %64 : vector<1x8x8xbf16> to vector<8x8xbf16>
      %66 = vector.shape_cast %63 : vector<8x8xbf16> to vector<1x8x8xbf16>
      tpu.vector_store %arg7[%c3_54, %c0_55, %c0_56], %66 {strides = array<i32>} : memref<4x8x8xbf16, #tpu.memory_space<vmem>>, vector<1x8x8xbf16>,
    } else {
    }
    %c0 = arith.constant 0 : index
    %c0_1 = arith.constant 0 : index
    %c0_2 = arith.constant 0 : index
    %3 = vector.load %arg4[%c0, %c0_1, %c0_2] : memref<1x8x32xbf16, #tpu.memory_space<vmem>>, vector<1x8x32xbf16>
    %4 = vector.shape_cast %3 : vector<1x8x32xbf16> to vector<8x32xbf16>
    %c0_3 = arith.constant 0 : index
    %c0_4 = arith.constant 0 : index
    %c0_5 = arith.constant 0 : index
    %5 = vector.load %arg5[%c0_3, %c0_4, %c0_5] : memref<1x8x32xbf16, #tpu.memory_space<vmem>>, vector<1x8x32xbf16>
    %6 = vector.shape_cast %5 : vector<1x8x32xbf16> to vector<8x32xbf16>
    %7 = vector.extract_strided_slice %4 {offsets = [0, 0], sizes = [8, 8], strides = [1, 1]} : vector<8x32xbf16> to vector<8x8xbf16>
    %c0_6 = arith.constant 0 : index
    %c0_7 = arith.constant 0 : index
    %c0_8 = arith.constant 0 : index
    %8 = vector.load %arg8[%c0_6, %c0_7, %c0_8] : memref<4x8x8xbf16, #tpu.memory_space<vmem>>, vector<1x8x8xbf16>
    %9 = vector.shape_cast %8 : vector<1x8x8xbf16> to vector<8x8xbf16>
    %10 = vector.shape_cast %7 : vector<8x8xbf16> to vector<1x8x8xbf16>
    tpu.vector_store %arg8[%c0_6, %c0_7, %c0_8], %10 {strides = array<i32>} : memref<4x8x8xbf16, #tpu.memory_space<vmem>>, vector<1x8x8xbf16>,
    %11 = vector.extract_strided_slice %6 {offsets = [0, 0], sizes = [8, 8], strides = [1, 1]} : vector<8x32xbf16> to vector<8x8xbf16>
    %c0_9 = arith.constant 0 : index
    %c0_10 = arith.constant 0 : index
    %c0_11 = arith.constant 0 : index
    %12 = vector.load %arg9[%c0_9, %c0_10, %c0_11] : memref<4x8x8xbf16, #tpu.memory_space<vmem>>, vector<1x8x8xbf16>
    %13 = vector.shape_cast %12 : vector<1x8x8xbf16> to vector<8x8xbf16>
    %14 = vector.shape_cast %11 : vector<8x8xbf16> to vector<1x8x8xbf16>
    tpu.vector_store %arg9[%c0_9, %c0_10, %c0_11], %14 {strides = array<i32>} : memref<4x8x8xbf16, #tpu.memory_space<vmem>>, vector<1x8x8xbf16>,
    %15 = vector.extract_strided_slice %4 {offsets = [0, 8], sizes = [8, 8], strides = [1, 1]} : vector<8x32xbf16> to vector<8x8xbf16>
    %c1 = arith.constant 1 : index
    %c0_12 = arith.constant 0 : index
    %c0_13 = arith.constant 0 : index
    %16 = vector.load %arg8[%c1, %c0_12, %c0_13] : memref<4x8x8xbf16, #tpu.memory_space<vmem>>, vector<1x8x8xbf16>
    %17 = vector.shape_cast %16 : vector<1x8x8xbf16> to vector<8x8xbf16>
    %18 = vector.shape_cast %15 : vector<8x8xbf16> to vector<1x8x8xbf16>
    tpu.vector_store %arg8[%c1, %c0_12, %c0_13], %18 {strides = array<i32>} : memref<4x8x8xbf16, #tpu.memory_space<vmem>>, vector<1x8x8xbf16>,
    %19 = vector.extract_strided_slice %6 {offsets = [0, 8], sizes = [8, 8], strides = [1, 1]} : vector<8x32xbf16> to vector<8x8xbf16>
    %c1_14 = arith.constant 1 : index
    %c0_15 = arith.constant 0 : index
    %c0_16 = arith.constant 0 : index
    %20 = vector.load %arg9[%c1_14, %c0_15, %c0_16] : memref<4x8x8xbf16, #tpu.memory_space<vmem>>, vector<1x8x8xbf16>
    %21 = vector.shape_cast %20 : vector<1x8x8xbf16> to vector<8x8xbf16>
    %22 = vector.shape_cast %19 : vector<8x8xbf16> to vector<1x8x8xbf16>
    tpu.vector_store %arg9[%c1_14, %c0_15, %c0_16], %22 {strides = array<i32>} : memref<4x8x8xbf16, #tpu.memory_space<vmem>>, vector<1x8x8xbf16>,
    %23 = vector.extract_strided_slice %4 {offsets = [0, 16], sizes = [8, 8], strides = [1, 1]} : vector<8x32xbf16> to vector<8x8xbf16>
    %c2 = arith.constant 2 : index
    %c0_17 = arith.constant 0 : index
    %c0_18 = arith.constant 0 : index
    %24 = vector.load %arg8[%c2, %c0_17, %c0_18] : memref<4x8x8xbf16, #tpu.memory_space<vmem>>, vector<1x8x8xbf16>
    %25 = vector.shape_cast %24 : vector<1x8x8xbf16> to vector<8x8xbf16>
    %26 = vector.shape_cast %23 : vector<8x8xbf16> to vector<1x8x8xbf16>
    tpu.vector_store %arg8[%c2, %c0_17, %c0_18], %26 {strides = array<i32>} : memref<4x8x8xbf16, #tpu.memory_space<vmem>>, vector<1x8x8xbf16>,
    %27 = vector.extract_strided_slice %6 {offsets = [0, 16], sizes = [8, 8], strides = [1, 1]} : vector<8x32xbf16> to vector<8x8xbf16>
    %c2_19 = arith.constant 2 : index
    %c0_20 = arith.constant 0 : index
    %c0_21 = arith.constant 0 : index
    %28 = vector.load %arg9[%c2_19, %c0_20, %c0_21] : memref<4x8x8xbf16, #tpu.memory_space<vmem>>, vector<1x8x8xbf16>
    %29 = vector.shape_cast %28 : vector<1x8x8xbf16> to vector<8x8xbf16>
    %30 = vector.shape_cast %27 : vector<8x8xbf16> to vector<1x8x8xbf16>
    tpu.vector_store %arg9[%c2_19, %c0_20, %c0_21], %30 {strides = array<i32>} : memref<4x8x8xbf16, #tpu.memory_space<vmem>>, vector<1x8x8xbf16>,
    %31 = vector.extract_strided_slice %4 {offsets = [0, 24], sizes = [8, 8], strides = [1, 1]} : vector<8x32xbf16> to vector<8x8xbf16>
    %c3 = arith.constant 3 : index
    %c0_22 = arith.constant 0 : index
    %c0_23 = arith.constant 0 : index
    %32 = vector.load %arg8[%c3, %c0_22, %c0_23] : memref<4x8x8xbf16, #tpu.memory_space<vmem>>, vector<1x8x8xbf16>
    %33 = vector.shape_cast %32 : vector<1x8x8xbf16> to vector<8x8xbf16>
    %34 = vector.shape_cast %31 : vector<8x8xbf16> to vector<1x8x8xbf16>
    tpu.vector_store %arg8[%c3, %c0_22, %c0_23], %34 {strides = array<i32>} : memref<4x8x8xbf16, #tpu.memory_space<vmem>>, vector<1x8x8xbf16>,
    %35 = vector.extract_strided_slice %6 {offsets = [0, 24], sizes = [8, 8], strides = [1, 1]} : vector<8x32xbf16> to vector<8x8xbf16>
    %c3_24 = arith.constant 3 : index
    %c0_25 = arith.constant 0 : index
    %c0_26 = arith.constant 0 : index
    %36 = vector.load %arg9[%c3_24, %c0_25, %c0_26] : memref<4x8x8xbf16, #tpu.memory_space<vmem>>, vector<1x8x8xbf16>
    %37 = vector.shape_cast %36 : vector<1x8x8xbf16> to vector<8x8xbf16>
    %38 = vector.shape_cast %35 : vector<8x8xbf16> to vector<1x8x8xbf16>
    tpu.vector_store %arg9[%c3_24, %c0_25, %c0_26], %38 {strides = array<i32>} : memref<4x8x8xbf16, #tpu.memory_space<vmem>>, vector<1x8x8xbf16>,
    %c0_i32_27 = arith.constant 0 : i32
    %c4_i32 = arith.constant 4 : i32
    %39 = arith.addi %c0_i32_27, %c4_i32 : i32
    %c1_i32 = arith.constant 1 : i32
    scf.for %arg13 = %c0_i32_27 to %39 step %c1_i32  : i32 {
      %43 = arith.index_cast %arg13 : i32 to index
      %c0_31 = arith.constant 0 : index
      %c0_32 = arith.constant 0 : index
      %44 = vector.load %arg7[%43, %c0_31, %c0_32] : memref<4x8x8xbf16, #tpu.memory_space<vmem>>, vector<1x8x8xbf16>
      %45 = vector.shape_cast %44 : vector<1x8x8xbf16> to vector<8x8xbf16>
      %46 = arith.index_cast %arg13 : i32 to index
      %c0_33 = arith.constant 0 : index
      %c0_34 = arith.constant 0 : index
      %47 = vector.load %arg8[%46, %c0_33, %c0_34] : memref<4x8x8xbf16, #tpu.memory_space<vmem>>, vector<1x8x8xbf16>
      %48 = vector.shape_cast %47 : vector<1x8x8xbf16> to vector<8x8xbf16>
      %cst = arith.constant dense<0.000000e+00> : vector<8x8xf32>
      %49 = tpu.matmul %45, %48, %cst {dimension_numbers = #tpu.dot_dimension_numbers<[1], [1], [0], [0], [0, 0, 1, 0], [], []>} : vector<8x8xbf16>, vector<8x8xbf16>, vector<8x8xf32> -> vector<8x8xf32>
      %50 = arith.index_cast %arg13 : i32 to index
      %c0_35 = arith.constant 0 : index
      %c0_36 = arith.constant 0 : index
      %51 = vector.load %arg10[%50, %c0_35, %c0_36] : memref<4x8x1xf32, #tpu.memory_space<vmem>>, vector<1x8x1xf32>
      %52 = vector.shape_cast %51 : vector<1x8x1xf32> to vector<8x1xf32>
      %cst_37 = arith.constant dense<0xFF800000> : vector<8xf32>
      %53 = vector.multi_reduction <maximumf>, %49, %cst_37 [1] : vector<8x8xf32> to vector<8xf32>
      %54 = vector.shape_cast %53 : vector<8xf32> to vector<8x1xf32>
      %55 = arith.maximumf %52, %54 : vector<8x1xf32>
      %56 = arith.subf %52, %55 : vector<8x1xf32>
      %57 = math.exp %56 : vector<8x1xf32>
      %58 = vector.broadcast %55 : vector<8x1xf32> to vector<8x8xf32>
      %59 = arith.subf %49, %58 : vector<8x8xf32>
      %60 = math.exp %59 : vector<8x8xf32>
      %61 = arith.index_cast %arg13 : i32 to index
      %c0_38 = arith.constant 0 : index
      %c0_39 = arith.constant 0 : index
      %62 = vector.load %arg11[%61, %c0_38, %c0_39] : memref<4x8x1xf32, #tpu.memory_space<vmem>>, vector<1x8x1xf32>
      %63 = vector.shape_cast %62 : vector<1x8x1xf32> to vector<8x1xf32>
      %64 = arith.mulf %57, %63 : vector<8x1xf32>
      %cst_40 = arith.constant dense<0.000000e+00> : vector<8xf32>
      %65 = vector.multi_reduction <add>, %60, %cst_40 [1] : vector<8x8xf32> to vector<8xf32>
      %66 = vector.shape_cast %65 : vector<8xf32> to vector<8x1xf32>
      %67 = arith.addf %64, %66 : vector<8x1xf32>
      %68 = arith.index_cast %arg13 : i32 to index
      %c0_41 = arith.constant 0 : index
      %c0_42 = arith.constant 0 : index
      %69 = vector.load %arg11[%68, %c0_41, %c0_42] : memref<4x8x1xf32, #tpu.memory_space<vmem>>, vector<1x8x1xf32>
      %70 = vector.shape_cast %69 : vector<1x8x1xf32> to vector<8x1xf32>
      %71 = vector.shape_cast %67 : vector<8x1xf32> to vector<1x8x1xf32>
      tpu.vector_store %arg11[%68, %c0_41, %c0_42], %71 {strides = array<i32>} : memref<4x8x1xf32, #tpu.memory_space<vmem>>, vector<1x8x1xf32>,
      %72 = arith.index_cast %arg13 : i32 to index
      %c0_43 = arith.constant 0 : index
      %c0_44 = arith.constant 0 : index
      %73 = vector.load %arg12[%72, %c0_43, %c0_44] : memref<4x8x8xf32, #tpu.memory_space<vmem>>, vector<1x8x8xf32>
      %74 = vector.shape_cast %73 : vector<1x8x8xf32> to vector<8x8xf32>
      %75 = vector.broadcast %57 : vector<8x1xf32> to vector<8x8xf32>
      %76 = arith.mulf %75, %74 : vector<8x8xf32>
      %77 = arith.truncf %60 : vector<8x8xf32> to vector<8x8xbf16>
      %78 = arith.index_cast %arg13 : i32 to index
      %c0_45 = arith.constant 0 : index
      %c0_46 = arith.constant 0 : index
      %79 = vector.load %arg9[%78, %c0_45, %c0_46] : memref<4x8x8xbf16, #tpu.memory_space<vmem>>, vector<1x8x8xbf16>
      %80 = vector.shape_cast %79 : vector<1x8x8xbf16> to vector<8x8xbf16>
      %cst_47 = arith.constant dense<0.000000e+00> : vector<8x8xf32>
      %81 = tpu.matmul %77, %80, %cst_47 {dimension_numbers = #tpu.dot_dimension_numbers<[1], [0], [0], [1], [0, 0, 1, 1], [], []>} : vector<8x8xbf16>, vector<8x8xbf16>, vector<8x8xf32> -> vector<8x8xf32>
      %82 = arith.addf %76, %81 : vector<8x8xf32>
      %83 = arith.index_cast %arg13 : i32 to index
      %c0_48 = arith.constant 0 : index
      %c0_49 = arith.constant 0 : index
      %84 = vector.load %arg12[%83, %c0_48, %c0_49] : memref<4x8x8xf32, #tpu.memory_space<vmem>>, vector<1x8x8xf32>
      %85 = vector.shape_cast %84 : vector<1x8x8xf32> to vector<8x8xf32>
      %86 = vector.shape_cast %82 : vector<8x8xf32> to vector<1x8x8xf32>
      tpu.vector_store %arg12[%83, %c0_48, %c0_49], %86 {strides = array<i32>} : memref<4x8x8xf32, #tpu.memory_space<vmem>>, vector<1x8x8xf32>,
      %87 = arith.index_cast %arg13 : i32 to index
      %c0_50 = arith.constant 0 : index
      %c0_51 = arith.constant 0 : index
      %88 = vector.load %arg10[%87, %c0_50, %c0_51] : memref<4x8x1xf32, #tpu.memory_space<vmem>>, vector<1x8x1xf32>
      %89 = vector.shape_cast %88 : vector<1x8x1xf32> to vector<8x1xf32>
      %90 = vector.shape_cast %55 : vector<8x1xf32> to vector<1x8x1xf32>
      tpu.vector_store %arg10[%87, %c0_50, %c0_51], %90 {strides = array<i32>} : memref<4x8x1xf32, #tpu.memory_space<vmem>>, vector<1x8x1xf32>,
    }
    %c4_i32_28 = arith.constant 4 : i32
    %c0_i32_29 = arith.constant 0 : i32
    %40 = arith.cmpi eq, %arg2, %c0_i32_29 : i32
    %41 = arith.extui %40 : i1 to i32
    %c0_i32_30 = arith.constant 0 : i32
    %42 = arith.cmpi ne, %41, %c0_i32_30 : i32
    scf.if %42 {
      %c0_31 = arith.constant 0 : index
      %c0_32 = arith.constant 0 : index
      %c0_33 = arith.constant 0 : index
      %43 = vector.load %arg12[%c0_31, %c0_32, %c0_33] : memref<4x8x8xf32, #tpu.memory_space<vmem>>, vector<1x8x8xf32>
      %44 = vector.shape_cast %43 : vector<1x8x8xf32> to vector<8x8xf32>
      %c0_34 = arith.constant 0 : index
      %c0_35 = arith.constant 0 : index
      %c0_36 = arith.constant 0 : index
      %45 = vector.load %arg11[%c0_34, %c0_35, %c0_36] : memref<4x8x1xf32, #tpu.memory_space<vmem>>, vector<1x8x1xf32>
      %46 = vector.shape_cast %45 : vector<1x8x1xf32> to vector<8x1xf32>
      %47 = vector.broadcast %46 : vector<8x1xf32> to vector<8x8xf32>
      %48 = arith.divf %44, %47 : vector<8x8xf32>
      %49 = arith.truncf %48 : vector<8x8xf32> to vector<8x8xbf16>
      %c0_37 = arith.constant 0 : index
      %c0_38 = arith.constant 0 : index
      %c0_39 = arith.constant 0 : index
      %50 = vector.load %arg6[%c0_37, %c0_38, %c0_39] : memref<1x8x32xbf16, #tpu.memory_space<vmem>>, vector<1x8x8xbf16>
      %51 = vector.shape_cast %50 : vector<1x8x8xbf16> to vector<8x8xbf16>
      %52 = vector.shape_cast %49 : vector<8x8xbf16> to vector<1x8x8xbf16>
      tpu.vector_store %arg6[%c0_37, %c0_38, %c0_39], %52 {strides = array<i32>} : memref<1x8x32xbf16, #tpu.memory_space<vmem>>, vector<1x8x8xbf16>,
      %c1_40 = arith.constant 1 : index
      %c0_41 = arith.constant 0 : index
      %c0_42 = arith.constant 0 : index
      %53 = vector.load %arg12[%c1_40, %c0_41, %c0_42] : memref<4x8x8xf32, #tpu.memory_space<vmem>>, vector<1x8x8xf32>
      %54 = vector.shape_cast %53 : vector<1x8x8xf32> to vector<8x8xf32>
      %c1_43 = arith.constant 1 : index
      %c0_44 = arith.constant 0 : index
      %c0_45 = arith.constant 0 : index
      %55 = vector.load %arg11[%c1_43, %c0_44, %c0_45] : memref<4x8x1xf32, #tpu.memory_space<vmem>>, vector<1x8x1xf32>
      %56 = vector.shape_cast %55 : vector<1x8x1xf32> to vector<8x1xf32>
      %57 = vector.broadcast %56 : vector<8x1xf32> to vector<8x8xf32>
      %58 = arith.divf %54, %57 : vector<8x8xf32>
      %59 = arith.truncf %58 : vector<8x8xf32> to vector<8x8xbf16>
      %c0_46 = arith.constant 0 : index
      %c0_47 = arith.constant 0 : index
      %c8 = arith.constant 8 : index
      %60 = vector.load %arg6[%c0_46, %c0_47, %c8] : memref<1x8x32xbf16, #tpu.memory_space<vmem>>, vector<1x8x8xbf16>
      %61 = vector.shape_cast %60 : vector<1x8x8xbf16> to vector<8x8xbf16>
      %62 = vector.shape_cast %59 : vector<8x8xbf16> to vector<1x8x8xbf16>
      tpu.vector_store %arg6[%c0_46, %c0_47, %c8], %62 {strides = array<i32>} : memref<1x8x32xbf16, #tpu.memory_space<vmem>>, vector<1x8x8xbf16>,
      %c2_48 = arith.constant 2 : index
      %c0_49 = arith.constant 0 : index
      %c0_50 = arith.constant 0 : index
      %63 = vector.load %arg12[%c2_48, %c0_49, %c0_50] : memref<4x8x8xf32, #tpu.memory_space<vmem>>, vector<1x8x8xf32>
      %64 = vector.shape_cast %63 : vector<1x8x8xf32> to vector<8x8xf32>
      %c2_51 = arith.constant 2 : index
      %c0_52 = arith.constant 0 : index
      %c0_53 = arith.constant 0 : index
      %65 = vector.load %arg11[%c2_51, %c0_52, %c0_53] : memref<4x8x1xf32, #tpu.memory_space<vmem>>, vector<1x8x1xf32>
      %66 = vector.shape_cast %65 : vector<1x8x1xf32> to vector<8x1xf32>
      %67 = vector.broadcast %66 : vector<8x1xf32> to vector<8x8xf32>
      %68 = arith.divf %64, %67 : vector<8x8xf32>
      %69 = arith.truncf %68 : vector<8x8xf32> to vector<8x8xbf16>
      %c0_54 = arith.constant 0 : index
      %c0_55 = arith.constant 0 : index
      %c16 = arith.constant 16 : index
      %70 = vector.load %arg6[%c0_54, %c0_55, %c16] : memref<1x8x32xbf16, #tpu.memory_space<vmem>>, vector<1x8x8xbf16>
      %71 = vector.shape_cast %70 : vector<1x8x8xbf16> to vector<8x8xbf16>
      %72 = vector.shape_cast %69 : vector<8x8xbf16> to vector<1x8x8xbf16>
      tpu.vector_store %arg6[%c0_54, %c0_55, %c16], %72 {strides = array<i32>} : memref<1x8x32xbf16, #tpu.memory_space<vmem>>, vector<1x8x8xbf16>,
      %c3_56 = arith.constant 3 : index
      %c0_57 = arith.constant 0 : index
      %c0_58 = arith.constant 0 : index
      %73 = vector.load %arg12[%c3_56, %c0_57, %c0_58] : memref<4x8x8xf32, #tpu.memory_space<vmem>>, vector<1x8x8xf32>
      %74 = vector.shape_cast %73 : vector<1x8x8xf32> to vector<8x8xf32>
      %c3_59 = arith.constant 3 : index
      %c0_60 = arith.constant 0 : index
      %c0_61 = arith.constant 0 : index
      %75 = vector.load %arg11[%c3_59, %c0_60, %c0_61] : memref<4x8x1xf32, #tpu.memory_space<vmem>>, vector<1x8x1xf32>
      %76 = vector.shape_cast %75 : vector<1x8x1xf32> to vector<8x1xf32>
      %77 = vector.broadcast %76 : vector<8x1xf32> to vector<8x8xf32>
      %78 = arith.divf %74, %77 : vector<8x8xf32>
      %79 = arith.truncf %78 : vector<8x8xf32> to vector<8x8xbf16>
      %c0_62 = arith.constant 0 : index
      %c0_63 = arith.constant 0 : index
      %c24 = arith.constant 24 : index
      %80 = vector.load %arg6[%c0_62, %c0_63, %c24] : memref<1x8x32xbf16, #tpu.memory_space<vmem>>, vector<1x8x8xbf16>
      %81 = vector.shape_cast %80 : vector<1x8x8xbf16> to vector<8x8xbf16>
      %82 = vector.shape_cast %79 : vector<8x8xbf16> to vector<1x8x8xbf16>
      tpu.vector_store %arg6[%c0_62, %c0_63, %c24], %82 {strides = array<i32>} : memref<1x8x32xbf16, #tpu.memory_space<vmem>>, vector<1x8x8xbf16>,
    } else {
    }
    return
  }
  func.func @transform_0(%arg0: i32, %arg1: i32, %arg2: i32) -> (i32, i32, i32) {
    %c0_i32 = arith.constant 0 : i32
    %c0_i32_0 = arith.constant 0 : i32
    return %arg0, %arg1, %c0_i32 : i32, i32, i32
  }
  func.func @transform_1(%arg0: i32, %arg1: i32, %arg2: i32) -> (i32, i32, i32) {
    %c0_i32 = arith.constant 0 : i32
    %c0_i32_0 = arith.constant 0 : i32
    return %arg0, %arg2, %c0_i32 : i32, i32, i32
  }
  func.func @transform_2(%arg0: i32, %arg1: i32, %arg2: i32) -> (i32, i32, i32) {
    %c0_i32 = arith.constant 0 : i32
    %c0_i32_0 = arith.constant 0 : i32
    return %arg0, %arg2, %c0_i32 : i32, i32, i32
  }
  func.func @transform_3(%arg0: i32, %arg1: i32, %arg2: i32) -> (i32, i32, i32) {
    %c0_i32 = arith.constant 0 : i32
    %c0_i32_0 = arith.constant 0 : i32
    return %arg0, %arg1, %c0_i32 : i32, i32, i32
  }
}

module attributes {stable_mosaic.version = 11 : i64} {
  func.func @_matmul_kernel(%arg0: i32, %arg1: i32, %arg2: i32, %arg3: memref<16x32xbf16, #tpu.memory_space<vmem>>, %arg4: memref<32x128xbf16, #tpu.memory_space<vmem>>, %arg5: memref<1x128xf32, #tpu.memory_space<vmem>>, %arg6: memref<16x128xf32, #tpu.memory_space<vmem>>, %arg7: memref<16x128xf32, #tpu.memory_space<vmem>>) attributes {dimension_semantics = [#tpu.dimension_semantics<parallel>, #tpu.dimension_semantics<parallel>, #tpu.dimension_semantics<arbitrary>], iteration_bounds = array<i64: 1, 1, 1>, scalar_prefetch = 0 : i64, scratch_operands = 1 : i64, tpu.core_type = #tpu.core_type<tc>, window_params = [{transform_indices = @transform_0, window_bounds = array<i64: 16, 32>}, {transform_indices = @transform_1, window_bounds = array<i64: 32, 128>}, {transform_indices = @transform_2, window_bounds = array<i64: 1, 128>}, {transform_indices = @transform_3, window_bounds = array<i64: 16, 128>}]} {
    %c0_i32 = arith.constant 0 : i32
    %0 = arith.cmpi eq, %arg2, %c0_i32 : i32
    %1 = arith.extui %0 : i1 to i32
    %c0_i32_0 = arith.constant 0 : i32
    %2 = arith.cmpi ne, %1, %c0_i32_0 : i32
    scf.if %2 {
      %cst_10 = arith.constant 0.000000e+00 : f32
      %12 = vector.broadcast %cst_10 : f32 to vector<16x128xf32>
      %c0_11 = arith.constant 0 : index
      %c0_12 = arith.constant 0 : index
      %13 = vector.load %arg7[%c0_11, %c0_12] : memref<16x128xf32, #tpu.memory_space<vmem>>, vector<16x128xf32>
      tpu.vector_store %arg7[%c0_11, %c0_12], %12 {strides = array<i32>} : memref<16x128xf32, #tpu.memory_space<vmem>>, vector<16x128xf32>,
    } else {
    }
    %c0 = arith.constant 0 : index
    %c0_1 = arith.constant 0 : index
    %3 = vector.load %arg7[%c0, %c0_1] : memref<16x128xf32, #tpu.memory_space<vmem>>, vector<16x128xf32>
    %c0_2 = arith.constant 0 : index
    %c0_3 = arith.constant 0 : index
    %4 = vector.load %arg3[%c0_2, %c0_3] : memref<16x32xbf16, #tpu.memory_space<vmem>>, vector<16x32xbf16>
    %c0_4 = arith.constant 0 : index
    %c0_5 = arith.constant 0 : index
    %5 = vector.load %arg4[%c0_4, %c0_5] : memref<32x128xbf16, #tpu.memory_space<vmem>>, vector<32x128xbf16>
    %cst = arith.constant dense<0.000000e+00> : vector<16x128xf32>
    %6 = tpu.matmul %4, %5, %cst {dimension_numbers = #tpu.dot_dimension_numbers<[1], [0], [0], [1], [0, 0, 1, 1], [], []>} : vector<16x32xbf16>, vector<32x128xbf16>, vector<16x128xf32> -> vector<16x128xf32>
    %7 = arith.addf %3, %6 : vector<16x128xf32>
    %c0_6 = arith.constant 0 : index
    %c0_7 = arith.constant 0 : index
    %8 = vector.load %arg7[%c0_6, %c0_7] : memref<16x128xf32, #tpu.memory_space<vmem>>, vector<16x128xf32>
    tpu.vector_store %arg7[%c0_6, %c0_7], %7 {strides = array<i32>} : memref<16x128xf32, #tpu.memory_space<vmem>>, vector<16x128xf32>,
    %c0_i32_8 = arith.constant 0 : i32
    %9 = arith.cmpi eq, %arg2, %c0_i32_8 : i32
    %10 = arith.extui %9 : i1 to i32
    %c0_i32_9 = arith.constant 0 : i32
    %11 = arith.cmpi ne, %10, %c0_i32_9 : i32
    scf.if %11 {
      %c0_10 = arith.constant 0 : index
      %c0_11 = arith.constant 0 : index
      %12 = vector.load %arg7[%c0_10, %c0_11] : memref<16x128xf32, #tpu.memory_space<vmem>>, vector<16x128xf32>
      %c0_12 = arith.constant 0 : index
      %c0_13 = arith.constant 0 : index
      %13 = vector.load %arg5[%c0_12, %c0_13] : memref<1x128xf32, #tpu.memory_space<vmem>>, vector<1x128xf32>
      %14 = vector.broadcast %13 : vector<1x128xf32> to vector<16x128xf32>
      %15 = arith.addf %12, %14 : vector<16x128xf32>
      %c0_14 = arith.constant 0 : index
      %c0_15 = arith.constant 0 : index
      %16 = vector.load %arg6[%c0_14, %c0_15] : memref<16x128xf32, #tpu.memory_space<vmem>>, vector<16x128xf32>
      tpu.vector_store %arg6[%c0_14, %c0_15], %15 {strides = array<i32>} : memref<16x128xf32, #tpu.memory_space<vmem>>, vector<16x128xf32>,
    } else {
    }
    return
  }
  func.func @transform_0(%arg0: i32, %arg1: i32, %arg2: i32) -> (i32, i32) {
    %c0_i32 = arith.constant 0 : i32
    return %arg0, %arg2 : i32, i32
  }
  func.func @transform_1(%arg0: i32, %arg1: i32, %arg2: i32) -> (i32, i32) {
    %c0_i32 = arith.constant 0 : i32
    return %arg2, %arg1 : i32, i32
  }
  func.func @transform_2(%arg0: i32, %arg1: i32, %arg2: i32) -> (i32, i32) {
    %c0_i32 = arith.constant 0 : i32
    %c0_i32_0 = arith.constant 0 : i32
    return %c0_i32, %arg1 : i32, i32
  }
  func.func @transform_3(%arg0: i32, %arg1: i32, %arg2: i32) -> (i32, i32) {
    %c0_i32 = arith.constant 0 : i32
    return %arg0, %arg1 : i32, i32
  }
}

</mosaic_0001>

<llo_original>
// kernel: transformer_forward.27
$region0: #{transformer_forward.27}
  #allocation0 [shape = 'u32[]', space=smem, size = 0x4, offset = 0x4, fixed_abs, tag = 'smem constant byte address 0x4 - core index']
  #allocation1 [shape = 'u32[144,128]{1,0:T(1,128)}', space=vmem, size = 0x12000, scoped, tag = 'internal scratch']
  #allocation2 [shape = 'f32[16,32]{1,0:T(8,128)}', space=vmem, size = 0x2000, scoped, tag = 'scratch operand']
  %s0 = inlined_call_operand.vmem [shape: bf16[16,32], index: 0, kind: input, shape index: {}]
  %s1 = inlined_call_operand.vmem [shape: bf16[32,32], index: 1, kind: input, shape index: {}]
  %s2 = inlined_call_operand.vmem [shape: f32[1,32], index: 2, kind: input, shape index: {}]
  %s3 = inlined_call_operand.vmem [shape: bf16[16,32], index: 3, kind: input, shape index: {}]
  %s4 = inlined_call_operand.vmem [shape: f32[1,32], index: 4, kind: input, shape index: {}]
  %s5 = inlined_call_operand.vmem [shape: f32[1,32], index: 5, kind: input, shape index: {}]
  %s6 = inlined_call_operand.vmem [shape: bf16[16,32], index: 6, kind: output, shape index: {}]
  %s7 = sld [smem:[#allocation0]]
  $region42: #{transformer_forward.27} parent=0
    _
  %s9 = ssub.s32 1, %s7
  %s10 = scalar_select 0, %s9, %s7
  // Predicated region
  $region2: #{transformer_forward.27} parent=0 // pred_check
    _
  $region3: #{transformer_forward.27} parent=0 // pred_check_branch
    %12 = sbr.rel (0) target = $region5
  $region4: #{transformer_forward.27} parent=0 // pred_region
    _
  $region5: #{transformer_forward.27} parent=0 // pred_fallthru
    _
  // Predicated region
  $region6: #{transformer_forward.27} parent=0 // pred_check
    _
  $region7: #{transformer_forward.27} parent=0 // pred_check_branch
    %14 = sbr.rel (0) target = $region9
  $region8: #{transformer_forward.27} parent=0 // pred_region
    _
  $region9: #{transformer_forward.27} parent=0 // pred_fallthru
    _
  // Predicated region
  $region10: #{transformer_forward.27} parent=0 // pred_check
    _
  $region11: #{transformer_forward.27} parent=0 // pred_check_branch
    %16 = sbr.rel (0) target = $region13
  $region12: #{transformer_forward.27} parent=0 // pred_region
    _
  $region13: #{transformer_forward.27} parent=0 // pred_fallthru
    _
  // Predicated region
  $region14: #{transformer_forward.27} parent=0 // pred_check
    _
  $region15: #{transformer_forward.27} parent=0 // pred_check_branch
    %18 = sbr.rel (0) target = $region17
  $region16: #{transformer_forward.27} parent=0 // pred_region
    _
  $region17: #{transformer_forward.27} parent=0 // pred_fallthru
    _
  // Predicated region
  $region18: #{transformer_forward.27} parent=0 // pred_check
    _
  $region19: #{transformer_forward.27} parent=0 // pred_check_branch
    %20 = sbr.rel (0) target = $region21
  $region20: #{transformer_forward.27} parent=0 // pred_region
    _
  $region21: #{transformer_forward.27} parent=0 // pred_fallthru
    _
  // Predicated region
  $region22: #{transformer_forward.27} parent=0 // pred_check
    _
  $region23: #{transformer_forward.27} parent=0 // pred_check_branch
    %22 = sbr.rel (0) target = $region25
  $region24: #{transformer_forward.27} parent=0 // pred_region
    _
  $region25: #{transformer_forward.27} parent=0 // pred_fallthru
    _
  %p24 = scmp.eq.s32.totalorder 0, 0
  // Predicated region
  $region26: #{transformer_forward.27} parent=0 // pred_check
    %p25 = pneg %p24
  $region27: #{transformer_forward.27} parent=0 // pred_check_branch
    %27 = sbr.rel (%p25) target = $region29
  $region28: #{transformer_forward.27} parent=0 // pred_region
    %vm28 = vcmask 261120
    %29 = vst.msk [vmem:[#allocation2] sm:$0xff] %vm28, 0.0
    %30 = vst.msk [vmem:[#allocation2 + $0x8] sm:$0xff] %vm28, 0.0
  $region29: #{transformer_forward.27} parent=0 // pred_fallthru
    _
  %v31 = vld [vmem:[#allocation2] sm:$0xff]
  %v32 = vld [vmem:[#allocation2 + $0x8] sm:$0xff]
  %v33 = vld [vmem:[%s0] sm:$0xf]
  %v34 = vld [vmem:[%s0 + $0x4] sm:$0xf]
  %v35 = vld [vmem:[%s1] sm:$0xf]
  %v36 = vld [vmem:[%s1 + $0x4] sm:$0xf]
  %v37 = vld [vmem:[%s1 + $0x8] sm:$0xf]
  %v38 = vld [vmem:[%s1 + $0xc] sm:$0xf]
  %v41 = vunpack.c.l.b16 %v33
  %v42 = vunpack.c.l.b16 %v34
  %v43 = vpack.c.b16 %v42, %v41
  %v48 = vunpack.c.l.b16 %v35
  %v49 = vunpack.c.l.b16 %v36
  %v50 = vunpack.c.l.b16 %v37
  %v51 = vunpack.c.l.b16 %v38
  %v52 = vpack.c.b16 %v49, %v48
  %v53 = vpack.c.b16 %v51, %v50
  %vm56 = vcmask 261120
  %v58 = vsel %vm56, %v43, 0
  %60 = vmatprep.subr.bf16.mxu0 0
  %61 = vmatpush1.bf16.msra.mxu0 %v52
  %62 = vmatprep.subr.bf16.mxu0 0
  %63 = vmatpush1.bf16.msra.mxu0 %v53
  %64 = vmatprep.subr.bf16.mxu0 0
  %65 = vmatpush1.bf16.msra.mxu0 0
  %66 = vmatprep.subr.bf16.mxu0 0
  %67 = vmatpush1.bf16.msra.mxu0 0
  %68 = vmatprep.subr.bf16.mxu0 0
  %69 = vmatpush1.bf16.msra.mxu0 0
  %70 = vmatprep.subr.bf16.mxu0 0
  %71 = vmatpush1.bf16.msra.mxu0 0
  %72 = vmatprep.subr.bf16.mxu0 0
  %73 = vmatpush1.bf16.msra.mxu0 0
  %74 = vmatprep.subr.bf16.mxu0 0
  %75 = vmatpush1.bf16.msra.mxu0 0
  %76 = vmatprep.subr.bf16.mxu0 0
  %77 = vmatpush1.bf16.msra.mxu0 0
  %78 = vmatprep.subr.bf16.mxu0 0
  %79 = vmatpush1.bf16.msra.mxu0 0
  %80 = vmatprep.subr.bf16.mxu0 0
  %81 = vmatpush1.bf16.msra.mxu0 0
  %82 = vmatprep.subr.bf16.mxu0 0
  %83 = vmatpush1.bf16.msra.mxu0 0
  %84 = vmatprep.subr.bf16.mxu0 0
  %85 = vmatpush1.bf16.msra.mxu0 0
  %86 = vmatprep.subr.bf16.mxu0 0
  %87 = vmatpush1.bf16.msra.mxu0 0
  %88 = vmatprep.subr.bf16.mxu0 0
  %89 = vmatpush1.bf16.msra.mxu0 0
  %90 = vmatprep.subr.bf16.mxu0 0
  %91 = vmatpush1.bf16.msra.mxu0 0
  %92 = vmatprep.mubr.bf16.mxu0 0
  %93 = vmatmul.mubr.bf16.gmra.mrb[0].mxu0 %v58
  %v94 = vpop.f32.mrb[0].mxu0
  %v95 = vadd.f32 0.0, %v94
  %v96 = vpop.f32.mrb[0].mxu0
  %v97 = vpop.f32.mrb[0].mxu0
  %v98 = vadd.f32 0.0, %v97
  %v99 = vpop.f32.mrb[0].mxu0
  %100 = vdwg.mxu0
  %v101 = vadd.f32 %v31, %v95
  %v102 = vadd.f32 %v32, %v98
  %103 = vst.msk [vmem:[#allocation2] sm:$0xff] %vm56, %v101
  %104 = vst.msk [vmem:[#allocation2 + $0x8] sm:$0xff] %vm56, %v102
  // Predicated region
  $region30: #{transformer_forward.27} parent=0 // pred_check
    %p105 = pneg %p24
  $region31: #{transformer_forward.27} parent=0 // pred_check_branch
    %107 = sbr.rel (%p105) target = $region33
  $region32: #{transformer_forward.27} parent=0 // pred_region
    %v108 = vld [vmem:[#allocation2] sm:$0xff]
    %v109 = vld [vmem:[#allocation2 + $0x8] sm:$0xff]
    %v110 = vld [vmem:[%s2] sm:$0x1]
    %v112 = vlaneseq
    %v113 = vshrl.u32 %v112, 7
    %v114 = vsub.s32 0, %v113
    %v115 = vrot.slane %v110, %v114
    %v117 = vadd.f32 %v108, %v115
    %v118 = vadd.f32 %v109, %v115
    %v119 = vld [vmem:[%s3] sm:$0xf]
    %v120 = vld [vmem:[%s3 + $0x4] sm:$0xf]
    %v121 = vunpack.c.l.bf16 %v119
    %v122 = vunpack.c.l.bf16 %v120
    %v123 = vadd.f32 %v117, %v121
    %v124 = vadd.f32 %v118, %v122
    %v125 = vsel %vm56, %v123, 0.0
    %126 = vadd.xlane.f32.xlu0 %v125
    %v127 = vpop.xlane.xlu0 %126
    %v128 = vsel %vm56, %v124, 0.0
    %129 = vadd.xlane.f32.xlu0 %v128
    %v130 = vpop.xlane.xlu0 %129
    %v131 = vrcp.pop 32.0
    %v132 = vmul.f32 %v127, %v131
    %v133 = vmul.f32 %v130, %v131
    %v134 = vsub.f32 %v123, %v132
    %v135 = vsub.f32 %v124, %v133
    %v136 = vmul.f32 %v134, %v134
    %v137 = vmul.f32 %v135, %v135
    %v138 = vsel %vm56, %v136, 0.0
    %139 = vadd.xlane.f32.xlu0 %v138
    %v140 = vpop.xlane.xlu0 %139
    %v141 = vsel %vm56, %v137, 0.0
    %142 = vadd.xlane.f32.xlu0 %v141
    %v143 = vpop.xlane.xlu0 %142
    %v144 = vmul.f32 %v140, %v131
    %v145 = vmul.f32 %v143, %v131
    %v146 = vadd.f32 %v144, 1e-05
    %v147 = vadd.f32 %v145, 1e-05
    %v148 = vrsqrt.pop %v146
    %v149 = vrsqrt.pop %v147
    %v150 = vmul.f32 %v134, %v148
    %v151 = vmul.f32 %v135, %v149
    %v152 = vld [vmem:[%s4] sm:$0x1]
    %v154 = vlaneseq
    %v155 = vshrl.u32 %v154, 7
    %v156 = vsub.s32 0, %v155
    %v157 = vrot.slane %v152, %v156
    %v159 = vmul.f32 %v150, %v157
    %v160 = vmul.f32 %v151, %v157
    %v161 = vld [vmem:[%s5] sm:$0x1]
    %v163 = vlaneseq
    %v164 = vshrl.u32 %v163, 7
    %v165 = vsub.s32 0, %v164
    %v166 = vrot.slane %v161, %v165
    %v168 = vadd.f32 %v159, %v166
    %v169 = vadd.f32 %v160, %v166
    %v170 = vpack.c.bf16 %v169, %v168
    %v172 = vunpack.c.l.b16 %v170
    %v173 = vunpack.c.h.b16 %v170
    %v174 = vpack.c.b16 %v172, %v172
    %v175 = vpack.c.b16 %v173, %v173
    %vm178 = vcmask 257024
    %179 = vst.msk [vmem:[%s6] sm:$0xf] %vm178, %v174
    %180 = vst.msk [vmem:[%s6 + $0x4] sm:$0xf] %vm178, %v175
  $region33: #{transformer_forward.27} parent=0 // pred_fallthru
    _
  // Predicated region
  $region34: #{transformer_forward.27} parent=0 // pred_check
    _
  $region35: #{transformer_forward.27} parent=0 // pred_check_branch
    %182 = sbr.rel (0) target = $region37
  $region36: #{transformer_forward.27} parent=0 // pred_region
    _
  $region37: #{transformer_forward.27} parent=0 // pred_fallthru
    _
  // Predicated region
  $region38: #{transformer_forward.27} parent=0 // pred_check
    _
  $region39: #{transformer_forward.27} parent=0 // pred_check_branch
    %184 = sbr.rel (0) target = $region41
  $region40: #{transformer_forward.27} parent=0 // pred_region
    _
  $region41: #{transformer_forward.27} parent=0 // pred_fallthru
    _

// kernel: transformer_forward.28
$region0: #{transformer_forward.28}
  #allocation0 [shape = 'u32[]', space=smem, size = 0x4, offset = 0x4, fixed_abs, tag = 'smem constant byte address 0x4 - core index']
  #allocation1 [shape = 'u32[144,128]{1,0:T(1,128)}', space=vmem, size = 0x12000, scoped, tag = 'internal scratch']
  #allocation2 [shape = 'f32[16,32]{1,0:T(8,128)}', space=vmem, size = 0x2000, scoped, tag = 'scratch operand']
  %s0 = inlined_call_operand.vmem [shape: bf16[16,32], index: 0, kind: input, shape index: {}]
  %s1 = inlined_call_operand.vmem [shape: bf16[32,64], index: 1, kind: input, shape index: {}]
  %s2 = inlined_call_operand.vmem [shape: f32[1,64], index: 2, kind: input, shape index: {}]
  %s3 = inlined_call_operand.vmem [shape: bf16[64,32], index: 3, kind: input, shape index: {}]
  %s4 = inlined_call_operand.vmem [shape: f32[1,32], index: 4, kind: input, shape index: {}]
  %s5 = inlined_call_operand.vmem [shape: f32[1,32], index: 5, kind: input, shape index: {}]
  %s6 = inlined_call_operand.vmem [shape: f32[1,32], index: 6, kind: input, shape index: {}]
  %s7 = inlined_call_operand.vmem [shape: bf16[16,32], index: 7, kind: output, shape index: {}]
  %s8 = sld [smem:[#allocation0]]
  $region46: #{transformer_forward.28} parent=0
    _
  %s10 = ssub.s32 1, %s8
  %s11 = scalar_select 0, %s10, %s8
  // Predicated region
  $region2: #{transformer_forward.28} parent=0 // pred_check
    _
  $region3: #{transformer_forward.28} parent=0 // pred_check_branch
    %13 = sbr.rel (0) target = $region5
  $region4: #{transformer_forward.28} parent=0 // pred_region
    _
  $region5: #{transformer_forward.28} parent=0 // pred_fallthru
    _
  // Predicated region
  $region6: #{transformer_forward.28} parent=0 // pred_check
    _
  $region7: #{transformer_forward.28} parent=0 // pred_check_branch
    %15 = sbr.rel (0) target = $region9
  $region8: #{transformer_forward.28} parent=0 // pred_region
    _
  $region9: #{transformer_forward.28} parent=0 // pred_fallthru
    _
  // Predicated region
  $region10: #{transformer_forward.28} parent=0 // pred_check
    _
  $region11: #{transformer_forward.28} parent=0 // pred_check_branch
    %17 = sbr.rel (0) target = $region13
  $region12: #{transformer_forward.28} parent=0 // pred_region
    _
  $region13: #{transformer_forward.28} parent=0 // pred_fallthru
    _
  // Predicated region
  $region14: #{transformer_forward.28} parent=0 // pred_check
    _
  $region15: #{transformer_forward.28} parent=0 // pred_check_branch
    %19 = sbr.rel (0) target = $region17
  $region16: #{transformer_forward.28} parent=0 // pred_region
    _
  $region17: #{transformer_forward.28} parent=0 // pred_fallthru
    _
  // Predicated region
  $region18: #{transformer_forward.28} parent=0 // pred_check
    _
  $region19: #{transformer_forward.28} parent=0 // pred_check_branch
    %21 = sbr.rel (0) target = $region21
  $region20: #{transformer_forward.28} parent=0 // pred_region
    _
  $region21: #{transformer_forward.28} parent=0 // pred_fallthru
    _
  // Predicated region
  $region22: #{transformer_forward.28} parent=0 // pred_check
    _
  $region23: #{transformer_forward.28} parent=0 // pred_check_branch
    %23 = sbr.rel (0) target = $region25
  $region24: #{transformer_forward.28} parent=0 // pred_region
    _
  $region25: #{transformer_forward.28} parent=0 // pred_fallthru
    _
  // Predicated region
  $region26: #{transformer_forward.28} parent=0 // pred_check
    _
  $region27: #{transformer_forward.28} parent=0 // pred_check_branch
    %25 = sbr.rel (0) target = $region29
  $region28: #{transformer_forward.28} parent=0 // pred_region
    _
  $region29: #{transformer_forward.28} parent=0 // pred_fallthru
    _
  %p27 = scmp.eq.s32.totalorder 0, 0
  // Predicated region
  $region30: #{transformer_forward.28} parent=0 // pred_check
    %p28 = pneg %p27
  $region31: #{transformer_forward.28} parent=0 // pred_check_branch
    %30 = sbr.rel (%p28) target = $region33
  $region32: #{transformer_forward.28} parent=0 // pred_region
    %vm31 = vcmask 261120
    %32 = vst.msk [vmem:[#allocation2] sm:$0xff] %vm31, 0.0
    %33 = vst.msk [vmem:[#allocation2 + $0x8] sm:$0xff] %vm31, 0.0
  $region33: #{transformer_forward.28} parent=0 // pred_fallthru
    _
  %v34 = vld [vmem:[%s0] sm:$0xf]
  %v35 = vld [vmem:[%s0 + $0x4] sm:$0xf]
  %v36 = vld [vmem:[%s1] sm:$0xf]
  %v37 = vld [vmem:[%s1 + $0x4] sm:$0xf]
  %v38 = vld [vmem:[%s1 + $0x8] sm:$0xf]
  %v39 = vld [vmem:[%s1 + $0xc] sm:$0xf]
  %v40 = vld [vmem:[%s2] sm:$0x1]
  %v42 = vlaneseq
  %v43 = vshrl.u32 %v42, 7
  %v44 = vsub.s32 0, %v43
  %v45 = vrot.slane %v40, %v44
  %v49 = vunpack.c.l.b16 %v34
  %v50 = vunpack.c.l.b16 %v35
  %v51 = vpack.c.b16 %v50, %v49
  %v56 = vunpack.c.l.b16 %v36
  %v57 = vunpack.c.l.b16 %v37
  %v58 = vunpack.c.l.b16 %v38
  %v59 = vunpack.c.l.b16 %v39
  %v60 = vpack.c.b16 %v57, %v56
  %v61 = vpack.c.b16 %v59, %v58
  %vm64 = vcmask 261120
  %v66 = vsel %vm64, %v51, 0
  %68 = vmatprep.subr.bf16.mxu0 0
  %69 = vmatpush1.bf16.msra.mxu0 %v60
  %70 = vmatprep.subr.bf16.mxu0 0
  %71 = vmatpush1.bf16.msra.mxu0 %v61
  %72 = vmatprep.subr.bf16.mxu0 0
  %73 = vmatpush1.bf16.msra.mxu0 0
  %74 = vmatprep.subr.bf16.mxu0 0
  %75 = vmatpush1.bf16.msra.mxu0 0
  %76 = vmatprep.subr.bf16.mxu0 0
  %77 = vmatpush1.bf16.msra.mxu0 0
  %78 = vmatprep.subr.bf16.mxu0 0
  %79 = vmatpush1.bf16.msra.mxu0 0
  %80 = vmatprep.subr.bf16.mxu0 0
  %81 = vmatpush1.bf16.msra.mxu0 0
  %82 = vmatprep.subr.bf16.mxu0 0
  %83 = vmatpush1.bf16.msra.mxu0 0
  %84 = vmatprep.subr.bf16.mxu0 0
  %85 = vmatpush1.bf16.msra.mxu0 0
  %86 = vmatprep.subr.bf16.mxu0 0
  %87 = vmatpush1.bf16.msra.mxu0 0
  %88 = vmatprep.subr.bf16.mxu0 0
  %89 = vmatpush1.bf16.msra.mxu0 0
  %90 = vmatprep.subr.bf16.mxu0 0
  %91 = vmatpush1.bf16.msra.mxu0 0
  %92 = vmatprep.subr.bf16.mxu0 0
  %93 = vmatpush1.bf16.msra.mxu0 0
  %94 = vmatprep.subr.bf16.mxu0 0
  %95 = vmatpush1.bf16.msra.mxu0 0
  %96 = vmatprep.subr.bf16.mxu0 0
  %97 = vmatpush1.bf16.msra.mxu0 0
  %98 = vmatprep.subr.bf16.mxu0 0
  %99 = vmatpush1.bf16.msra.mxu0 0
  %100 = vmatprep.mubr.bf16.mxu0 0
  %101 = vmatmul.mubr.bf16.gmra.mrb[0].mxu0 %v66
  %v102 = vpop.f32.mrb[0].mxu0
  %v103 = vadd.f32 %v45, %v102
  %v104 = vpop.f32.mrb[0].mxu0
  %v105 = vpop.f32.mrb[0].mxu0
  %v106 = vadd.f32 %v45, %v105
  %v107 = vpop.f32.mrb[0].mxu0
  %108 = vdwg.mxu0
  %v109 = vmax.f32 %v103, 0.0
  %v110 = vmax.f32 %v106, 0.0
  %v111 = vld [vmem:[#allocation2] sm:$0xff]
  %v112 = vld [vmem:[#allocation2 + $0x8] sm:$0xff]
  %v113 = vpack.c.bf16 %v110, %v109
  %v114 = vld [vmem:[%s3] sm:$0xf]
  %v115 = vld [vmem:[%s3 + $0x4] sm:$0xf]
  %v116 = vld [vmem:[%s3 + $0x8] sm:$0xf]
  %v117 = vld [vmem:[%s3 + $0xc] sm:$0xf]
  %v118 = vld [vmem:[%s3 + $0x10] sm:$0xf]
  %v119 = vld [vmem:[%s3 + $0x14] sm:$0xf]
  %v120 = vld [vmem:[%s3 + $0x18] sm:$0xf]
  %v121 = vld [vmem:[%s3 + $0x1c] sm:$0xf]
  %v130 = vunpack.c.l.b16 %v114
  %v131 = vunpack.c.l.b16 %v115
  %v132 = vunpack.c.l.b16 %v116
  %v133 = vunpack.c.l.b16 %v117
  %v134 = vunpack.c.l.b16 %v118
  %v135 = vunpack.c.l.b16 %v119
  %v136 = vunpack.c.l.b16 %v120
  %v137 = vunpack.c.l.b16 %v121
  %v138 = vpack.c.b16 %v131, %v130
  %v139 = vpack.c.b16 %v133, %v132
  %v140 = vpack.c.b16 %v135, %v134
  %v141 = vpack.c.b16 %v137, %v136
  %vm146 = vcmask 523264
  %v148 = vsel %vm146, %v113, 0
  %150 = vmatprep.subr.bf16.mxu0 0
  %151 = vmatpush1.bf16.msra.mxu0 %v138
  %152 = vmatprep.subr.bf16.mxu0 0
  %153 = vmatpush1.bf16.msra.mxu0 %v139
  %154 = vmatprep.subr.bf16.mxu0 0
  %155 = vmatpush1.bf16.msra.mxu0 %v140
  %156 = vmatprep.subr.bf16.mxu0 0
  %157 = vmatpush1.bf16.msra.mxu0 %v141
  %158 = vmatprep.subr.bf16.mxu0 0
  %159 = vmatpush1.bf16.msra.mxu0 0
  %160 = vmatprep.subr.bf16.mxu0 0
  %161 = vmatpush1.bf16.msra.mxu0 0
  %162 = vmatprep.subr.bf16.mxu0 0
  %163 = vmatpush1.bf16.msra.mxu0 0
  %164 = vmatprep.subr.bf16.mxu0 0
  %165 = vmatpush1.bf16.msra.mxu0 0
  %166 = vmatprep.subr.bf16.mxu0 0
  %167 = vmatpush1.bf16.msra.mxu0 0
  %168 = vmatprep.subr.bf16.mxu0 0
  %169 = vmatpush1.bf16.msra.mxu0 0
  %170 = vmatprep.subr.bf16.mxu0 0
  %171 = vmatpush1.bf16.msra.mxu0 0
  %172 = vmatprep.subr.bf16.mxu0 0
  %173 = vmatpush1.bf16.msra.mxu0 0
  %174 = vmatprep.subr.bf16.mxu0 0
  %175 = vmatpush1.bf16.msra.mxu0 0
  %176 = vmatprep.subr.bf16.mxu0 0
  %177 = vmatpush1.bf16.msra.mxu0 0
  %178 = vmatprep.subr.bf16.mxu0 0
  %179 = vmatpush1.bf16.msra.mxu0 0
  %180 = vmatprep.subr.bf16.mxu0 0
  %181 = vmatpush1.bf16.msra.mxu0 0
  %182 = vmatprep.mubr.bf16.mxu0 0
  %183 = vmatmul.mubr.bf16.gmra.mrb[0].mxu0 %v148
  %v184 = vpop.f32.mrb[0].mxu0
  %v185 = vadd.f32 0.0, %v184
  %v186 = vpop.f32.mrb[0].mxu0
  %v187 = vpop.f32.mrb[0].mxu0
  %v188 = vadd.f32 0.0, %v187
  %v189 = vpop.f32.mrb[0].mxu0
  %190 = vdwg.mxu0
  %v191 = vadd.f32 %v111, %v185
  %v192 = vadd.f32 %v112, %v188
  %193 = vst.msk [vmem:[#allocation2] sm:$0xff] %vm64, %v191
  %194 = vst.msk [vmem:[#allocation2 + $0x8] sm:$0xff] %vm64, %v192
  // Predicated region
  $region34: #{transformer_forward.28} parent=0 // pred_check
    %p195 = pneg %p27
  $region35: #{transformer_forward.28} parent=0 // pred_check_branch
    %197 = sbr.rel (%p195) target = $region37
  $region36: #{transformer_forward.28} parent=0 // pred_region
    %v198 = vld [vmem:[#allocation2] sm:$0xff]
    %v199 = vld [vmem:[#allocation2 + $0x8] sm:$0xff]
    %v200 = vld [vmem:[%s4] sm:$0x1]
    %v202 = vlaneseq
    %v203 = vshrl.u32 %v202, 7
    %v204 = vsub.s32 0, %v203
    %v205 = vrot.slane %v200, %v204
    %v207 = vadd.f32 %v198, %v205
    %v208 = vadd.f32 %v199, %v205
    %v209 = vld [vmem:[%s0] sm:$0xf]
    %v210 = vld [vmem:[%s0 + $0x4] sm:$0xf]
    %v211 = vunpack.c.l.bf16 %v209
    %v212 = vunpack.c.l.bf16 %v210
    %v213 = vadd.f32 %v207, %v211
    %v214 = vadd.f32 %v208, %v212
    %v215 = vsel %vm64, %v213, 0.0
    %216 = vadd.xlane.f32.xlu0 %v215
    %v217 = vpop.xlane.xlu0 %216
    %v218 = vsel %vm64, %v214, 0.0
    %219 = vadd.xlane.f32.xlu0 %v218
    %v220 = vpop.xlane.xlu0 %219
    %v221 = vrcp.pop 32.0
    %v222 = vmul.f32 %v217, %v221
    %v223 = vmul.f32 %v220, %v221
    %v224 = vsub.f32 %v213, %v222
    %v225 = vsub.f32 %v214, %v223
    %v226 = vmul.f32 %v224, %v224
    %v227 = vmul.f32 %v225, %v225
    %v228 = vsel %vm64, %v226, 0.0
    %229 = vadd.xlane.f32.xlu0 %v228
    %v230 = vpop.xlane.xlu0 %229
    %v231 = vsel %vm64, %v227, 0.0
    %232 = vadd.xlane.f32.xlu0 %v231
    %v233 = vpop.xlane.xlu0 %232
    %v234 = vmul.f32 %v230, %v221
    %v235 = vmul.f32 %v233, %v221
    %v236 = vadd.f32 %v234, 1e-05
    %v237 = vadd.f32 %v235, 1e-05
    %v238 = vrsqrt.pop %v236
    %v239 = vrsqrt.pop %v237
    %v240 = vmul.f32 %v224, %v238
    %v241 = vmul.f32 %v225, %v239
    %v242 = vld [vmem:[%s5] sm:$0x1]
    %v244 = vlaneseq
    %v245 = vshrl.u32 %v244, 7
    %v246 = vsub.s32 0, %v245
    %v247 = vrot.slane %v242, %v246
    %v249 = vmul.f32 %v240, %v247
    %v250 = vmul.f32 %v241, %v247
    %v251 = vld [vmem:[%s6] sm:$0x1]
    %v253 = vlaneseq
    %v254 = vshrl.u32 %v253, 7
    %v255 = vsub.s32 0, %v254
    %v256 = vrot.slane %v251, %v255
    %v258 = vadd.f32 %v249, %v256
    %v259 = vadd.f32 %v250, %v256
    %v260 = vpack.c.bf16 %v259, %v258
    %v262 = vunpack.c.l.b16 %v260
    %v263 = vunpack.c.h.b16 %v260
    %v264 = vpack.c.b16 %v262, %v262
    %v265 = vpack.c.b16 %v263, %v263
    %vm268 = vcmask 257024
    %269 = vst.msk [vmem:[%s7] sm:$0xf] %vm268, %v264
    %270 = vst.msk [vmem:[%s7 + $0x4] sm:$0xf] %vm268, %v265
  $region37: #{transformer_forward.28} parent=0 // pred_fallthru
    _
  // Predicated region
  $region38: #{transformer_forward.28} parent=0 // pred_check
    _
  $region39: #{transformer_forward.28} parent=0 // pred_check_branch
    %272 = sbr.rel (0) target = $region41
  $region40: #{transformer_forward.28} parent=0 // pred_region
    _
  $region41: #{transformer_forward.28} parent=0 // pred_fallthru
    _
  // Predicated region
  $region42: #{transformer_forward.28} parent=0 // pred_check
    _
  $region43: #{transformer_forward.28} parent=0 // pred_check_branch
    %274 = sbr.rel (0) target = $region45
  $region44: #{transformer_forward.28} parent=0 // pred_region
    _
  $region45: #{transformer_forward.28} parent=0 // pred_fallthru
    _

// kernel: transformer_forward.25
$region0: #{transformer_forward.25}
  #allocation0 [shape = 'u32[]', space=smem, size = 0x4, offset = 0x4, fixed_abs, tag = 'smem constant byte address 0x4 - core index']
  #allocation1 [shape = 'u32[144,128]{1,0:T(1,128)}', space=vmem, size = 0x12000, scoped, tag = 'internal scratch']
  #allocation2 [shape = 'f32[16,32]{1,0:T(8,128)}', space=vmem, size = 0x2000, scoped, tag = 'scratch operand']
  #allocation3 [shape = 'f32[16,32]{1,0:T(8,128)}', space=vmem, size = 0x2000, scoped, tag = 'scratch operand']
  #allocation4 [shape = 'f32[16,32]{1,0:T(8,128)}', space=vmem, size = 0x2000, scoped, tag = 'scratch operand']
  %s0 = inlined_call_operand.vmem [shape: bf16[16,32], index: 0, kind: input, shape index: {}]
  %s1 = inlined_call_operand.vmem [shape: bf16[32,32], index: 1, kind: input, shape index: {}]
  %s2 = inlined_call_operand.vmem [shape: bf16[32,32], index: 2, kind: input, shape index: {}]
  %s3 = inlined_call_operand.vmem [shape: bf16[32,32], index: 3, kind: input, shape index: {}]
  %s4 = inlined_call_operand.vmem [shape: f32[1,32], index: 4, kind: input, shape index: {}]
  %s5 = inlined_call_operand.vmem [shape: f32[1,32], index: 5, kind: input, shape index: {}]
  %s6 = inlined_call_operand.vmem [shape: f32[1,32], index: 6, kind: input, shape index: {}]
  %s7 = inlined_call_operand.vmem [shape: bf16[16,32], index: 7, kind: output, shape index: {0}]
  %s8 = inlined_call_operand.vmem [shape: bf16[16,32], index: 8, kind: output, shape index: {1}]
  %s9 = inlined_call_operand.vmem [shape: bf16[16,32], index: 9, kind: output, shape index: {2}]
  %10 = xla_tuple %s7, %s8, %s9
  %s11 = sld [smem:[#allocation0]]
  $region62: #{transformer_forward.25} parent=0
    _
  %s13 = ssub.s32 1, %s11
  %s14 = scalar_select 0, %s13, %s11
  // Predicated region
  $region2: #{transformer_forward.25} parent=0 // pred_check
    _
  $region3: #{transformer_forward.25} parent=0 // pred_check_branch
    %16 = sbr.rel (0) target = $region5
  $region4: #{transformer_forward.25} parent=0 // pred_region
    _
  $region5: #{transformer_forward.25} parent=0 // pred_fallthru
    _
  // Predicated region
  $region6: #{transformer_forward.25} parent=0 // pred_check
    _
  $region7: #{transformer_forward.25} parent=0 // pred_check_branch
    %18 = sbr.rel (0) target = $region9
  $region8: #{transformer_forward.25} parent=0 // pred_region
    _
  $region9: #{transformer_forward.25} parent=0 // pred_fallthru
    _
  // Predicated region
  $region10: #{transformer_forward.25} parent=0 // pred_check
    _
  $region11: #{transformer_forward.25} parent=0 // pred_check_branch
    %20 = sbr.rel (0) target = $region13
  $region12: #{transformer_forward.25} parent=0 // pred_region
    _
  $region13: #{transformer_forward.25} parent=0 // pred_fallthru
    _
  // Predicated region
  $region14: #{transformer_forward.25} parent=0 // pred_check
    _
  $region15: #{transformer_forward.25} parent=0 // pred_check_branch
    %22 = sbr.rel (0) target = $region17
  $region16: #{transformer_forward.25} parent=0 // pred_region
    _
  $region17: #{transformer_forward.25} parent=0 // pred_fallthru
    _
  // Predicated region
  $region18: #{transformer_forward.25} parent=0 // pred_check
    _
  $region19: #{transformer_forward.25} parent=0 // pred_check_branch
    %24 = sbr.rel (0) target = $region21
  $region20: #{transformer_forward.25} parent=0 // pred_region
    _
  $region21: #{transformer_forward.25} parent=0 // pred_fallthru
    _
  // Predicated region
  $region22: #{transformer_forward.25} parent=0 // pred_check
    _
  $region23: #{transformer_forward.25} parent=0 // pred_check_branch
    %26 = sbr.rel (0) target = $region25
  $region24: #{transformer_forward.25} parent=0 // pred_region
    _
  $region25: #{transformer_forward.25} parent=0 // pred_fallthru
    _
  // Predicated region
  $region26: #{transformer_forward.25} parent=0 // pred_check
    _
  $region27: #{transformer_forward.25} parent=0 // pred_check_branch
    %28 = sbr.rel (0) target = $region29
  $region28: #{transformer_forward.25} parent=0 // pred_region
    _
  $region29: #{transformer_forward.25} parent=0 // pred_fallthru
    _
  %p30 = scmp.eq.s32.totalorder 0, 0
  // Predicated region
  $region30: #{transformer_forward.25} parent=0 // pred_check
    %p31 = pneg %p30
  $region31: #{transformer_forward.25} parent=0 // pred_check_branch
    %33 = sbr.rel (%p31) target = $region33
  $region32: #{transformer_forward.25} parent=0 // pred_region
    %vm34 = vcmask 261120
    %35 = vst.msk [vmem:[#allocation2] sm:$0xff] %vm34, 0.0
    %36 = vst.msk [vmem:[#allocation2 + $0x8] sm:$0xff] %vm34, 0.0
    %37 = vst.msk [vmem:[#allocation3] sm:$0xff] %vm34, 0.0
    %38 = vst.msk [vmem:[#allocation3 + $0x8] sm:$0xff] %vm34, 0.0
    %39 = vst.msk [vmem:[#allocation4] sm:$0xff] %vm34, 0.0
    %40 = vst.msk [vmem:[#allocation4 + $0x8] sm:$0xff] %vm34, 0.0
  $region33: #{transformer_forward.25} parent=0 // pred_fallthru
    _
  %v41 = vld [vmem:[%s0] sm:$0xf]
  %v42 = vld [vmem:[%s0 + $0x4] sm:$0xf]
  %v43 = vld [vmem:[#allocation2] sm:$0xff]
  %v44 = vld [vmem:[#allocation2 + $0x8] sm:$0xff]
  %v45 = vld [vmem:[%s1] sm:$0xf]
  %v46 = vld [vmem:[%s1 + $0x4] sm:$0xf]
  %v47 = vld [vmem:[%s1 + $0x8] sm:$0xf]
  %v48 = vld [vmem:[%s1 + $0xc] sm:$0xf]
  %v51 = vunpack.c.l.b16 %v41
  %v52 = vunpack.c.l.b16 %v42
  %v53 = vpack.c.b16 %v52, %v51
  %v58 = vunpack.c.l.b16 %v45
  %v59 = vunpack.c.l.b16 %v46
  %v60 = vunpack.c.l.b16 %v47
  %v61 = vunpack.c.l.b16 %v48
  %v62 = vpack.c.b16 %v59, %v58
  %v63 = vpack.c.b16 %v61, %v60
  %vm66 = vcmask 261120
  %v68 = vsel %vm66, %v53, 0
  %70 = vmatprep.subr.bf16.mxu0 0
  %71 = vmatpush1.bf16.msra.mxu0 %v62
  %72 = vmatprep.subr.bf16.mxu0 0
  %73 = vmatpush1.bf16.msra.mxu0 %v63
  %74 = vmatprep.subr.bf16.mxu0 0
  %75 = vmatpush1.bf16.msra.mxu0 0
  %76 = vmatprep.subr.bf16.mxu0 0
  %77 = vmatpush1.bf16.msra.mxu0 0
  %78 = vmatprep.subr.bf16.mxu0 0
  %79 = vmatpush1.bf16.msra.mxu0 0
  %80 = vmatprep.subr.bf16.mxu0 0
  %81 = vmatpush1.bf16.msra.mxu0 0
  %82 = vmatprep.subr.bf16.mxu0 0
  %83 = vmatpush1.bf16.msra.mxu0 0
  %84 = vmatprep.subr.bf16.mxu0 0
  %85 = vmatpush1.bf16.msra.mxu0 0
  %86 = vmatprep.subr.bf16.mxu0 0
  %87 = vmatpush1.bf16.msra.mxu0 0
  %88 = vmatprep.subr.bf16.mxu0 0
  %89 = vmatpush1.bf16.msra.mxu0 0
  %90 = vmatprep.subr.bf16.mxu0 0
  %91 = vmatpush1.bf16.msra.mxu0 0
  %92 = vmatprep.subr.bf16.mxu0 0
  %93 = vmatpush1.bf16.msra.mxu0 0
  %94 = vmatprep.subr.bf16.mxu0 0
  %95 = vmatpush1.bf16.msra.mxu0 0
  %96 = vmatprep.subr.bf16.mxu0 0
  %97 = vmatpush1.bf16.msra.mxu0 0
  %98 = vmatprep.subr.bf16.mxu0 0
  %99 = vmatpush1.bf16.msra.mxu0 0
  %100 = vmatprep.subr.bf16.mxu0 0
  %101 = vmatpush1.bf16.msra.mxu0 0
  %102 = vmatprep.mubr.bf16.mxu0 0
  %103 = vmatmul.mubr.bf16.gmra.mrb[0].mxu0 %v68
  %v104 = vpop.f32.mrb[0].mxu0
  %v105 = vadd.f32 0.0, %v104
  %v106 = vpop.f32.mrb[0].mxu0
  %v107 = vpop.f32.mrb[0].mxu0
  %v108 = vadd.f32 0.0, %v107
  %v109 = vpop.f32.mrb[0].mxu0
  %110 = vdwg.mxu0
  %v111 = vadd.f32 %v43, %v105
  %v112 = vadd.f32 %v44, %v108
  %113 = vst.msk [vmem:[#allocation2] sm:$0xff] %vm66, %v111
  %114 = vst.msk [vmem:[#allocation2 + $0x8] sm:$0xff] %vm66, %v112
  %v115 = vld [vmem:[#allocation3] sm:$0xff]
  %v116 = vld [vmem:[#allocation3 + $0x8] sm:$0xff]
  %v117 = vld [vmem:[%s2] sm:$0xf]
  %v118 = vld [vmem:[%s2 + $0x4] sm:$0xf]
  %v119 = vld [vmem:[%s2 + $0x8] sm:$0xf]
  %v120 = vld [vmem:[%s2 + $0xc] sm:$0xf]
  %v125 = vunpack.c.l.b16 %v117
  %v126 = vunpack.c.l.b16 %v118
  %v127 = vunpack.c.l.b16 %v119
  %v128 = vunpack.c.l.b16 %v120
  %v129 = vpack.c.b16 %v126, %v125
  %v130 = vpack.c.b16 %v128, %v127
  %133 = vmatprep.subr.bf16.mxu0 0
  %134 = vmatpush1.bf16.msra.mxu0 %v129
  %135 = vmatprep.subr.bf16.mxu0 0
  %136 = vmatpush1.bf16.msra.mxu0 %v130
  %137 = vmatprep.subr.bf16.mxu0 0
  %138 = vmatpush1.bf16.msra.mxu0 0
  %139 = vmatprep.subr.bf16.mxu0 0
  %140 = vmatpush1.bf16.msra.mxu0 0
  %141 = vmatprep.subr.bf16.mxu0 0
  %142 = vmatpush1.bf16.msra.mxu0 0
  %143 = vmatprep.subr.bf16.mxu0 0
  %144 = vmatpush1.bf16.msra.mxu0 0
  %145 = vmatprep.subr.bf16.mxu0 0
  %146 = vmatpush1.bf16.msra.mxu0 0
  %147 = vmatprep.subr.bf16.mxu0 0
  %148 = vmatpush1.bf16.msra.mxu0 0
  %149 = vmatprep.subr.bf16.mxu0 0
  %150 = vmatpush1.bf16.msra.mxu0 0
  %151 = vmatprep.subr.bf16.mxu0 0
  %152 = vmatpush1.bf16.msra.mxu0 0
  %153 = vmatprep.subr.bf16.mxu0 0
  %154 = vmatpush1.bf16.msra.mxu0 0
  %155 = vmatprep.subr.bf16.mxu0 0
  %156 = vmatpush1.bf16.msra.mxu0 0
  %157 = vmatprep.subr.bf16.mxu0 0
  %158 = vmatpush1.bf16.msra.mxu0 0
  %159 = vmatprep.subr.bf16.mxu0 0
  %160 = vmatpush1.bf16.msra.mxu0 0
  %161 = vmatprep.subr.bf16.mxu0 0
  %162 = vmatpush1.bf16.msra.mxu0 0
  %163 = vmatprep.subr.bf16.mxu0 0
  %164 = vmatpush1.bf16.msra.mxu0 0
  %165 = vmatprep.mubr.bf16.mxu0 0
  %166 = vmatmul.mubr.bf16.gmra.mrb[0].mxu0 %v68
  %v167 = vpop.f32.mrb[0].mxu0
  %v168 = vadd.f32 0.0, %v167
  %v169 = vpop.f32.mrb[0].mxu0
  %v170 = vpop.f32.mrb[0].mxu0
  %v171 = vadd.f32 0.0, %v170
  %v172 = vpop.f32.mrb[0].mxu0
  %173 = vdwg.mxu0
  %v174 = vadd.f32 %v115, %v168
  %v175 = vadd.f32 %v116, %v171
  %176 = vst.msk [vmem:[#allocation3] sm:$0xff] %vm66, %v174
  %177 = vst.msk [vmem:[#allocation3 + $0x8] sm:$0xff] %vm66, %v175
  %v178 = vld [vmem:[#allocation4] sm:$0xff]
  %v179 = vld [vmem:[#allocation4 + $0x8] sm:$0xff]
  %v180 = vld [vmem:[%s3] sm:$0xf]
  %v181 = vld [vmem:[%s3 + $0x4] sm:$0xf]
  %v182 = vld [vmem:[%s3 + $0x8] sm:$0xf]
  %v183 = vld [vmem:[%s3 + $0xc] sm:$0xf]
  %v188 = vunpack.c.l.b16 %v180
  %v189 = vunpack.c.l.b16 %v181
  %v190 = vunpack.c.l.b16 %v182
  %v191 = vunpack.c.l.b16 %v183
  %v192 = vpack.c.b16 %v189, %v188
  %v193 = vpack.c.b16 %v191, %v190
  %196 = vmatprep.subr.bf16.mxu0 0
  %197 = vmatpush1.bf16.msra.mxu0 %v192
  %198 = vmatprep.subr.bf16.mxu0 0
  %199 = vmatpush1.bf16.msra.mxu0 %v193
  %200 = vmatprep.subr.bf16.mxu0 0
  %201 = vmatpush1.bf16.msra.mxu0 0
  %202 = vmatprep.subr.bf16.mxu0 0
  %203 = vmatpush1.bf16.msra.mxu0 0
  %204 = vmatprep.subr.bf16.mxu0 0
  %205 = vmatpush1.bf16.msra.mxu0 0
  %206 = vmatprep.subr.bf16.mxu0 0
  %207 = vmatpush1.bf16.msra.mxu0 0
  %208 = vmatprep.subr.bf16.mxu0 0
  %209 = vmatpush1.bf16.msra.mxu0 0
  %210 = vmatprep.subr.bf16.mxu0 0
  %211 = vmatpush1.bf16.msra.mxu0 0
  %212 = vmatprep.subr.bf16.mxu0 0
  %213 = vmatpush1.bf16.msra.mxu0 0
  %214 = vmatprep.subr.bf16.mxu0 0
  %215 = vmatpush1.bf16.msra.mxu0 0
  %216 = vmatprep.subr.bf16.mxu0 0
  %217 = vmatpush1.bf16.msra.mxu0 0
  %218 = vmatprep.subr.bf16.mxu0 0
  %219 = vmatpush1.bf16.msra.mxu0 0
  %220 = vmatprep.subr.bf16.mxu0 0
  %221 = vmatpush1.bf16.msra.mxu0 0
  %222 = vmatprep.subr.bf16.mxu0 0
  %223 = vmatpush1.bf16.msra.mxu0 0
  %224 = vmatprep.subr.bf16.mxu0 0
  %225 = vmatpush1.bf16.msra.mxu0 0
  %226 = vmatprep.subr.bf16.mxu0 0
  %227 = vmatpush1.bf16.msra.mxu0 0
  %228 = vmatprep.mubr.bf16.mxu0 0
  %229 = vmatmul.mubr.bf16.gmra.mrb[0].mxu0 %v68
  %v230 = vpop.f32.mrb[0].mxu0
  %v231 = vadd.f32 0.0, %v230
  %v232 = vpop.f32.mrb[0].mxu0
  %v233 = vpop.f32.mrb[0].mxu0
  %v234 = vadd.f32 0.0, %v233
  %v235 = vpop.f32.mrb[0].mxu0
  %236 = vdwg.mxu0
  %v237 = vadd.f32 %v178, %v231
  %v238 = vadd.f32 %v179, %v234
  %239 = vst.msk [vmem:[#allocation4] sm:$0xff] %vm66, %v237
  %240 = vst.msk [vmem:[#allocation4 + $0x8] sm:$0xff] %vm66, %v238
  // Predicated region
  $region34: #{transformer_forward.25} parent=0 // pred_check
    %p241 = pneg %p30
  $region35: #{transformer_forward.25} parent=0 // pred_check_branch
    %243 = sbr.rel (%p241) target = $region37
  $region36: #{transformer_forward.25} parent=0 // pred_region
    %v244 = vld [vmem:[#allocation2] sm:$0xff]
    %v245 = vld [vmem:[#allocation2 + $0x8] sm:$0xff]
    %v246 = vld [vmem:[%s4] sm:$0x1]
    %v248 = vlaneseq
    %v249 = vshrl.u32 %v248, 7
    %v250 = vsub.s32 0, %v249
    %v251 = vrot.slane %v246, %v250
    %v253 = vadd.f32 %v244, %v251
    %v254 = vadd.f32 %v245, %v251
    %v255 = vpack.c.bf16 %v254, %v253
    %v257 = vunpack.c.l.b16 %v255
    %v258 = vunpack.c.h.b16 %v255
    %v259 = vpack.c.b16 %v257, %v257
    %v260 = vpack.c.b16 %v258, %v258
    %vm263 = vcmask 257024
    %264 = vst.msk [vmem:[%s7] sm:$0xf] %vm263, %v259
    %265 = vst.msk [vmem:[%s7 + $0x4] sm:$0xf] %vm263, %v260
    %v266 = vld [vmem:[#allocation3] sm:$0xff]
    %v267 = vld [vmem:[#allocation3 + $0x8] sm:$0xff]
    %v268 = vld [vmem:[%s5] sm:$0x1]
    %v270 = vlaneseq
    %v271 = vshrl.u32 %v270, 7
    %v272 = vsub.s32 0, %v271
    %v273 = vrot.slane %v268, %v272
    %v275 = vadd.f32 %v266, %v273
    %v276 = vadd.f32 %v267, %v273
    %v277 = vpack.c.bf16 %v276, %v275
    %v279 = vunpack.c.l.b16 %v277
    %v280 = vunpack.c.h.b16 %v277
    %v281 = vpack.c.b16 %v279, %v279
    %v282 = vpack.c.b16 %v280, %v280
    %285 = vst.msk [vmem:[%s8] sm:$0xf] %vm263, %v281
    %286 = vst.msk [vmem:[%s8 + $0x4] sm:$0xf] %vm263, %v282
    %v287 = vld [vmem:[#allocation4] sm:$0xff]
    %v288 = vld [vmem:[#allocation4 + $0x8] sm:$0xff]
    %v289 = vld [vmem:[%s6] sm:$0x1]
    %v291 = vlaneseq
    %v292 = vshrl.u32 %v291, 7
    %v293 = vsub.s32 0, %v292
    %v294 = vrot.slane %v289, %v293
    %v296 = vadd.f32 %v287, %v294
    %v297 = vadd.f32 %v288, %v294
    %v298 = vpack.c.bf16 %v297, %v296
    %v300 = vunpack.c.l.b16 %v298
    %v301 = vunpack.c.h.b16 %v298
    %v302 = vpack.c.b16 %v300, %v300
    %v303 = vpack.c.b16 %v301, %v301
    %306 = vst.msk [vmem:[%s9] sm:$0xf] %vm263, %v302
    %307 = vst.msk [vmem:[%s9 + $0x4] sm:$0xf] %vm263, %v303
  $region37: #{transformer_forward.25} parent=0 // pred_fallthru
    _
  // Predicated region
  $region38: #{transformer_forward.25} parent=0 // pred_check
    _
  $region39: #{transformer_forward.25} parent=0 // pred_check_branch
    %309 = sbr.rel (0) target = $region41
  $region40: #{transformer_forward.25} parent=0 // pred_region
    _
  $region41: #{transformer_forward.25} parent=0 // pred_fallthru
    _
  // Predicated region
  $region42: #{transformer_forward.25} parent=0 // pred_check
    _
  $region43: #{transformer_forward.25} parent=0 // pred_check_branch
    %311 = sbr.rel (0) target = $region45
  $region44: #{transformer_forward.25} parent=0 // pred_region
    _
  $region45: #{transformer_forward.25} parent=0 // pred_fallthru
    _
  // Predicated region
  $region46: #{transformer_forward.25} parent=0 // pred_check
    _
  $region47: #{transformer_forward.25} parent=0 // pred_check_branch
    %313 = sbr.rel (0) target = $region49
  $region48: #{transformer_forward.25} parent=0 // pred_region
    _
  $region49: #{transformer_forward.25} parent=0 // pred_fallthru
    _
  // Predicated region
  $region50: #{transformer_forward.25} parent=0 // pred_check
    _
  $region51: #{transformer_forward.25} parent=0 // pred_check_branch
    %315 = sbr.rel (0) target = $region53
  $region52: #{transformer_forward.25} parent=0 // pred_region
    _
  $region53: #{transformer_forward.25} parent=0 // pred_fallthru
    _
  // Predicated region
  $region54: #{transformer_forward.25} parent=0 // pred_check
    _
  $region55: #{transformer_forward.25} parent=0 // pred_check_branch
    %317 = sbr.rel (0) target = $region57
  $region56: #{transformer_forward.25} parent=0 // pred_region
    _
  $region57: #{transformer_forward.25} parent=0 // pred_fallthru
    _
  // Predicated region
  $region58: #{transformer_forward.25} parent=0 // pred_check
    _
  $region59: #{transformer_forward.25} parent=0 // pred_check_branch
    %319 = sbr.rel (0) target = $region61
  $region60: #{transformer_forward.25} parent=0 // pred_region
    _
  $region61: #{transformer_forward.25} parent=0 // pred_fallthru
    _

// kernel: transformer_forward.26
$region0: #{transformer_forward.26}
  #allocation0 [shape = 'u32[]', space=smem, size = 0x4, offset = 0x4, fixed_abs, tag = 'smem constant byte address 0x4 - core index']
  #allocation1 [shape = 'u32[144,128]{1,0:T(1,128)}', space=vmem, size = 0x12000, scoped, tag = 'internal scratch']
  #allocation2 [shape = 'bf16[4,8,8]{2,1,0:T(8,128)(2,1)}', space=vmem, size = 0x2000, scoped, tag = 'scratch operand']
  #allocation3 [shape = 'bf16[4,8,8]{2,1,0:T(8,128)(2,1)}', space=vmem, size = 0x2000, scoped, tag = 'scratch operand']
  #allocation4 [shape = 'bf16[4,8,8]{2,1,0:T(8,128)(2,1)}', space=vmem, size = 0x2000, scoped, tag = 'scratch operand']
  #allocation5 [shape = 'f32[4,8,1]{2,1,0:T(8,128)}', space=vmem, size = 0x4000, scoped, tag = 'scratch operand']
  #allocation6 [shape = 'f32[4,8,1]{2,1,0:T(8,128)}', space=vmem, size = 0x4000, scoped, tag = 'scratch operand']
  #allocation7 [shape = 'f32[4,8,8]{2,1,0:T(8,128)}', space=vmem, size = 0x4000, scoped, tag = 'scratch operand']
  %s0 = inlined_call_operand.vmem [shape: bf16[2,8,32], index: 0, kind: input, shape index: {}]
  %s1 = inlined_call_operand.vmem [shape: bf16[2,8,32], index: 1, kind: input, shape index: {}]
  %s2 = inlined_call_operand.vmem [shape: bf16[2,8,32], index: 2, kind: input, shape index: {}]
  %s3 = inlined_call_operand.vmem [shape: bf16[2,8,32], index: 3, kind: output, shape index: {}]
  %s4 = sld [smem:[#allocation0]]
  $region79: #{transformer_forward.26} parent=0
    _
  %s6 = ssub.s32 1, %s4
  %s7 = scalar_select 0, %s6, %s4
  loop: start=0, step=1, limit=4
  $region2: #{transformer_forward.26} parent=0 // loop_pre_header
    _
  $region3: #{transformer_forward.26} parent=0 // loop_header
    %s9 = sphi 0, %s13
    %p10 = scmp.ge.s32.totalorder %s9, 4
    %s16 = sphi 0, %s35
    %s17 = sphi 0, %s31
    %s18 = sphi 0, %s27
    %s19 = sphi 0, %s16
    %s20 = sphi 0, %s17
    %s21 = sphi 0, %s18
    %s22 = sphi 0, %s19
    %s23 = sphi 0, %s20
    %s24 = sphi 0, %s21
    %s40 = sphi 0, %s42
    %s43 = sphi 0, %s40
    %s44 = sphi 0, %s43
    %s60 = sphi 0, %s44
    %s68 = sphi 0, %s70
    %s71 = sphi 0, %s68
    %s72 = sphi 0, %s71
    %s88 = sphi 0, %s72
    %s96 = sphi 0, %s98
    %s99 = sphi 0, %s96
    %s100 = sphi 0, %s99
    %s116 = sphi 0, %s100
    %s124 = sphi 0, %s126
    %s127 = sphi 0, %s124
    %s128 = sphi 0, %s127
    %s144 = sphi 0, %s128
  $region4: #{transformer_forward.26} parent=0 // loop_header_branch
    %12 = sbr.rel (%p10) target = $region8
  $region5: #{transformer_forward.26} parent=0 // loop_body
    %s14 = ssub.s32 %s9, 1
    %s15 = ssub.s32 %s9, 2
    %s25 = sadd.s32 1, %s18
    %p26 = scmp.ge.s32.totalorder %s25, 1
    %s27 = scalar_select %p26, 0, %s25
    %s28 = sadd.s32 1, %s17
    %s29 = scalar_select %p26, %s28, %s17
    %p30 = scmp.ge.s32.totalorder %s29, 1
    %s31 = scalar_select %p30, 0, %s29
    %s32 = sadd.s32 1, %s16
    %s33 = scalar_select %p30, %s32, %s16
    %p34 = scmp.ge.s32.totalorder %s33, 2
    %s35 = scalar_select %p34, 0, %s33
    %s36 = ssub.s32 %s16, %s35
    %s37 = ssub.s32 %s17, %s31
    %s38 = sor.u32 %s36, %s37
    %p39 = scmp.eq.s32.totalorder %s38, 0
    %s41 = sadd.s32 %s40, 1
    %s42 = scalar_select %p39, %s40, %s41
    %p45 = pneg %p39
    %p46 = scmp.eq.s32.totalorder %s9, 1
    %p47 = por %p45, %p46
    %p48 = scmp.ne.s32.totalorder %s40, %s43
    %p49 = scmp.eq.s32.totalorder %s9, 0
    %p50 = por %p48, %p49
    %p51 = scmp.ne.s32.totalorder %s40, %s43
    %p52 = scmp.eq.s32.totalorder %s14, 1
    %p53 = por %p51, %p52
    %p54 = scmp.ne.s32.totalorder %s43, %s44
    %p55 = scmp.eq.s32.totalorder %s14, 0
    %p56 = por %p54, %p55
    %p57 = scmp.ne.s32.totalorder %s43, %s44
    %p58 = scmp.eq.s32.totalorder %s15, 1
    %p59 = por %p57, %p58
    %p61 = scmp.ne.s32.totalorder %s44, %s60
    %p62 = scmp.eq.s32.totalorder %s15, 0
    %p63 = por %p61, %p62
    %s64 = ssub.s32 %s16, %s35
    %s65 = ssub.s32 %s18, %s27
    %s66 = sor.u32 %s64, %s65
    %p67 = scmp.eq.s32.totalorder %s66, 0
    %s69 = sadd.s32 %s68, 1
    %s70 = scalar_select %p67, %s68, %s69
    %p73 = pneg %p67
    %p74 = scmp.eq.s32.totalorder %s9, 1
    %p75 = por %p73, %p74
    %p76 = scmp.ne.s32.totalorder %s68, %s71
    %p77 = scmp.eq.s32.totalorder %s9, 0
    %p78 = por %p76, %p77
    %p79 = scmp.ne.s32.totalorder %s68, %s71
    %p80 = scmp.eq.s32.totalorder %s14, 1
    %p81 = por %p79, %p80
    %p82 = scmp.ne.s32.totalorder %s71, %s72
    %p83 = scmp.eq.s32.totalorder %s14, 0
    %p84 = por %p82, %p83
    %p85 = scmp.ne.s32.totalorder %s71, %s72
    %p86 = scmp.eq.s32.totalorder %s15, 1
    %p87 = por %p85, %p86
    %p89 = scmp.ne.s32.totalorder %s72, %s88
    %p90 = scmp.eq.s32.totalorder %s15, 0
    %p91 = por %p89, %p90
    %s92 = ssub.s32 %s16, %s35
    %s93 = ssub.s32 %s18, %s27
    %s94 = sor.u32 %s92, %s93
    %p95 = scmp.eq.s32.totalorder %s94, 0
    %s97 = sadd.s32 %s96, 1
    %s98 = scalar_select %p95, %s96, %s97
    %p101 = pneg %p95
    %p102 = scmp.eq.s32.totalorder %s9, 1
    %p103 = por %p101, %p102
    %p104 = scmp.ne.s32.totalorder %s96, %s99
    %p105 = scmp.eq.s32.totalorder %s9, 0
    %p106 = por %p104, %p105
    %p107 = scmp.ne.s32.totalorder %s96, %s99
    %p108 = scmp.eq.s32.totalorder %s14, 1
    %p109 = por %p107, %p108
    %p110 = scmp.ne.s32.totalorder %s99, %s100
    %p111 = scmp.eq.s32.totalorder %s14, 0
    %p112 = por %p110, %p111
    %p113 = scmp.ne.s32.totalorder %s99, %s100
    %p114 = scmp.eq.s32.totalorder %s15, 1
    %p115 = por %p113, %p114
    %p117 = scmp.ne.s32.totalorder %s100, %s116
    %p118 = scmp.eq.s32.totalorder %s15, 0
    %p119 = por %p117, %p118
    %s120 = ssub.s32 %s16, %s35
    %s121 = ssub.s32 %s17, %s31
    %s122 = sor.u32 %s120, %s121
    %p123 = scmp.eq.s32.totalorder %s122, 0
    %s125 = sadd.s32 %s124, 1
    %s126 = scalar_select %p123, %s124, %s125
    %p129 = pneg %p123
    %p130 = scmp.eq.s32.totalorder %s9, 1
    %p131 = por %p129, %p130
    %p132 = scmp.ne.s32.totalorder %s124, %s127
    %p133 = scmp.eq.s32.totalorder %s9, 0
    %p134 = por %p132, %p133
    %p135 = scmp.ne.s32.totalorder %s124, %s127
    %p136 = scmp.eq.s32.totalorder %s14, 1
    %p137 = por %p135, %p136
    %p138 = scmp.ne.s32.totalorder %s127, %s128
    %p139 = scmp.eq.s32.totalorder %s14, 0
    %p140 = por %p138, %p139
    %p141 = scmp.ne.s32.totalorder %s127, %s128
    %p142 = scmp.eq.s32.totalorder %s15, 1
    %p143 = por %p141, %p142
    %p145 = scmp.ne.s32.totalorder %s128, %s144
    %p146 = scmp.eq.s32.totalorder %s15, 0
    %p147 = por %p145, %p146
    %p148 = scmp.le.s32.totalorder 1, %s9
    %p149 = scmp.lt.s32.totalorder %s9, 3
    %p150 = pnand %p148, %p149
    %p151 = pneg %p150
    // Predicated region
    $region9: #{transformer_forward.26} parent=5 // pred_check
      _
    $region10: #{transformer_forward.26} parent=5 // pred_check_branch
      %153 = sbr.rel (%p150) target = $region12
    $region11: #{transformer_forward.26} parent=5 // pred_region
      %s154 = ssub.s32 %s9, 1
    $region12: #{transformer_forward.26} parent=5 // pred_fallthru
      _
    %p155 = scmp.lt.s32.totalorder %s9, 2
    // Predicated region
    $region13: #{transformer_forward.26} parent=5 // pred_check
      %p156 = pneg %p155
    $region14: #{transformer_forward.26} parent=5 // pred_check_branch
      %158 = sbr.rel (%p156) target = $region16
    $region15: #{transformer_forward.26} parent=5 // pred_region
      // Predicated region
      $region17: #{transformer_forward.26} parent=15 // pred_check
        %p159 = pneg %p50
      $region18: #{transformer_forward.26} parent=15 // pred_check_branch
        %161 = sbr.rel (%p159) target = $region20
      $region19: #{transformer_forward.26} parent=15 // pred_region
        %p162 = scmp.lt.s32.totalorder %s16, 1
        %s163 = scalar_select %p162, %s16, 1
        %p164 = scmp.lt.s32.totalorder %s17, 0
        %s165 = scalar_select %p164, %s17, 0
        %s166 = sadd.s32 %s165, %s163
        %s167 = smul.addr %s166, 4
        %s168 = scalar_lea.vmem %s0, %s167
      $region20: #{transformer_forward.26} parent=15 // pred_fallthru
        _
      // Predicated region
      $region21: #{transformer_forward.26} parent=15 // pred_check
        %p169 = pneg %p78
      $region22: #{transformer_forward.26} parent=15 // pred_check_branch
        %171 = sbr.rel (%p169) target = $region24
      $region23: #{transformer_forward.26} parent=15 // pred_region
        %p172 = scmp.lt.s32.totalorder %s16, 1
        %s173 = scalar_select %p172, %s16, 1
        %p174 = scmp.lt.s32.totalorder %s18, 0
        %s175 = scalar_select %p174, %s18, 0
        %s176 = sadd.s32 %s175, %s173
        %s177 = smul.addr %s176, 4
        %s178 = scalar_lea.vmem %s1, %s177
      $region24: #{transformer_forward.26} parent=15 // pred_fallthru
        _
      // Predicated region
      $region25: #{transformer_forward.26} parent=15 // pred_check
        %p179 = pneg %p106
      $region26: #{transformer_forward.26} parent=15 // pred_check_branch
        %181 = sbr.rel (%p179) target = $region28
      $region27: #{transformer_forward.26} parent=15 // pred_region
        %p182 = scmp.lt.s32.totalorder %s16, 1
        %s183 = scalar_select %p182, %s16, 1
        %p184 = scmp.lt.s32.totalorder %s18, 0
        %s185 = scalar_select %p184, %s18, 0
        %s186 = sadd.s32 %s185, %s183
        %s187 = smul.addr %s186, 4
        %s188 = scalar_lea.vmem %s2, %s187
      $region28: #{transformer_forward.26} parent=15 // pred_fallthru
        _
    $region16: #{transformer_forward.26} parent=5 // pred_fallthru
      _
    %p189 = scmp.le.s32.totalorder 1, %s9
    %p190 = scmp.lt.s32.totalorder %s9, 3
    %p191 = pnand %p189, %p190
    %p192 = pneg %p191
    // Predicated region
    $region29: #{transformer_forward.26} parent=5 // pred_check
      _
    $region30: #{transformer_forward.26} parent=5 // pred_check_branch
      %194 = sbr.rel (%p191) target = $region32
    $region31: #{transformer_forward.26} parent=5 // pred_region
      %s195 = ssub.s32 %s9, 1
      %p196 = scmp.lt.s32.totalorder %s19, 1
      %s197 = scalar_select %p196, %s19, 1
      %p198 = scmp.lt.s32.totalorder %s20, 0
      %s199 = scalar_select %p198, %s20, 0
      %s200 = sadd.s32 %s199, %s197
      %s201 = smul.addr %s200, 4
      %s202 = scalar_lea.vmem %s0, %s201
      %p203 = pneg %p56
      %p204 = pneg %p53
      %p205 = scmp.lt.s32.totalorder %s19, 1
      %s206 = scalar_select %p205, %s19, 1
      %p207 = scmp.lt.s32.totalorder %s21, 0
      %s208 = scalar_select %p207, %s21, 0
      %s209 = sadd.s32 %s208, %s206
      %s210 = smul.addr %s209, 4
      %s211 = scalar_lea.vmem %s1, %s210
      %p212 = pneg %p84
      %p213 = pneg %p81
      %p214 = scmp.lt.s32.totalorder %s19, 1
      %s215 = scalar_select %p214, %s19, 1
      %p216 = scmp.lt.s32.totalorder %s21, 0
      %s217 = scalar_select %p216, %s21, 0
      %s218 = sadd.s32 %s217, %s215
      %s219 = smul.addr %s218, 4
      %s220 = scalar_lea.vmem %s2, %s219
      %p221 = pneg %p112
      %p222 = pneg %p109
      %p223 = pneg %p140
      %p224 = pneg %p137
      %p225 = scmp.lt.s32.totalorder %s19, 1
      %s226 = scalar_select %p225, %s19, 1
      %p227 = scmp.lt.s32.totalorder %s20, 0
      %s228 = scalar_select %p227, %s20, 0
      %s229 = sadd.s32 %s228, %s226
      %s230 = smul.addr %s229, 4
      %s231 = scalar_lea.vmem %s3, %s230
      %p232 = scmp.lt.s32.totalorder %s19, 1
      %s233 = scalar_select %p232, %s19, 1
      %p234 = scmp.lt.s32.totalorder %s20, 0
      %s235 = scalar_select %p234, %s20, 0
      %s236 = sadd.s32 %s235, %s233
      %s237 = smul.addr %s236, 4
      %s238 = scalar_lea.vmem %s0, %s237
      %p239 = scmp.lt.s32.totalorder %s19, 1
      %s240 = scalar_select %p239, %s19, 1
      %p241 = scmp.lt.s32.totalorder %s21, 0
      %s242 = scalar_select %p241, %s21, 0
      %s243 = sadd.s32 %s242, %s240
      %s244 = smul.addr %s243, 4
      %s245 = scalar_lea.vmem %s1, %s244
      %p246 = scmp.lt.s32.totalorder %s19, 1
      %s247 = scalar_select %p246, %s19, 1
      %p248 = scmp.lt.s32.totalorder %s21, 0
      %s249 = scalar_select %p248, %s21, 0
      %s250 = sadd.s32 %s249, %s247
      %s251 = smul.addr %s250, 4
      %s252 = scalar_lea.vmem %s2, %s251
      %p253 = scmp.lt.s32.totalorder %s19, 1
      %s254 = scalar_select %p253, %s19, 1
      %p255 = scmp.lt.s32.totalorder %s20, 0
      %s256 = scalar_select %p255, %s20, 0
      %s257 = sadd.s32 %s256, %s254
      %s258 = smul.addr %s257, 4
      %s259 = scalar_lea.vmem %s3, %s258
      %p261 = scmp.eq.s32.totalorder %s21, 0
      // Predicated region
      $region33: #{transformer_forward.26} parent=31 // pred_check
        %p262 = pneg %p261
      $region34: #{transformer_forward.26} parent=31 // pred_check_branch
        %264 = sbr.rel (%p262) target = $region36
      $region35: #{transformer_forward.26} parent=31 // pred_region
        %vm265 = vcmask 7168
        %266 = vst.msk [vmem:[#allocation5] sm:$0xff] %vm265, -inf
        %267 = vst.msk [vmem:[#allocation5 + $0x8] sm:$0xff] %vm265, -inf
        %268 = vst.msk [vmem:[#allocation5 + $0x10] sm:$0xff] %vm265, -inf
        %269 = vst.msk [vmem:[#allocation5 + $0x18] sm:$0xff] %vm265, -inf
        %270 = vst.msk [vmem:[#allocation6] sm:$0xff] %vm265, 0.0
        %271 = vst.msk [vmem:[#allocation6 + $0x8] sm:$0xff] %vm265, 0.0
        %272 = vst.msk [vmem:[#allocation6 + $0x10] sm:$0xff] %vm265, 0.0
        %273 = vst.msk [vmem:[#allocation6 + $0x18] sm:$0xff] %vm265, 0.0
        %vm274 = vcmask 64512
        %275 = vst.msk [vmem:[#allocation7] sm:$0xff] %vm274, 0.0
        %276 = vst.msk [vmem:[#allocation7 + $0x8] sm:$0xff] %vm274, 0.0
        %277 = vst.msk [vmem:[#allocation7 + $0x10] sm:$0xff] %vm274, 0.0
        %278 = vst.msk [vmem:[#allocation7 + $0x18] sm:$0xff] %vm274, 0.0
        %v279 = vld [vmem:[%s238] sm:$0xf]
        %vm280 = vcmask 60416
        %281 = vst.msk [vmem:[#allocation2] sm:$0xf] %vm280, %v279
        %283 = vrot.lane.b32.xlu0 %v279, 120
        %v284 = vpop.permute.xlu0 %283
        %s286 = scalar_lea.vmem [#allocation2], 4
        %287 = vst.msk [vmem:[%s286] sm:$0xf] %vm280, %v284
        %288 = vrot.lane.b32.xlu0 %v279, 112
        %v289 = vpop.permute.xlu0 %288
        %s291 = scalar_lea.vmem [#allocation2], 8
        %292 = vst.msk [vmem:[%s291] sm:$0xf] %vm280, %v289
        %293 = vrot.lane.b32.xlu0 %v279, 104
        %v294 = vpop.permute.xlu0 %293
        %s296 = scalar_lea.vmem [#allocation2], 12
        %297 = vst.msk [vmem:[%s296] sm:$0xf] %vm280, %v294
      $region36: #{transformer_forward.26} parent=31 // pred_fallthru
        _
      %s298 = smul.u32 %s20, 8
      %s299 = sadd.s32 %s298, 7
      %s300 = smul.u32 %s21, 8
      %s301 = sadd.s32 %s300, 7
      %p302 = scmp.le.s32.totalorder %s300, %s299
      %p303 = scmp.le.s32.totalorder %s301, %s298
      %p304 = scmp.gt.s32.totalorder %s301, %s298
      %p305 = pnand %p302, %p304
      %p306 = pneg %p305
      // Predicated region
      $region37: #{transformer_forward.26} parent=31 // pred_check
        %p307 = pneg %p302
      $region38: #{transformer_forward.26} parent=31 // pred_check_branch
        %309 = sbr.rel (%p307) target = $region40
      $region39: #{transformer_forward.26} parent=31 // pred_region
        %v310 = vld [vmem:[%s245] sm:$0xf]
        %v311 = vld [vmem:[%s252] sm:$0xf]
        %vm312 = vcmask 60416
        %313 = vst.msk [vmem:[#allocation3] sm:$0xf] %vm312, %v310
        %314 = vst.msk [vmem:[#allocation4] sm:$0xf] %vm312, %v311
        %316 = vrot.lane.b32.xlu0 %v310, 120
        %v317 = vpop.permute.xlu0 %316
        %s319 = scalar_lea.vmem [#allocation3], 4
        %320 = vst.msk [vmem:[%s319] sm:$0xf] %vm312, %v317
        %322 = vrot.lane.b32.xlu0 %v311, 120
        %v323 = vpop.permute.xlu0 %322
        %s325 = scalar_lea.vmem [#allocation4], 4
        %326 = vst.msk [vmem:[%s325] sm:$0xf] %vm312, %v323
        %327 = vrot.lane.b32.xlu0 %v310, 112
        %v328 = vpop.permute.xlu0 %327
        %s330 = scalar_lea.vmem [#allocation3], 8
        %331 = vst.msk [vmem:[%s330] sm:$0xf] %vm312, %v328
        %332 = vrot.lane.b32.xlu0 %v311, 112
        %v333 = vpop.permute.xlu0 %332
        %s335 = scalar_lea.vmem [#allocation4], 8
        %336 = vst.msk [vmem:[%s335] sm:$0xf] %vm312, %v333
        %337 = vrot.lane.b32.xlu0 %v310, 104
        %v338 = vpop.permute.xlu0 %337
        %s340 = scalar_lea.vmem [#allocation3], 12
        %341 = vst.msk [vmem:[%s340] sm:$0xf] %vm312, %v338
        %342 = vrot.lane.b32.xlu0 %v311, 104
        %v343 = vpop.permute.xlu0 %342
        %s345 = scalar_lea.vmem [#allocation4], 12
        %346 = vst.msk [vmem:[%s345] sm:$0xf] %vm312, %v343
      $region40: #{transformer_forward.26} parent=31 // pred_fallthru
        _
      // Predicated region
      $region41: #{transformer_forward.26} parent=31 // pred_check
        %p347 = pneg %p303
      $region42: #{transformer_forward.26} parent=31 // pred_check_branch
        %349 = sbr.rel (%p347) target = $region44
      $region43: #{transformer_forward.26} parent=31 // pred_region
        loop: start=0, step=1, limit=4
        $region45: #{transformer_forward.26} parent=43 // loop_pre_header
          _
        $region46: #{transformer_forward.26} parent=43 // loop_header
          %s351 = sphi 0, %s355
          %p352 = scmp.ge.s32.totalorder %s351, 4
        $region47: #{transformer_forward.26} parent=43 // loop_header_branch
          %354 = sbr.rel (%p352) target = $region51
        $region48: #{transformer_forward.26} parent=43 // loop_body
          %s356 = smul.addr %s351, 4
          %s357 = scalar_lea.vmem [#allocation2], %s356
          %v358 = vld [vmem:[%s357] sm:$0xf]
          %s359 = smul.addr %s351, 4
          %s360 = scalar_lea.vmem [#allocation3], %s359
          %v361 = vld [vmem:[%s360] sm:$0xf]
          %vm362 = vcmask 64512
          %v364 = vsel %vm362, %v358, 0
          %v367 = vsel %vm362, %v361, 0
          %369 = vmatprep.subr.bf16.mxu0 0
          %370 = vmatpush1.bf16.xpose.msra.mxu0 %v367
          %371 = vmatprep.subr.bf16.mxu0 0
          %372 = vmatpush1.bf16.xpose.msra.mxu0 0
          %373 = vmatprep.subr.bf16.mxu0 0
          %374 = vmatpush1.bf16.xpose.msra.mxu0 0
          %375 = vmatprep.subr.bf16.mxu0 0
          %376 = vmatpush1.bf16.xpose.msra.mxu0 0
          %377 = vmatprep.subr.bf16.mxu0 0
          %378 = vmatpush1.bf16.xpose.msra.mxu0 0
          %379 = vmatprep.subr.bf16.mxu0 0
          %380 = vmatpush1.bf16.xpose.msra.mxu0 0
          %381 = vmatprep.subr.bf16.mxu0 0
          %382 = vmatpush1.bf16.xpose.msra.mxu0 0
          %383 = vmatprep.subr.bf16.mxu0 0
          %384 = vmatpush1.bf16.xpose.msra.mxu0 0
          %385 = vmatprep.subr.bf16.mxu0 0
          %386 = vmatpush1.bf16.xpose.msra.mxu0 0
          %387 = vmatprep.subr.bf16.mxu0 0
          %388 = vmatpush1.bf16.xpose.msra.mxu0 0
          %389 = vmatprep.subr.bf16.mxu0 0
          %390 = vmatpush1.bf16.xpose.msra.mxu0 0
          %391 = vmatprep.subr.bf16.mxu0 0
          %392 = vmatpush1.bf16.xpose.msra.mxu0 0
          %393 = vmatprep.subr.bf16.mxu0 0
          %394 = vmatpush1.bf16.xpose.msra.mxu0 0
          %395 = vmatprep.subr.bf16.mxu0 0
          %396 = vmatpush1.bf16.xpose.msra.mxu0 0
          %397 = vmatprep.subr.bf16.mxu0 0
          %398 = vmatpush1.bf16.xpose.msra.mxu0 0
          %399 = vmatprep.subr.bf16.mxu0 0
          %400 = vmatpush1.bf16.xpose.msra.mxu0 0
          %401 = vmatprep.mubr.bf16.mxu0 0
          %402 = vmatmul.mubr.bf16.gmra.mrb[0].mxu0 %v364
          %v403 = vpop.f32.mrb[0].mxu0
          %v404 = vadd.f32 0.0, %v403
          %v405 = vpop.f32.mrb[0].mxu0
          %v406 = vpop.f32.mrb[0].mxu0
          %v407 = vpop.f32.mrb[0].mxu0
          %408 = vdwg.mxu0
          %s409 = smul.u32 %s351, 8
          %s410 = scalar_lea.vmem [#allocation5], %s409
          %v411 = vld [vmem:[%s410] sm:$0xff]
          %v412 = vsel %vm362, %v404, -inf
          %413 = vmax.xlane.f32.xlu0 %v412
          %v414 = vpop.xlane.xlu0 %413
          %v415 = vmax.f32 %v411, %v414
          %v416 = vsub.f32 %v411, %v415
          %v417 = vmul.f32 %v416, 1.442695
          %v418 = vpow.pop %v417
          %420 = vset.pattern.permute.xlu0 0
          %421 = vperm.xlu0 %420, %v415
          %v422 = vpop.permute.xlu0 %421
          %v424 = vsub.f32 %v404, %v422
          %v425 = vmul.f32 %v424, 1.442695
          %v426 = vpow.pop %v425
          %s427 = scalar_lea.vmem [#allocation6], %s409
          %v428 = vld [vmem:[%s427] sm:$0xff]
          %v429 = vmul.f32 %v418, %v428
          %v430 = vsel %vm362, %v426, 0.0
          %431 = vadd.xlane.f32.xlu0 %v430
          %v432 = vpop.xlane.xlu0 %431
          %v433 = vadd.f32 %v429, %v432
          %vm434 = vcmask 7168
          %435 = vst.msk [vmem:[%s427] sm:$0xff] %vm434, %v433
          %s436 = scalar_lea.vmem [#allocation7], %s409
          %v437 = vld [vmem:[%s436] sm:$0xff]
          %439 = vset.pattern.permute.xlu0 0
          %440 = vperm.xlu0 %439, %v418
          %v441 = vpop.permute.xlu0 %440
          %v443 = vmul.f32 %v441, %v437
          %v444 = vpack.c.bf16 %v426, %v426
          %s445 = smul.addr %s351, 4
          %s446 = scalar_lea.vmem [#allocation4], %s445
          %v447 = vld [vmem:[%s446] sm:$0xf]
          %v449 = vsel %vm362, %v444, 0
          %vm451 = vcmask 1043456
          %v453 = vsel %vm451, %v447, 0
          %455 = vmatprep.subr.bf16.mxu0 0
          %456 = vmatpush1.bf16.msra.mxu0 %v453
          %457 = vmatprep.subr.bf16.mxu0 0
          %458 = vmatpush1.bf16.msra.mxu0 0
          %459 = vmatprep.subr.bf16.mxu0 0
          %460 = vmatpush1.bf16.msra.mxu0 0
          %461 = vmatprep.subr.bf16.mxu0 0
          %462 = vmatpush1.bf16.msra.mxu0 0
          %463 = vmatprep.subr.bf16.mxu0 0
          %464 = vmatpush1.bf16.msra.mxu0 0
          %465 = vmatprep.subr.bf16.mxu0 0
          %466 = vmatpush1.bf16.msra.mxu0 0
          %467 = vmatprep.subr.bf16.mxu0 0
          %468 = vmatpush1.bf16.msra.mxu0 0
          %469 = vmatprep.subr.bf16.mxu0 0
          %470 = vmatpush1.bf16.msra.mxu0 0
          %471 = vmatprep.subr.bf16.mxu0 0
          %472 = vmatpush1.bf16.msra.mxu0 0
          %473 = vmatprep.subr.bf16.mxu0 0
          %474 = vmatpush1.bf16.msra.mxu0 0
          %475 = vmatprep.subr.bf16.mxu0 0
          %476 = vmatpush1.bf16.msra.mxu0 0
          %477 = vmatprep.subr.bf16.mxu0 0
          %478 = vmatpush1.bf16.msra.mxu0 0
          %479 = vmatprep.subr.bf16.mxu0 0
          %480 = vmatpush1.bf16.msra.mxu0 0
          %481 = vmatprep.subr.bf16.mxu0 0
          %482 = vmatpush1.bf16.msra.mxu0 0
          %483 = vmatprep.subr.bf16.mxu0 0
          %484 = vmatpush1.bf16.msra.mxu0 0
          %485 = vmatprep.subr.bf16.mxu0 0
          %486 = vmatpush1.bf16.msra.mxu0 0
          %487 = vmatprep.mubr.bf16.mxu0 0
          %488 = vmatmul.mubr.bf16.gmra.mrb[0].mxu0 %v449
          %v489 = vpop.f32.mrb[0].mxu0
          %v490 = vadd.f32 0.0, %v489
          %v491 = vpop.f32.mrb[0].mxu0
          %v492 = vpop.f32.mrb[0].mxu0
          %v493 = vpop.f32.mrb[0].mxu0
          %494 = vdwg.mxu0
          %v495 = vadd.f32 %v443, %v490
          %496 = vst.msk [vmem:[%s436] sm:$0xff] %vm362, %v495
          %497 = vst.msk [vmem:[%s410] sm:$0xff] %vm434, %v415
        $region49: #{transformer_forward.26} parent=43 // loop_footer
          %s355 = sadd.s32 1, %s351
        $region50: #{transformer_forward.26} parent=43 // loop_footer_branch
          %350 = sbr.rel target = $region46
        $region51: #{transformer_forward.26} parent=43 // loop_exit
          _
      $region44: #{transformer_forward.26} parent=31 // pred_fallthru
        _
      // Predicated region
      $region52: #{transformer_forward.26} parent=31 // pred_check
        _
      $region53: #{transformer_forward.26} parent=31 // pred_check_branch
        %499 = sbr.rel (%p305) target = $region55
      $region54: #{transformer_forward.26} parent=31 // pred_region
        %v500 = vlaneseq
        %v501 = vshrl.u32 %v500, 7
        %v502 = vstv %s298
        %v503 = vadd.s32 %v502, %v501
        %v504 = vlaneseq
        %v505 = vand.u32 %v504, 127
        %v506 = vstv %s300
        %v507 = vadd.s32 %v506, %v505
        %vm508 = vcmp.gt.s32.totalorder %v507, %v503
        %v509 = vsel %vm508, -inf, 0.0
        loop: start=0, step=1, limit=4
        $region56: #{transformer_forward.26} parent=54 // loop_pre_header
          _
        $region57: #{transformer_forward.26} parent=54 // loop_header
          %s511 = sphi 0, %s515
          %p512 = scmp.ge.s32.totalorder %s511, 4
        $region58: #{transformer_forward.26} parent=54 // loop_header_branch
          %514 = sbr.rel (%p512) target = $region62
        $region59: #{transformer_forward.26} parent=54 // loop_body
          %s516 = smul.addr %s511, 4
          %s517 = scalar_lea.vmem [#allocation2], %s516
          %v518 = vld [vmem:[%s517] sm:$0xf]
          %s519 = smul.addr %s511, 4
          %s520 = scalar_lea.vmem [#allocation3], %s519
          %v521 = vld [vmem:[%s520] sm:$0xf]
          %vm522 = vcmask 64512
          %v524 = vsel %vm522, %v518, 0
          %v527 = vsel %vm522, %v521, 0
          %529 = vmatprep.subr.bf16.mxu0 0
          %530 = vmatpush1.bf16.xpose.msra.mxu0 %v527
          %531 = vmatprep.subr.bf16.mxu0 0
          %532 = vmatpush1.bf16.xpose.msra.mxu0 0
          %533 = vmatprep.subr.bf16.mxu0 0
          %534 = vmatpush1.bf16.xpose.msra.mxu0 0
          %535 = vmatprep.subr.bf16.mxu0 0
          %536 = vmatpush1.bf16.xpose.msra.mxu0 0
          %537 = vmatprep.subr.bf16.mxu0 0
          %538 = vmatpush1.bf16.xpose.msra.mxu0 0
          %539 = vmatprep.subr.bf16.mxu0 0
          %540 = vmatpush1.bf16.xpose.msra.mxu0 0
          %541 = vmatprep.subr.bf16.mxu0 0
          %542 = vmatpush1.bf16.xpose.msra.mxu0 0
          %543 = vmatprep.subr.bf16.mxu0 0
          %544 = vmatpush1.bf16.xpose.msra.mxu0 0
          %545 = vmatprep.subr.bf16.mxu0 0
          %546 = vmatpush1.bf16.xpose.msra.mxu0 0
          %547 = vmatprep.subr.bf16.mxu0 0
          %548 = vmatpush1.bf16.xpose.msra.mxu0 0
          %549 = vmatprep.subr.bf16.mxu0 0
          %550 = vmatpush1.bf16.xpose.msra.mxu0 0
          %551 = vmatprep.subr.bf16.mxu0 0
          %552 = vmatpush1.bf16.xpose.msra.mxu0 0
          %553 = vmatprep.subr.bf16.mxu0 0
          %554 = vmatpush1.bf16.xpose.msra.mxu0 0
          %555 = vmatprep.subr.bf16.mxu0 0
          %556 = vmatpush1.bf16.xpose.msra.mxu0 0
          %557 = vmatprep.subr.bf16.mxu0 0
          %558 = vmatpush1.bf16.xpose.msra.mxu0 0
          %559 = vmatprep.subr.bf16.mxu0 0
          %560 = vmatpush1.bf16.xpose.msra.mxu0 0
          %561 = vmatprep.mubr.bf16.mxu0 0
          %562 = vmatmul.mubr.bf16.gmra.mrb[0].mxu0 %v524
          %v563 = vpop.f32.mrb[0].mxu0
          %v564 = vadd.f32 %v509, %v563
          %v565 = vpop.f32.mrb[0].mxu0
          %v566 = vpop.f32.mrb[0].mxu0
          %v567 = vpop.f32.mrb[0].mxu0
          %568 = vdwg.mxu0
          %s569 = smul.u32 %s511, 8
          %s570 = scalar_lea.vmem [#allocation5], %s569
          %v571 = vld [vmem:[%s570] sm:$0xff]
          %v572 = vsel %vm522, %v564, -inf
          %573 = vmax.xlane.f32.xlu0 %v572
          %v574 = vpop.xlane.xlu0 %573
          %v575 = vmax.f32 %v571, %v574
          %v576 = vsub.f32 %v571, %v575
          %v577 = vmul.f32 %v576, 1.442695
          %v578 = vpow.pop %v577
          %580 = vset.pattern.permute.xlu0 0
          %581 = vperm.xlu0 %580, %v575
          %v582 = vpop.permute.xlu0 %581
          %v584 = vsub.f32 %v564, %v582
          %v585 = vmul.f32 %v584, 1.442695
          %v586 = vpow.pop %v585
          %s587 = scalar_lea.vmem [#allocation6], %s569
          %v588 = vld [vmem:[%s587] sm:$0xff]
          %v589 = vmul.f32 %v578, %v588
          %v590 = vsel %vm522, %v586, 0.0
          %591 = vadd.xlane.f32.xlu0 %v590
          %v592 = vpop.xlane.xlu0 %591
          %v593 = vadd.f32 %v589, %v592
          %vm594 = vcmask 7168
          %595 = vst.msk [vmem:[%s587] sm:$0xff] %vm594, %v593
          %s596 = scalar_lea.vmem [#allocation7], %s569
          %v597 = vld [vmem:[%s596] sm:$0xff]
          %599 = vset.pattern.permute.xlu0 0
          %600 = vperm.xlu0 %599, %v578
          %v601 = vpop.permute.xlu0 %600
          %v603 = vmul.f32 %v601, %v597
          %v604 = vpack.c.bf16 %v586, %v586
          %s605 = smul.addr %s511, 4
          %s606 = scalar_lea.vmem [#allocation4], %s605
          %v607 = vld [vmem:[%s606] sm:$0xf]
          %v609 = vsel %vm522, %v604, 0
          %vm611 = vcmask 1043456
          %v613 = vsel %vm611, %v607, 0
          %615 = vmatprep.subr.bf16.mxu0 0
          %616 = vmatpush1.bf16.msra.mxu0 %v613
          %617 = vmatprep.subr.bf16.mxu0 0
          %618 = vmatpush1.bf16.msra.mxu0 0
          %619 = vmatprep.subr.bf16.mxu0 0
          %620 = vmatpush1.bf16.msra.mxu0 0
          %621 = vmatprep.subr.bf16.mxu0 0
          %622 = vmatpush1.bf16.msra.mxu0 0
          %623 = vmatprep.subr.bf16.mxu0 0
          %624 = vmatpush1.bf16.msra.mxu0 0
          %625 = vmatprep.subr.bf16.mxu0 0
          %626 = vmatpush1.bf16.msra.mxu0 0
          %627 = vmatprep.subr.bf16.mxu0 0
          %628 = vmatpush1.bf16.msra.mxu0 0
          %629 = vmatprep.subr.bf16.mxu0 0
          %630 = vmatpush1.bf16.msra.mxu0 0
          %631 = vmatprep.subr.bf16.mxu0 0
          %632 = vmatpush1.bf16.msra.mxu0 0
          %633 = vmatprep.subr.bf16.mxu0 0
          %634 = vmatpush1.bf16.msra.mxu0 0
          %635 = vmatprep.subr.bf16.mxu0 0
          %636 = vmatpush1.bf16.msra.mxu0 0
          %637 = vmatprep.subr.bf16.mxu0 0
          %638 = vmatpush1.bf16.msra.mxu0 0
          %639 = vmatprep.subr.bf16.mxu0 0
          %640 = vmatpush1.bf16.msra.mxu0 0
          %641 = vmatprep.subr.bf16.mxu0 0
          %642 = vmatpush1.bf16.msra.mxu0 0
          %643 = vmatprep.subr.bf16.mxu0 0
          %644 = vmatpush1.bf16.msra.mxu0 0
          %645 = vmatprep.subr.bf16.mxu0 0
          %646 = vmatpush1.bf16.msra.mxu0 0
          %647 = vmatprep.mubr.bf16.mxu0 0
          %648 = vmatmul.mubr.bf16.gmra.mrb[0].mxu0 %v609
          %v649 = vpop.f32.mrb[0].mxu0
          %v650 = vadd.f32 0.0, %v649
          %v651 = vpop.f32.mrb[0].mxu0
          %v652 = vpop.f32.mrb[0].mxu0
          %v653 = vpop.f32.mrb[0].mxu0
          %654 = vdwg.mxu0
          %v655 = vadd.f32 %v603, %v650
          %656 = vst.msk [vmem:[%s596] sm:$0xff] %vm522, %v655
          %657 = vst.msk [vmem:[%s570] sm:$0xff] %vm594, %v575
        $region60: #{transformer_forward.26} parent=54 // loop_footer
          %s515 = sadd.s32 1, %s511
        $region61: #{transformer_forward.26} parent=54 // loop_footer_branch
          %510 = sbr.rel target = $region57
        $region62: #{transformer_forward.26} parent=54 // loop_exit
          _
      $region55: #{transformer_forward.26} parent=31 // pred_fallthru
        _
      // Predicated region
      $region63: #{transformer_forward.26} parent=31 // pred_check
        %p658 = pneg %p261
      $region64: #{transformer_forward.26} parent=31 // pred_check_branch
        %660 = sbr.rel (%p658) target = $region66
      $region65: #{transformer_forward.26} parent=31 // pred_region
        %v661 = vld [vmem:[#allocation7] sm:$0xff]
        %v662 = vld [vmem:[#allocation6] sm:$0xff]
        %664 = vset.pattern.permute.xlu0 0
        %665 = vperm.xlu0 %664, %v662
        %v666 = vpop.permute.xlu0 %665
        %v668 = vrcp.pop %v666
        %v669 = vmul.f32 %v661, %v668
        %v670 = vpack.c.bf16 %v669, %v669
        %vm671 = vcmask 60416
        %672 = vst.msk [vmem:[%s259] sm:$0xf] %vm671, %v670
        %s673 = scalar_lea.vmem [#allocation7], 8
        %v674 = vld [vmem:[%s673] sm:$0xff]
        %s675 = scalar_lea.vmem [#allocation6], 8
        %v676 = vld [vmem:[%s675] sm:$0xff]
        %678 = vset.pattern.permute.xlu0 0
        %679 = vperm.xlu0 %678, %v676
        %v680 = vpop.permute.xlu0 %679
        %v682 = vrcp.pop %v680
        %v683 = vmul.f32 %v674, %v682
        %v684 = vpack.c.bf16 %v683, %v683
        %v686 = vunpack.c.l.b16 %v684
        %v687 = vpack.c.b16 %v686, %v686
        %688 = vrot.lane.b32.xlu0 %v687, 8
        %v689 = vpop.permute.xlu0 %688
        %vm691 = vcmask 126016
        %692 = vst.msk [vmem:[%s259] sm:$0xf] %vm691, %v689
        %s693 = scalar_lea.vmem [#allocation7], 16
        %v694 = vld [vmem:[%s693] sm:$0xff]
        %s695 = scalar_lea.vmem [#allocation6], 16
        %v696 = vld [vmem:[%s695] sm:$0xff]
        %698 = vset.pattern.permute.xlu0 0
        %699 = vperm.xlu0 %698, %v696
        %v700 = vpop.permute.xlu0 %699
        %v702 = vrcp.pop %v700
        %v703 = vmul.f32 %v694, %v702
        %v704 = vpack.c.bf16 %v703, %v703
        %v706 = vunpack.c.l.b16 %v704
        %v707 = vpack.c.b16 %v706, %v706
        %708 = vrot.lane.b32.xlu0 %v707, 16
        %v709 = vpop.permute.xlu0 %708
        %vm711 = vcmask 191616
        %712 = vst.msk [vmem:[%s259] sm:$0xf] %vm711, %v709
        %s713 = scalar_lea.vmem [#allocation7], 24
        %v714 = vld [vmem:[%s713] sm:$0xff]
        %s715 = scalar_lea.vmem [#allocation6], 24
        %v716 = vld [vmem:[%s715] sm:$0xff]
        %718 = vset.pattern.permute.xlu0 0
        %719 = vperm.xlu0 %718, %v716
        %v720 = vpop.permute.xlu0 %719
        %v722 = vrcp.pop %v720
        %v723 = vmul.f32 %v714, %v722
        %v724 = vpack.c.bf16 %v723, %v723
        %v726 = vunpack.c.l.b16 %v724
        %v727 = vpack.c.b16 %v726, %v726
        %728 = vrot.lane.b32.xlu0 %v727, 24
        %v729 = vpop.permute.xlu0 %728
        %vm731 = vcmask 257216
        %732 = vst.msk [vmem:[%s259] sm:$0xf] %vm731, %v729
      $region66: #{transformer_forward.26} parent=31 // pred_fallthru
        _
      %p733 = scmp.lt.s32.totalorder %s19, 1
      %s734 = scalar_select %p733, %s19, 1
      %p735 = scmp.lt.s32.totalorder %s20, 0
      %s736 = scalar_select %p735, %s20, 0
      %s737 = sadd.s32 %s736, %s734
      %s738 = smul.addr %s737, 4
      %s739 = scalar_lea.vmem %s3, %s738
      // Predicated region
      $region67: #{transformer_forward.26} parent=31 // pred_check
        %p740 = pneg %p137
      $region68: #{transformer_forward.26} parent=31 // pred_check_branch
        %742 = sbr.rel (%p740) target = $region70
      $region69: #{transformer_forward.26} parent=31 // pred_region
        _
      $region70: #{transformer_forward.26} parent=31 // pred_fallthru
        _
    $region32: #{transformer_forward.26} parent=5 // pred_fallthru
      _
    %p743 = scmp.le.s32.totalorder 2, %s9
    // Predicated region
    $region71: #{transformer_forward.26} parent=5 // pred_check
      %p744 = pneg %p743
    $region72: #{transformer_forward.26} parent=5 // pred_check_branch
      %746 = sbr.rel (%p744) target = $region74
    $region73: #{transformer_forward.26} parent=5 // pred_region
      %s747 = ssub.s32 %s9, 2
      // Predicated region
      $region75: #{transformer_forward.26} parent=73 // pred_check
        %p748 = pneg %p143
      $region76: #{transformer_forward.26} parent=73 // pred_check_branch
        %750 = sbr.rel (%p748) target = $region78
      $region77: #{transformer_forward.26} parent=73 // pred_region
        %p751 = scmp.lt.s32.totalorder %s22, 1
        %s752 = scalar_select %p751, %s22, 1
        %p753 = scmp.lt.s32.totalorder %s23, 0
        %s754 = scalar_select %p753, %s23, 0
        %s755 = sadd.s32 %s754, %s752
        %s756 = smul.addr %s755, 4
        %s757 = scalar_lea.vmem %s3, %s756
      $region78: #{transformer_forward.26} parent=73 // pred_fallthru
        _
    $region74: #{transformer_forward.26} parent=5 // pred_fallthru
      _
  $region6: #{transformer_forward.26} parent=0 // loop_footer
    %s13 = sadd.s32 1, %s9
  $region7: #{transformer_forward.26} parent=0 // loop_footer_branch
    %8 = sbr.rel target = $region3
  $region8: #{transformer_forward.26} parent=0 // loop_exit
    _

// kernel: transformer_forward.36
$region0: #{transformer_forward.36}
  #allocation0 [shape = 'u32[]', space=smem, size = 0x4, offset = 0x4, fixed_abs, tag = 'smem constant byte address 0x4 - core index']
  #allocation1 [shape = 'u32[144,128]{1,0:T(1,128)}', space=vmem, size = 0x12000, scoped, tag = 'internal scratch']
  #allocation2 [shape = 'f32[16,32]{1,0:T(8,128)}', space=vmem, size = 0x2000, scoped, tag = 'scratch operand']
  %s0 = inlined_call_operand.vmem [shape: bf16[16,32], index: 0, kind: input, shape index: {}]
  %s1 = inlined_call_operand.vmem [shape: bf16[32,32], index: 1, kind: input, shape index: {}]
  %s2 = inlined_call_operand.vmem [shape: f32[1,32], index: 2, kind: input, shape index: {}]
  %s3 = inlined_call_operand.vmem [shape: bf16[16,32], index: 3, kind: output, shape index: {}]
  %s4 = sld [smem:[#allocation0]]
  $region30: #{transformer_forward.36} parent=0
    _
  %s6 = ssub.s32 1, %s4
  %s7 = scalar_select 0, %s6, %s4
  // Predicated region
  $region2: #{transformer_forward.36} parent=0 // pred_check
    _
  $region3: #{transformer_forward.36} parent=0 // pred_check_branch
    %9 = sbr.rel (0) target = $region5
  $region4: #{transformer_forward.36} parent=0 // pred_region
    _
  $region5: #{transformer_forward.36} parent=0 // pred_fallthru
    _
  // Predicated region
  $region6: #{transformer_forward.36} parent=0 // pred_check
    _
  $region7: #{transformer_forward.36} parent=0 // pred_check_branch
    %11 = sbr.rel (0) target = $region9
  $region8: #{transformer_forward.36} parent=0 // pred_region
    _
  $region9: #{transformer_forward.36} parent=0 // pred_fallthru
    _
  // Predicated region
  $region10: #{transformer_forward.36} parent=0 // pred_check
    _
  $region11: #{transformer_forward.36} parent=0 // pred_check_branch
    %13 = sbr.rel (0) target = $region13
  $region12: #{transformer_forward.36} parent=0 // pred_region
    _
  $region13: #{transformer_forward.36} parent=0 // pred_fallthru
    _
  %p15 = scmp.eq.s32.totalorder 0, 0
  // Predicated region
  $region14: #{transformer_forward.36} parent=0 // pred_check
    %p16 = pneg %p15
  $region15: #{transformer_forward.36} parent=0 // pred_check_branch
    %18 = sbr.rel (%p16) target = $region17
  $region16: #{transformer_forward.36} parent=0 // pred_region
    %vm19 = vcmask 261120
    %20 = vst.msk [vmem:[#allocation2] sm:$0xff] %vm19, 0.0
    %21 = vst.msk [vmem:[#allocation2 + $0x8] sm:$0xff] %vm19, 0.0
  $region17: #{transformer_forward.36} parent=0 // pred_fallthru
    _
  %v22 = vld [vmem:[#allocation2] sm:$0xff]
  %v23 = vld [vmem:[#allocation2 + $0x8] sm:$0xff]
  %v24 = vld [vmem:[%s0] sm:$0xf]
  %v25 = vld [vmem:[%s0 + $0x4] sm:$0xf]
  %v26 = vld [vmem:[%s1] sm:$0xf]
  %v27 = vld [vmem:[%s1 + $0x4] sm:$0xf]
  %v28 = vld [vmem:[%s1 + $0x8] sm:$0xf]
  %v29 = vld [vmem:[%s1 + $0xc] sm:$0xf]
  %v32 = vunpack.c.l.b16 %v24
  %v33 = vunpack.c.l.b16 %v25
  %v34 = vpack.c.b16 %v33, %v32
  %v39 = vunpack.c.l.b16 %v26
  %v40 = vunpack.c.l.b16 %v27
  %v41 = vunpack.c.l.b16 %v28
  %v42 = vunpack.c.l.b16 %v29
  %v43 = vpack.c.b16 %v40, %v39
  %v44 = vpack.c.b16 %v42, %v41
  %vm47 = vcmask 261120
  %v49 = vsel %vm47, %v34, 0
  %51 = vmatprep.subr.bf16.mxu0 0
  %52 = vmatpush1.bf16.msra.mxu0 %v43
  %53 = vmatprep.subr.bf16.mxu0 0
  %54 = vmatpush1.bf16.msra.mxu0 %v44
  %55 = vmatprep.subr.bf16.mxu0 0
  %56 = vmatpush1.bf16.msra.mxu0 0
  %57 = vmatprep.subr.bf16.mxu0 0
  %58 = vmatpush1.bf16.msra.mxu0 0
  %59 = vmatprep.subr.bf16.mxu0 0
  %60 = vmatpush1.bf16.msra.mxu0 0
  %61 = vmatprep.subr.bf16.mxu0 0
  %62 = vmatpush1.bf16.msra.mxu0 0
  %63 = vmatprep.subr.bf16.mxu0 0
  %64 = vmatpush1.bf16.msra.mxu0 0
  %65 = vmatprep.subr.bf16.mxu0 0
  %66 = vmatpush1.bf16.msra.mxu0 0
  %67 = vmatprep.subr.bf16.mxu0 0
  %68 = vmatpush1.bf16.msra.mxu0 0
  %69 = vmatprep.subr.bf16.mxu0 0
  %70 = vmatpush1.bf16.msra.mxu0 0
  %71 = vmatprep.subr.bf16.mxu0 0
  %72 = vmatpush1.bf16.msra.mxu0 0
  %73 = vmatprep.subr.bf16.mxu0 0
  %74 = vmatpush1.bf16.msra.mxu0 0
  %75 = vmatprep.subr.bf16.mxu0 0
  %76 = vmatpush1.bf16.msra.mxu0 0
  %77 = vmatprep.subr.bf16.mxu0 0
  %78 = vmatpush1.bf16.msra.mxu0 0
  %79 = vmatprep.subr.bf16.mxu0 0
  %80 = vmatpush1.bf16.msra.mxu0 0
  %81 = vmatprep.subr.bf16.mxu0 0
  %82 = vmatpush1.bf16.msra.mxu0 0
  %83 = vmatprep.mubr.bf16.mxu0 0
  %84 = vmatmul.mubr.bf16.gmra.mrb[0].mxu0 %v49
  %v85 = vpop.f32.mrb[0].mxu0
  %v86 = vadd.f32 0.0, %v85
  %v87 = vpop.f32.mrb[0].mxu0
  %v88 = vpop.f32.mrb[0].mxu0
  %v89 = vadd.f32 0.0, %v88
  %v90 = vpop.f32.mrb[0].mxu0
  %91 = vdwg.mxu0
  %v92 = vadd.f32 %v22, %v86
  %v93 = vadd.f32 %v23, %v89
  %94 = vst.msk [vmem:[#allocation2] sm:$0xff] %vm47, %v92
  %95 = vst.msk [vmem:[#allocation2 + $0x8] sm:$0xff] %vm47, %v93
  // Predicated region
  $region18: #{transformer_forward.36} parent=0 // pred_check
    %p96 = pneg %p15
  $region19: #{transformer_forward.36} parent=0 // pred_check_branch
    %98 = sbr.rel (%p96) target = $region21
  $region20: #{transformer_forward.36} parent=0 // pred_region
    %v99 = vld [vmem:[#allocation2] sm:$0xff]
    %v100 = vld [vmem:[#allocation2 + $0x8] sm:$0xff]
    %v101 = vld [vmem:[%s2] sm:$0x1]
    %v103 = vlaneseq
    %v104 = vshrl.u32 %v103, 7
    %v105 = vsub.s32 0, %v104
    %v106 = vrot.slane %v101, %v105
    %v108 = vadd.f32 %v99, %v106
    %v109 = vadd.f32 %v100, %v106
    %v110 = vpack.c.bf16 %v109, %v108
    %v112 = vunpack.c.l.b16 %v110
    %v113 = vunpack.c.h.b16 %v110
    %v114 = vpack.c.b16 %v112, %v112
    %v115 = vpack.c.b16 %v113, %v113
    %vm118 = vcmask 257024
    %119 = vst.msk [vmem:[%s3] sm:$0xf] %vm118, %v114
    %120 = vst.msk [vmem:[%s3 + $0x4] sm:$0xf] %vm118, %v115
  $region21: #{transformer_forward.36} parent=0 // pred_fallthru
    _
  // Predicated region
  $region22: #{transformer_forward.36} parent=0 // pred_check
    _
  $region23: #{transformer_forward.36} parent=0 // pred_check_branch
    %122 = sbr.rel (0) target = $region25
  $region24: #{transformer_forward.36} parent=0 // pred_region
    _
  $region25: #{transformer_forward.36} parent=0 // pred_fallthru
    _
  // Predicated region
  $region26: #{transformer_forward.36} parent=0 // pred_check
    _
  $region27: #{transformer_forward.36} parent=0 // pred_check_branch
    %124 = sbr.rel (0) target = $region29
  $region28: #{transformer_forward.36} parent=0 // pred_region
    _
  $region29: #{transformer_forward.36} parent=0 // pred_fallthru
    _

// kernel: transformer_forward.37
$region0: #{transformer_forward.37}
  #allocation0 [shape = 'u32[]', space=smem, size = 0x4, offset = 0x4, fixed_abs, tag = 'smem constant byte address 0x4 - core index']
  #allocation1 [shape = 'u32[144,128]{1,0:T(1,128)}', space=vmem, size = 0x12000, scoped, tag = 'internal scratch']
  #allocation2 [shape = 'f32[16,32]{1,0:T(8,128)}', space=vmem, size = 0x2000, scoped, tag = 'scratch operand']
  #allocation3 [shape = 'f32[16,32]{1,0:T(8,128)}', space=vmem, size = 0x2000, scoped, tag = 'scratch operand']
  %s0 = inlined_call_operand.vmem [shape: bf16[16,32], index: 0, kind: input, shape index: {}]
  %s1 = inlined_call_operand.vmem [shape: bf16[32,32], index: 1, kind: input, shape index: {}]
  %s2 = inlined_call_operand.vmem [shape: bf16[32,32], index: 2, kind: input, shape index: {}]
  %s3 = inlined_call_operand.vmem [shape: f32[1,32], index: 3, kind: input, shape index: {}]
  %s4 = inlined_call_operand.vmem [shape: f32[1,32], index: 4, kind: input, shape index: {}]
  %s5 = inlined_call_operand.vmem [shape: bf16[16,32], index: 5, kind: output, shape index: {0}]
  %s6 = inlined_call_operand.vmem [shape: bf16[16,32], index: 6, kind: output, shape index: {1}]
  %7 = xla_tuple %s5, %s6
  %s8 = sld [smem:[#allocation0]]
  $region46: #{transformer_forward.37} parent=0
    _
  %s10 = ssub.s32 1, %s8
  %s11 = scalar_select 0, %s10, %s8
  // Predicated region
  $region2: #{transformer_forward.37} parent=0 // pred_check
    _
  $region3: #{transformer_forward.37} parent=0 // pred_check_branch
    %13 = sbr.rel (0) target = $region5
  $region4: #{transformer_forward.37} parent=0 // pred_region
    _
  $region5: #{transformer_forward.37} parent=0 // pred_fallthru
    _
  // Predicated region
  $region6: #{transformer_forward.37} parent=0 // pred_check
    _
  $region7: #{transformer_forward.37} parent=0 // pred_check_branch
    %15 = sbr.rel (0) target = $region9
  $region8: #{transformer_forward.37} parent=0 // pred_region
    _
  $region9: #{transformer_forward.37} parent=0 // pred_fallthru
    _
  // Predicated region
  $region10: #{transformer_forward.37} parent=0 // pred_check
    _
  $region11: #{transformer_forward.37} parent=0 // pred_check_branch
    %17 = sbr.rel (0) target = $region13
  $region12: #{transformer_forward.37} parent=0 // pred_region
    _
  $region13: #{transformer_forward.37} parent=0 // pred_fallthru
    _
  // Predicated region
  $region14: #{transformer_forward.37} parent=0 // pred_check
    _
  $region15: #{transformer_forward.37} parent=0 // pred_check_branch
    %19 = sbr.rel (0) target = $region17
  $region16: #{transformer_forward.37} parent=0 // pred_region
    _
  $region17: #{transformer_forward.37} parent=0 // pred_fallthru
    _
  // Predicated region
  $region18: #{transformer_forward.37} parent=0 // pred_check
    _
  $region19: #{transformer_forward.37} parent=0 // pred_check_branch
    %21 = sbr.rel (0) target = $region21
  $region20: #{transformer_forward.37} parent=0 // pred_region
    _
  $region21: #{transformer_forward.37} parent=0 // pred_fallthru
    _
  %p23 = scmp.eq.s32.totalorder 0, 0
  // Predicated region
  $region22: #{transformer_forward.37} parent=0 // pred_check
    %p24 = pneg %p23
  $region23: #{transformer_forward.37} parent=0 // pred_check_branch
    %26 = sbr.rel (%p24) target = $region25
  $region24: #{transformer_forward.37} parent=0 // pred_region
    %vm27 = vcmask 261120
    %28 = vst.msk [vmem:[#allocation2] sm:$0xff] %vm27, 0.0
    %29 = vst.msk [vmem:[#allocation2 + $0x8] sm:$0xff] %vm27, 0.0
    %30 = vst.msk [vmem:[#allocation3] sm:$0xff] %vm27, 0.0
    %31 = vst.msk [vmem:[#allocation3 + $0x8] sm:$0xff] %vm27, 0.0
  $region25: #{transformer_forward.37} parent=0 // pred_fallthru
    _
  %v32 = vld [vmem:[%s0] sm:$0xf]
  %v33 = vld [vmem:[%s0 + $0x4] sm:$0xf]
  %v34 = vld [vmem:[#allocation2] sm:$0xff]
  %v35 = vld [vmem:[#allocation2 + $0x8] sm:$0xff]
  %v36 = vld [vmem:[%s1] sm:$0xf]
  %v37 = vld [vmem:[%s1 + $0x4] sm:$0xf]
  %v38 = vld [vmem:[%s1 + $0x8] sm:$0xf]
  %v39 = vld [vmem:[%s1 + $0xc] sm:$0xf]
  %v42 = vunpack.c.l.b16 %v32
  %v43 = vunpack.c.l.b16 %v33
  %v44 = vpack.c.b16 %v43, %v42
  %v49 = vunpack.c.l.b16 %v36
  %v50 = vunpack.c.l.b16 %v37
  %v51 = vunpack.c.l.b16 %v38
  %v52 = vunpack.c.l.b16 %v39
  %v53 = vpack.c.b16 %v50, %v49
  %v54 = vpack.c.b16 %v52, %v51
  %vm57 = vcmask 261120
  %v59 = vsel %vm57, %v44, 0
  %61 = vmatprep.subr.bf16.mxu0 0
  %62 = vmatpush1.bf16.msra.mxu0 %v53
  %63 = vmatprep.subr.bf16.mxu0 0
  %64 = vmatpush1.bf16.msra.mxu0 %v54
  %65 = vmatprep.subr.bf16.mxu0 0
  %66 = vmatpush1.bf16.msra.mxu0 0
  %67 = vmatprep.subr.bf16.mxu0 0
  %68 = vmatpush1.bf16.msra.mxu0 0
  %69 = vmatprep.subr.bf16.mxu0 0
  %70 = vmatpush1.bf16.msra.mxu0 0
  %71 = vmatprep.subr.bf16.mxu0 0
  %72 = vmatpush1.bf16.msra.mxu0 0
  %73 = vmatprep.subr.bf16.mxu0 0
  %74 = vmatpush1.bf16.msra.mxu0 0
  %75 = vmatprep.subr.bf16.mxu0 0
  %76 = vmatpush1.bf16.msra.mxu0 0
  %77 = vmatprep.subr.bf16.mxu0 0
  %78 = vmatpush1.bf16.msra.mxu0 0
  %79 = vmatprep.subr.bf16.mxu0 0
  %80 = vmatpush1.bf16.msra.mxu0 0
  %81 = vmatprep.subr.bf16.mxu0 0
  %82 = vmatpush1.bf16.msra.mxu0 0
  %83 = vmatprep.subr.bf16.mxu0 0
  %84 = vmatpush1.bf16.msra.mxu0 0
  %85 = vmatprep.subr.bf16.mxu0 0
  %86 = vmatpush1.bf16.msra.mxu0 0
  %87 = vmatprep.subr.bf16.mxu0 0
  %88 = vmatpush1.bf16.msra.mxu0 0
  %89 = vmatprep.subr.bf16.mxu0 0
  %90 = vmatpush1.bf16.msra.mxu0 0
  %91 = vmatprep.subr.bf16.mxu0 0
  %92 = vmatpush1.bf16.msra.mxu0 0
  %93 = vmatprep.mubr.bf16.mxu0 0
  %94 = vmatmul.mubr.bf16.gmra.mrb[0].mxu0 %v59
  %v95 = vpop.f32.mrb[0].mxu0
  %v96 = vadd.f32 0.0, %v95
  %v97 = vpop.f32.mrb[0].mxu0
  %v98 = vpop.f32.mrb[0].mxu0
  %v99 = vadd.f32 0.0, %v98
  %v100 = vpop.f32.mrb[0].mxu0
  %101 = vdwg.mxu0
  %v102 = vadd.f32 %v34, %v96
  %v103 = vadd.f32 %v35, %v99
  %104 = vst.msk [vmem:[#allocation2] sm:$0xff] %vm57, %v102
  %105 = vst.msk [vmem:[#allocation2 + $0x8] sm:$0xff] %vm57, %v103
  %v106 = vld [vmem:[#allocation3] sm:$0xff]
  %v107 = vld [vmem:[#allocation3 + $0x8] sm:$0xff]
  %v108 = vld [vmem:[%s2] sm:$0xf]
  %v109 = vld [vmem:[%s2 + $0x4] sm:$0xf]
  %v110 = vld [vmem:[%s2 + $0x8] sm:$0xf]
  %v111 = vld [vmem:[%s2 + $0xc] sm:$0xf]
  %v116 = vunpack.c.l.b16 %v108
  %v117 = vunpack.c.l.b16 %v109
  %v118 = vunpack.c.l.b16 %v110
  %v119 = vunpack.c.l.b16 %v111
  %v120 = vpack.c.b16 %v117, %v116
  %v121 = vpack.c.b16 %v119, %v118
  %124 = vmatprep.subr.bf16.mxu0 0
  %125 = vmatpush1.bf16.msra.mxu0 %v120
  %126 = vmatprep.subr.bf16.mxu0 0
  %127 = vmatpush1.bf16.msra.mxu0 %v121
  %128 = vmatprep.subr.bf16.mxu0 0
  %129 = vmatpush1.bf16.msra.mxu0 0
  %130 = vmatprep.subr.bf16.mxu0 0
  %131 = vmatpush1.bf16.msra.mxu0 0
  %132 = vmatprep.subr.bf16.mxu0 0
  %133 = vmatpush1.bf16.msra.mxu0 0
  %134 = vmatprep.subr.bf16.mxu0 0
  %135 = vmatpush1.bf16.msra.mxu0 0
  %136 = vmatprep.subr.bf16.mxu0 0
  %137 = vmatpush1.bf16.msra.mxu0 0
  %138 = vmatprep.subr.bf16.mxu0 0
  %139 = vmatpush1.bf16.msra.mxu0 0
  %140 = vmatprep.subr.bf16.mxu0 0
  %141 = vmatpush1.bf16.msra.mxu0 0
  %142 = vmatprep.subr.bf16.mxu0 0
  %143 = vmatpush1.bf16.msra.mxu0 0
  %144 = vmatprep.subr.bf16.mxu0 0
  %145 = vmatpush1.bf16.msra.mxu0 0
  %146 = vmatprep.subr.bf16.mxu0 0
  %147 = vmatpush1.bf16.msra.mxu0 0
  %148 = vmatprep.subr.bf16.mxu0 0
  %149 = vmatpush1.bf16.msra.mxu0 0
  %150 = vmatprep.subr.bf16.mxu0 0
  %151 = vmatpush1.bf16.msra.mxu0 0
  %152 = vmatprep.subr.bf16.mxu0 0
  %153 = vmatpush1.bf16.msra.mxu0 0
  %154 = vmatprep.subr.bf16.mxu0 0
  %155 = vmatpush1.bf16.msra.mxu0 0
  %156 = vmatprep.mubr.bf16.mxu0 0
  %157 = vmatmul.mubr.bf16.gmra.mrb[0].mxu0 %v59
  %v158 = vpop.f32.mrb[0].mxu0
  %v159 = vadd.f32 0.0, %v158
  %v160 = vpop.f32.mrb[0].mxu0
  %v161 = vpop.f32.mrb[0].mxu0
  %v162 = vadd.f32 0.0, %v161
  %v163 = vpop.f32.mrb[0].mxu0
  %164 = vdwg.mxu0
  %v165 = vadd.f32 %v106, %v159
  %v166 = vadd.f32 %v107, %v162
  %167 = vst.msk [vmem:[#allocation3] sm:$0xff] %vm57, %v165
  %168 = vst.msk [vmem:[#allocation3 + $0x8] sm:$0xff] %vm57, %v166
  // Predicated region
  $region26: #{transformer_forward.37} parent=0 // pred_check
    %p169 = pneg %p23
  $region27: #{transformer_forward.37} parent=0 // pred_check_branch
    %171 = sbr.rel (%p169) target = $region29
  $region28: #{transformer_forward.37} parent=0 // pred_region
    %v172 = vld [vmem:[#allocation2] sm:$0xff]
    %v173 = vld [vmem:[#allocation2 + $0x8] sm:$0xff]
    %v174 = vld [vmem:[%s3] sm:$0x1]
    %v176 = vlaneseq
    %v177 = vshrl.u32 %v176, 7
    %v178 = vsub.s32 0, %v177
    %v179 = vrot.slane %v174, %v178
    %v181 = vadd.f32 %v172, %v179
    %v182 = vadd.f32 %v173, %v179
    %v183 = vpack.c.bf16 %v182, %v181
    %v185 = vunpack.c.l.b16 %v183
    %v186 = vunpack.c.h.b16 %v183
    %v187 = vpack.c.b16 %v185, %v185
    %v188 = vpack.c.b16 %v186, %v186
    %vm191 = vcmask 257024
    %192 = vst.msk [vmem:[%s5] sm:$0xf] %vm191, %v187
    %193 = vst.msk [vmem:[%s5 + $0x4] sm:$0xf] %vm191, %v188
    %v194 = vld [vmem:[#allocation3] sm:$0xff]
    %v195 = vld [vmem:[#allocation3 + $0x8] sm:$0xff]
    %v196 = vld [vmem:[%s4] sm:$0x1]
    %v198 = vlaneseq
    %v199 = vshrl.u32 %v198, 7
    %v200 = vsub.s32 0, %v199
    %v201 = vrot.slane %v196, %v200
    %v203 = vadd.f32 %v194, %v201
    %v204 = vadd.f32 %v195, %v201
    %v205 = vpack.c.bf16 %v204, %v203
    %v207 = vunpack.c.l.b16 %v205
    %v208 = vunpack.c.h.b16 %v205
    %v209 = vpack.c.b16 %v207, %v207
    %v210 = vpack.c.b16 %v208, %v208
    %213 = vst.msk [vmem:[%s6] sm:$0xf] %vm191, %v209
    %214 = vst.msk [vmem:[%s6 + $0x4] sm:$0xf] %vm191, %v210
  $region29: #{transformer_forward.37} parent=0 // pred_fallthru
    _
  // Predicated region
  $region30: #{transformer_forward.37} parent=0 // pred_check
    _
  $region31: #{transformer_forward.37} parent=0 // pred_check_branch
    %216 = sbr.rel (0) target = $region33
  $region32: #{transformer_forward.37} parent=0 // pred_region
    _
  $region33: #{transformer_forward.37} parent=0 // pred_fallthru
    _
  // Predicated region
  $region34: #{transformer_forward.37} parent=0 // pred_check
    _
  $region35: #{transformer_forward.37} parent=0 // pred_check_branch
    %218 = sbr.rel (0) target = $region37
  $region36: #{transformer_forward.37} parent=0 // pred_region
    _
  $region37: #{transformer_forward.37} parent=0 // pred_fallthru
    _
  // Predicated region
  $region38: #{transformer_forward.37} parent=0 // pred_check
    _
  $region39: #{transformer_forward.37} parent=0 // pred_check_branch
    %220 = sbr.rel (0) target = $region41
  $region40: #{transformer_forward.37} parent=0 // pred_region
    _
  $region41: #{transformer_forward.37} parent=0 // pred_fallthru
    _
  // Predicated region
  $region42: #{transformer_forward.37} parent=0 // pred_check
    _
  $region43: #{transformer_forward.37} parent=0 // pred_check_branch
    %222 = sbr.rel (0) target = $region45
  $region44: #{transformer_forward.37} parent=0 // pred_region
    _
  $region45: #{transformer_forward.37} parent=0 // pred_fallthru
    _

// kernel: transformer_forward.38
$region0: #{transformer_forward.38}
  #allocation0 [shape = 'u32[]', space=smem, size = 0x4, offset = 0x4, fixed_abs, tag = 'smem constant byte address 0x4 - core index']
  #allocation1 [shape = 'u32[144,128]{1,0:T(1,128)}', space=vmem, size = 0x12000, scoped, tag = 'internal scratch']
  #allocation2 [shape = 'bf16[4,8,8]{2,1,0:T(8,128)(2,1)}', space=vmem, size = 0x2000, scoped, tag = 'scratch operand']
  #allocation3 [shape = 'bf16[4,8,8]{2,1,0:T(8,128)(2,1)}', space=vmem, size = 0x2000, scoped, tag = 'scratch operand']
  #allocation4 [shape = 'bf16[4,8,8]{2,1,0:T(8,128)(2,1)}', space=vmem, size = 0x2000, scoped, tag = 'scratch operand']
  #allocation5 [shape = 'f32[4,8,1]{2,1,0:T(8,128)}', space=vmem, size = 0x4000, scoped, tag = 'scratch operand']
  #allocation6 [shape = 'f32[4,8,1]{2,1,0:T(8,128)}', space=vmem, size = 0x4000, scoped, tag = 'scratch operand']
  #allocation7 [shape = 'f32[4,8,8]{2,1,0:T(8,128)}', space=vmem, size = 0x4000, scoped, tag = 'scratch operand']
  %s0 = inlined_call_operand.vmem [shape: bf16[2,8,32], index: 0, kind: input, shape index: {}]
  %s1 = inlined_call_operand.vmem [shape: bf16[2,8,32], index: 1, kind: input, shape index: {}]
  %s2 = inlined_call_operand.vmem [shape: bf16[2,8,32], index: 2, kind: input, shape index: {}]
  %s3 = inlined_call_operand.vmem [shape: bf16[2,8,32], index: 3, kind: output, shape index: {}]
  %s4 = sld [smem:[#allocation0]]
  $region60: #{transformer_forward.38} parent=0
    _
  %s6 = ssub.s32 1, %s4
  %s7 = scalar_select 0, %s6, %s4
  loop: start=0, step=1, limit=4
  $region2: #{transformer_forward.38} parent=0 // loop_pre_header
    _
  $region3: #{transformer_forward.38} parent=0 // loop_header
    %s9 = sphi 0, %s13
    %p10 = scmp.ge.s32.totalorder %s9, 4
    %s16 = sphi 0, %s35
    %s17 = sphi 0, %s31
    %s18 = sphi 0, %s27
    %s19 = sphi 0, %s16
    %s20 = sphi 0, %s17
    %s21 = sphi 0, %s18
    %s22 = sphi 0, %s19
    %s23 = sphi 0, %s20
    %s24 = sphi 0, %s21
    %s40 = sphi 0, %s42
    %s43 = sphi 0, %s40
    %s44 = sphi 0, %s43
    %s60 = sphi 0, %s44
    %s68 = sphi 0, %s70
    %s71 = sphi 0, %s68
    %s72 = sphi 0, %s71
    %s88 = sphi 0, %s72
    %s96 = sphi 0, %s98
    %s99 = sphi 0, %s96
    %s100 = sphi 0, %s99
    %s116 = sphi 0, %s100
    %s124 = sphi 0, %s126
    %s127 = sphi 0, %s124
    %s128 = sphi 0, %s127
    %s144 = sphi 0, %s128
  $region4: #{transformer_forward.38} parent=0 // loop_header_branch
    %12 = sbr.rel (%p10) target = $region8
  $region5: #{transformer_forward.38} parent=0 // loop_body
    %s14 = ssub.s32 %s9, 1
    %s15 = ssub.s32 %s9, 2
    %s25 = sadd.s32 1, %s18
    %p26 = scmp.ge.s32.totalorder %s25, 1
    %s27 = scalar_select %p26, 0, %s25
    %s28 = sadd.s32 1, %s17
    %s29 = scalar_select %p26, %s28, %s17
    %p30 = scmp.ge.s32.totalorder %s29, 1
    %s31 = scalar_select %p30, 0, %s29
    %s32 = sadd.s32 1, %s16
    %s33 = scalar_select %p30, %s32, %s16
    %p34 = scmp.ge.s32.totalorder %s33, 2
    %s35 = scalar_select %p34, 0, %s33
    %s36 = ssub.s32 %s16, %s35
    %s37 = ssub.s32 %s17, %s31
    %s38 = sor.u32 %s36, %s37
    %p39 = scmp.eq.s32.totalorder %s38, 0
    %s41 = sadd.s32 %s40, 1
    %s42 = scalar_select %p39, %s40, %s41
    %p45 = pneg %p39
    %p46 = scmp.eq.s32.totalorder %s9, 1
    %p47 = por %p45, %p46
    %p48 = scmp.ne.s32.totalorder %s40, %s43
    %p49 = scmp.eq.s32.totalorder %s9, 0
    %p50 = por %p48, %p49
    %p51 = scmp.ne.s32.totalorder %s40, %s43
    %p52 = scmp.eq.s32.totalorder %s14, 1
    %p53 = por %p51, %p52
    %p54 = scmp.ne.s32.totalorder %s43, %s44
    %p55 = scmp.eq.s32.totalorder %s14, 0
    %p56 = por %p54, %p55
    %p57 = scmp.ne.s32.totalorder %s43, %s44
    %p58 = scmp.eq.s32.totalorder %s15, 1
    %p59 = por %p57, %p58
    %p61 = scmp.ne.s32.totalorder %s44, %s60
    %p62 = scmp.eq.s32.totalorder %s15, 0
    %p63 = por %p61, %p62
    %s64 = ssub.s32 %s16, %s35
    %s65 = ssub.s32 %s18, %s27
    %s66 = sor.u32 %s64, %s65
    %p67 = scmp.eq.s32.totalorder %s66, 0
    %s69 = sadd.s32 %s68, 1
    %s70 = scalar_select %p67, %s68, %s69
    %p73 = pneg %p67
    %p74 = scmp.eq.s32.totalorder %s9, 1
    %p75 = por %p73, %p74
    %p76 = scmp.ne.s32.totalorder %s68, %s71
    %p77 = scmp.eq.s32.totalorder %s9, 0
    %p78 = por %p76, %p77
    %p79 = scmp.ne.s32.totalorder %s68, %s71
    %p80 = scmp.eq.s32.totalorder %s14, 1
    %p81 = por %p79, %p80
    %p82 = scmp.ne.s32.totalorder %s71, %s72
    %p83 = scmp.eq.s32.totalorder %s14, 0
    %p84 = por %p82, %p83
    %p85 = scmp.ne.s32.totalorder %s71, %s72
    %p86 = scmp.eq.s32.totalorder %s15, 1
    %p87 = por %p85, %p86
    %p89 = scmp.ne.s32.totalorder %s72, %s88
    %p90 = scmp.eq.s32.totalorder %s15, 0
    %p91 = por %p89, %p90
    %s92 = ssub.s32 %s16, %s35
    %s93 = ssub.s32 %s18, %s27
    %s94 = sor.u32 %s92, %s93
    %p95 = scmp.eq.s32.totalorder %s94, 0
    %s97 = sadd.s32 %s96, 1
    %s98 = scalar_select %p95, %s96, %s97
    %p101 = pneg %p95
    %p102 = scmp.eq.s32.totalorder %s9, 1
    %p103 = por %p101, %p102
    %p104 = scmp.ne.s32.totalorder %s96, %s99
    %p105 = scmp.eq.s32.totalorder %s9, 0
    %p106 = por %p104, %p105
    %p107 = scmp.ne.s32.totalorder %s96, %s99
    %p108 = scmp.eq.s32.totalorder %s14, 1
    %p109 = por %p107, %p108
    %p110 = scmp.ne.s32.totalorder %s99, %s100
    %p111 = scmp.eq.s32.totalorder %s14, 0
    %p112 = por %p110, %p111
    %p113 = scmp.ne.s32.totalorder %s99, %s100
    %p114 = scmp.eq.s32.totalorder %s15, 1
    %p115 = por %p113, %p114
    %p117 = scmp.ne.s32.totalorder %s100, %s116
    %p118 = scmp.eq.s32.totalorder %s15, 0
    %p119 = por %p117, %p118
    %s120 = ssub.s32 %s16, %s35
    %s121 = ssub.s32 %s17, %s31
    %s122 = sor.u32 %s120, %s121
    %p123 = scmp.eq.s32.totalorder %s122, 0
    %s125 = sadd.s32 %s124, 1
    %s126 = scalar_select %p123, %s124, %s125
    %p129 = pneg %p123
    %p130 = scmp.eq.s32.totalorder %s9, 1
    %p131 = por %p129, %p130
    %p132 = scmp.ne.s32.totalorder %s124, %s127
    %p133 = scmp.eq.s32.totalorder %s9, 0
    %p134 = por %p132, %p133
    %p135 = scmp.ne.s32.totalorder %s124, %s127
    %p136 = scmp.eq.s32.totalorder %s14, 1
    %p137 = por %p135, %p136
    %p138 = scmp.ne.s32.totalorder %s127, %s128
    %p139 = scmp.eq.s32.totalorder %s14, 0
    %p140 = por %p138, %p139
    %p141 = scmp.ne.s32.totalorder %s127, %s128
    %p142 = scmp.eq.s32.totalorder %s15, 1
    %p143 = por %p141, %p142
    %p145 = scmp.ne.s32.totalorder %s128, %s144
    %p146 = scmp.eq.s32.totalorder %s15, 0
    %p147 = por %p145, %p146
    %p148 = scmp.le.s32.totalorder 1, %s9
    %p149 = scmp.lt.s32.totalorder %s9, 3
    %p150 = pnand %p148, %p149
    %p151 = pneg %p150
    // Predicated region
    $region9: #{transformer_forward.38} parent=5 // pred_check
      _
    $region10: #{transformer_forward.38} parent=5 // pred_check_branch
      %153 = sbr.rel (%p150) target = $region12
    $region11: #{transformer_forward.38} parent=5 // pred_region
      %s154 = ssub.s32 %s9, 1
    $region12: #{transformer_forward.38} parent=5 // pred_fallthru
      _
    %p155 = scmp.lt.s32.totalorder %s9, 2
    // Predicated region
    $region13: #{transformer_forward.38} parent=5 // pred_check
      %p156 = pneg %p155
    $region14: #{transformer_forward.38} parent=5 // pred_check_branch
      %158 = sbr.rel (%p156) target = $region16
    $region15: #{transformer_forward.38} parent=5 // pred_region
      // Predicated region
      $region17: #{transformer_forward.38} parent=15 // pred_check
        %p159 = pneg %p50
      $region18: #{transformer_forward.38} parent=15 // pred_check_branch
        %161 = sbr.rel (%p159) target = $region20
      $region19: #{transformer_forward.38} parent=15 // pred_region
        %p162 = scmp.lt.s32.totalorder %s16, 1
        %s163 = scalar_select %p162, %s16, 1
        %p164 = scmp.lt.s32.totalorder %s17, 0
        %s165 = scalar_select %p164, %s17, 0
        %s166 = sadd.s32 %s165, %s163
        %s167 = smul.addr %s166, 4
        %s168 = scalar_lea.vmem %s0, %s167
      $region20: #{transformer_forward.38} parent=15 // pred_fallthru
        _
      // Predicated region
      $region21: #{transformer_forward.38} parent=15 // pred_check
        %p169 = pneg %p78
      $region22: #{transformer_forward.38} parent=15 // pred_check_branch
        %171 = sbr.rel (%p169) target = $region24
      $region23: #{transformer_forward.38} parent=15 // pred_region
        %p172 = scmp.lt.s32.totalorder %s16, 1
        %s173 = scalar_select %p172, %s16, 1
        %p174 = scmp.lt.s32.totalorder %s18, 0
        %s175 = scalar_select %p174, %s18, 0
        %s176 = sadd.s32 %s175, %s173
        %s177 = smul.addr %s176, 4
        %s178 = scalar_lea.vmem %s1, %s177
      $region24: #{transformer_forward.38} parent=15 // pred_fallthru
        _
      // Predicated region
      $region25: #{transformer_forward.38} parent=15 // pred_check
        %p179 = pneg %p106
      $region26: #{transformer_forward.38} parent=15 // pred_check_branch
        %181 = sbr.rel (%p179) target = $region28
      $region27: #{transformer_forward.38} parent=15 // pred_region
        %p182 = scmp.lt.s32.totalorder %s16, 1
        %s183 = scalar_select %p182, %s16, 1
        %p184 = scmp.lt.s32.totalorder %s18, 0
        %s185 = scalar_select %p184, %s18, 0
        %s186 = sadd.s32 %s185, %s183
        %s187 = smul.addr %s186, 4
        %s188 = scalar_lea.vmem %s2, %s187
      $region28: #{transformer_forward.38} parent=15 // pred_fallthru
        _
    $region16: #{transformer_forward.38} parent=5 // pred_fallthru
      _
    %p189 = scmp.le.s32.totalorder 1, %s9
    %p190 = scmp.lt.s32.totalorder %s9, 3
    %p191 = pnand %p189, %p190
    %p192 = pneg %p191
    // Predicated region
    $region29: #{transformer_forward.38} parent=5 // pred_check
      _
    $region30: #{transformer_forward.38} parent=5 // pred_check_branch
      %194 = sbr.rel (%p191) target = $region32
    $region31: #{transformer_forward.38} parent=5 // pred_region
      %s195 = ssub.s32 %s9, 1
      %p196 = scmp.lt.s32.totalorder %s19, 1
      %s197 = scalar_select %p196, %s19, 1
      %p198 = scmp.lt.s32.totalorder %s20, 0
      %s199 = scalar_select %p198, %s20, 0
      %s200 = sadd.s32 %s199, %s197
      %s201 = smul.addr %s200, 4
      %s202 = scalar_lea.vmem %s0, %s201
      %p203 = pneg %p56
      %p204 = pneg %p53
      %p205 = scmp.lt.s32.totalorder %s19, 1
      %s206 = scalar_select %p205, %s19, 1
      %p207 = scmp.lt.s32.totalorder %s21, 0
      %s208 = scalar_select %p207, %s21, 0
      %s209 = sadd.s32 %s208, %s206
      %s210 = smul.addr %s209, 4
      %s211 = scalar_lea.vmem %s1, %s210
      %p212 = pneg %p84
      %p213 = pneg %p81
      %p214 = scmp.lt.s32.totalorder %s19, 1
      %s215 = scalar_select %p214, %s19, 1
      %p216 = scmp.lt.s32.totalorder %s21, 0
      %s217 = scalar_select %p216, %s21, 0
      %s218 = sadd.s32 %s217, %s215
      %s219 = smul.addr %s218, 4
      %s220 = scalar_lea.vmem %s2, %s219
      %p221 = pneg %p112
      %p222 = pneg %p109
      %p223 = pneg %p140
      %p224 = pneg %p137
      %p225 = scmp.lt.s32.totalorder %s19, 1
      %s226 = scalar_select %p225, %s19, 1
      %p227 = scmp.lt.s32.totalorder %s20, 0
      %s228 = scalar_select %p227, %s20, 0
      %s229 = sadd.s32 %s228, %s226
      %s230 = smul.addr %s229, 4
      %s231 = scalar_lea.vmem %s3, %s230
      %p232 = scmp.lt.s32.totalorder %s19, 1
      %s233 = scalar_select %p232, %s19, 1
      %p234 = scmp.lt.s32.totalorder %s20, 0
      %s235 = scalar_select %p234, %s20, 0
      %s236 = sadd.s32 %s235, %s233
      %s237 = smul.addr %s236, 4
      %s238 = scalar_lea.vmem %s0, %s237
      %p239 = scmp.lt.s32.totalorder %s19, 1
      %s240 = scalar_select %p239, %s19, 1
      %p241 = scmp.lt.s32.totalorder %s21, 0
      %s242 = scalar_select %p241, %s21, 0
      %s243 = sadd.s32 %s242, %s240
      %s244 = smul.addr %s243, 4
      %s245 = scalar_lea.vmem %s1, %s244
      %p246 = scmp.lt.s32.totalorder %s19, 1
      %s247 = scalar_select %p246, %s19, 1
      %p248 = scmp.lt.s32.totalorder %s21, 0
      %s249 = scalar_select %p248, %s21, 0
      %s250 = sadd.s32 %s249, %s247
      %s251 = smul.addr %s250, 4
      %s252 = scalar_lea.vmem %s2, %s251
      %p253 = scmp.lt.s32.totalorder %s19, 1
      %s254 = scalar_select %p253, %s19, 1
      %p255 = scmp.lt.s32.totalorder %s20, 0
      %s256 = scalar_select %p255, %s20, 0
      %s257 = sadd.s32 %s256, %s254
      %s258 = smul.addr %s257, 4
      %s259 = scalar_lea.vmem %s3, %s258
      %p261 = scmp.eq.s32.totalorder %s21, 0
      // Predicated region
      $region33: #{transformer_forward.38} parent=31 // pred_check
        %p262 = pneg %p261
      $region34: #{transformer_forward.38} parent=31 // pred_check_branch
        %264 = sbr.rel (%p262) target = $region36
      $region35: #{transformer_forward.38} parent=31 // pred_region
        %vm265 = vcmask 7168
        %266 = vst.msk [vmem:[#allocation5] sm:$0xff] %vm265, -inf
        %267 = vst.msk [vmem:[#allocation5 + $0x8] sm:$0xff] %vm265, -inf
        %268 = vst.msk [vmem:[#allocation5 + $0x10] sm:$0xff] %vm265, -inf
        %269 = vst.msk [vmem:[#allocation5 + $0x18] sm:$0xff] %vm265, -inf
        %270 = vst.msk [vmem:[#allocation6] sm:$0xff] %vm265, 0.0
        %271 = vst.msk [vmem:[#allocation6 + $0x8] sm:$0xff] %vm265, 0.0
        %272 = vst.msk [vmem:[#allocation6 + $0x10] sm:$0xff] %vm265, 0.0
        %273 = vst.msk [vmem:[#allocation6 + $0x18] sm:$0xff] %vm265, 0.0
        %vm274 = vcmask 64512
        %275 = vst.msk [vmem:[#allocation7] sm:$0xff] %vm274, 0.0
        %276 = vst.msk [vmem:[#allocation7 + $0x8] sm:$0xff] %vm274, 0.0
        %277 = vst.msk [vmem:[#allocation7 + $0x10] sm:$0xff] %vm274, 0.0
        %278 = vst.msk [vmem:[#allocation7 + $0x18] sm:$0xff] %vm274, 0.0
        %v279 = vld [vmem:[%s238] sm:$0xf]
        %vm280 = vcmask 60416
        %281 = vst.msk [vmem:[#allocation2] sm:$0xf] %vm280, %v279
        %283 = vrot.lane.b32.xlu0 %v279, 120
        %v284 = vpop.permute.xlu0 %283
        %s286 = scalar_lea.vmem [#allocation2], 4
        %287 = vst.msk [vmem:[%s286] sm:$0xf] %vm280, %v284
        %288 = vrot.lane.b32.xlu0 %v279, 112
        %v289 = vpop.permute.xlu0 %288
        %s291 = scalar_lea.vmem [#allocation2], 8
        %292 = vst.msk [vmem:[%s291] sm:$0xf] %vm280, %v289
        %293 = vrot.lane.b32.xlu0 %v279, 104
        %v294 = vpop.permute.xlu0 %293
        %s296 = scalar_lea.vmem [#allocation2], 12
        %297 = vst.msk [vmem:[%s296] sm:$0xf] %vm280, %v294
      $region36: #{transformer_forward.38} parent=31 // pred_fallthru
        _
      %v298 = vld [vmem:[%s245] sm:$0xf]
      %v299 = vld [vmem:[%s252] sm:$0xf]
      %vm300 = vcmask 60416
      %301 = vst.msk [vmem:[#allocation3] sm:$0xf] %vm300, %v298
      %302 = vst.msk [vmem:[#allocation4] sm:$0xf] %vm300, %v299
      %304 = vrot.lane.b32.xlu0 %v298, 120
      %v305 = vpop.permute.xlu0 %304
      %s307 = scalar_lea.vmem [#allocation3], 4
      %308 = vst.msk [vmem:[%s307] sm:$0xf] %vm300, %v305
      %310 = vrot.lane.b32.xlu0 %v299, 120
      %v311 = vpop.permute.xlu0 %310
      %s313 = scalar_lea.vmem [#allocation4], 4
      %314 = vst.msk [vmem:[%s313] sm:$0xf] %vm300, %v311
      %315 = vrot.lane.b32.xlu0 %v298, 112
      %v316 = vpop.permute.xlu0 %315
      %s318 = scalar_lea.vmem [#allocation3], 8
      %319 = vst.msk [vmem:[%s318] sm:$0xf] %vm300, %v316
      %320 = vrot.lane.b32.xlu0 %v299, 112
      %v321 = vpop.permute.xlu0 %320
      %s323 = scalar_lea.vmem [#allocation4], 8
      %324 = vst.msk [vmem:[%s323] sm:$0xf] %vm300, %v321
      %325 = vrot.lane.b32.xlu0 %v298, 104
      %v326 = vpop.permute.xlu0 %325
      %s328 = scalar_lea.vmem [#allocation3], 12
      %329 = vst.msk [vmem:[%s328] sm:$0xf] %vm300, %v326
      %330 = vrot.lane.b32.xlu0 %v299, 104
      %v331 = vpop.permute.xlu0 %330
      %s333 = scalar_lea.vmem [#allocation4], 12
      %334 = vst.msk [vmem:[%s333] sm:$0xf] %vm300, %v331
      loop: start=0, step=1, limit=4
      $region37: #{transformer_forward.38} parent=31 // loop_pre_header
        _
      $region38: #{transformer_forward.38} parent=31 // loop_header
        %s336 = sphi 0, %s340
        %p337 = scmp.ge.s32.totalorder %s336, 4
      $region39: #{transformer_forward.38} parent=31 // loop_header_branch
        %339 = sbr.rel (%p337) target = $region43
      $region40: #{transformer_forward.38} parent=31 // loop_body
        %s341 = smul.addr %s336, 4
        %s342 = scalar_lea.vmem [#allocation2], %s341
        %v343 = vld [vmem:[%s342] sm:$0xf]
        %s344 = smul.addr %s336, 4
        %s345 = scalar_lea.vmem [#allocation3], %s344
        %v346 = vld [vmem:[%s345] sm:$0xf]
        %vm347 = vcmask 64512
        %v349 = vsel %vm347, %v343, 0
        %v352 = vsel %vm347, %v346, 0
        %354 = vmatprep.subr.bf16.mxu0 0
        %355 = vmatpush1.bf16.xpose.msra.mxu0 %v352
        %356 = vmatprep.subr.bf16.mxu0 0
        %357 = vmatpush1.bf16.xpose.msra.mxu0 0
        %358 = vmatprep.subr.bf16.mxu0 0
        %359 = vmatpush1.bf16.xpose.msra.mxu0 0
        %360 = vmatprep.subr.bf16.mxu0 0
        %361 = vmatpush1.bf16.xpose.msra.mxu0 0
        %362 = vmatprep.subr.bf16.mxu0 0
        %363 = vmatpush1.bf16.xpose.msra.mxu0 0
        %364 = vmatprep.subr.bf16.mxu0 0
        %365 = vmatpush1.bf16.xpose.msra.mxu0 0
        %366 = vmatprep.subr.bf16.mxu0 0
        %367 = vmatpush1.bf16.xpose.msra.mxu0 0
        %368 = vmatprep.subr.bf16.mxu0 0
        %369 = vmatpush1.bf16.xpose.msra.mxu0 0
        %370 = vmatprep.subr.bf16.mxu0 0
        %371 = vmatpush1.bf16.xpose.msra.mxu0 0
        %372 = vmatprep.subr.bf16.mxu0 0
        %373 = vmatpush1.bf16.xpose.msra.mxu0 0
        %374 = vmatprep.subr.bf16.mxu0 0
        %375 = vmatpush1.bf16.xpose.msra.mxu0 0
        %376 = vmatprep.subr.bf16.mxu0 0
        %377 = vmatpush1.bf16.xpose.msra.mxu0 0
        %378 = vmatprep.subr.bf16.mxu0 0
        %379 = vmatpush1.bf16.xpose.msra.mxu0 0
        %380 = vmatprep.subr.bf16.mxu0 0
        %381 = vmatpush1.bf16.xpose.msra.mxu0 0
        %382 = vmatprep.subr.bf16.mxu0 0
        %383 = vmatpush1.bf16.xpose.msra.mxu0 0
        %384 = vmatprep.subr.bf16.mxu0 0
        %385 = vmatpush1.bf16.xpose.msra.mxu0 0
        %386 = vmatprep.mubr.bf16.mxu0 0
        %387 = vmatmul.mubr.bf16.gmra.mrb[0].mxu0 %v349
        %v388 = vpop.f32.mrb[0].mxu0
        %v389 = vadd.f32 0.0, %v388
        %v390 = vpop.f32.mrb[0].mxu0
        %v391 = vpop.f32.mrb[0].mxu0
        %v392 = vpop.f32.mrb[0].mxu0
        %393 = vdwg.mxu0
        %s394 = smul.u32 %s336, 8
        %s395 = scalar_lea.vmem [#allocation5], %s394
        %v396 = vld [vmem:[%s395] sm:$0xff]
        %v397 = vsel %vm347, %v389, -inf
        %398 = vmax.xlane.f32.xlu0 %v397
        %v399 = vpop.xlane.xlu0 %398
        %v400 = vmax.f32 %v396, %v399
        %v401 = vsub.f32 %v396, %v400
        %v402 = vmul.f32 %v401, 1.442695
        %v403 = vpow.pop %v402
        %405 = vset.pattern.permute.xlu0 0
        %406 = vperm.xlu0 %405, %v400
        %v407 = vpop.permute.xlu0 %406
        %v409 = vsub.f32 %v389, %v407
        %v410 = vmul.f32 %v409, 1.442695
        %v411 = vpow.pop %v410
        %s412 = scalar_lea.vmem [#allocation6], %s394
        %v413 = vld [vmem:[%s412] sm:$0xff]
        %v414 = vmul.f32 %v403, %v413
        %v415 = vsel %vm347, %v411, 0.0
        %416 = vadd.xlane.f32.xlu0 %v415
        %v417 = vpop.xlane.xlu0 %416
        %v418 = vadd.f32 %v414, %v417
        %vm419 = vcmask 7168
        %420 = vst.msk [vmem:[%s412] sm:$0xff] %vm419, %v418
        %s421 = scalar_lea.vmem [#allocation7], %s394
        %v422 = vld [vmem:[%s421] sm:$0xff]
        %424 = vset.pattern.permute.xlu0 0
        %425 = vperm.xlu0 %424, %v403
        %v426 = vpop.permute.xlu0 %425
        %v428 = vmul.f32 %v426, %v422
        %v429 = vpack.c.bf16 %v411, %v411
        %s430 = smul.addr %s336, 4
        %s431 = scalar_lea.vmem [#allocation4], %s430
        %v432 = vld [vmem:[%s431] sm:$0xf]
        %v434 = vsel %vm347, %v429, 0
        %vm436 = vcmask 1043456
        %v438 = vsel %vm436, %v432, 0
        %440 = vmatprep.subr.bf16.mxu0 0
        %441 = vmatpush1.bf16.msra.mxu0 %v438
        %442 = vmatprep.subr.bf16.mxu0 0
        %443 = vmatpush1.bf16.msra.mxu0 0
        %444 = vmatprep.subr.bf16.mxu0 0
        %445 = vmatpush1.bf16.msra.mxu0 0
        %446 = vmatprep.subr.bf16.mxu0 0
        %447 = vmatpush1.bf16.msra.mxu0 0
        %448 = vmatprep.subr.bf16.mxu0 0
        %449 = vmatpush1.bf16.msra.mxu0 0
        %450 = vmatprep.subr.bf16.mxu0 0
        %451 = vmatpush1.bf16.msra.mxu0 0
        %452 = vmatprep.subr.bf16.mxu0 0
        %453 = vmatpush1.bf16.msra.mxu0 0
        %454 = vmatprep.subr.bf16.mxu0 0
        %455 = vmatpush1.bf16.msra.mxu0 0
        %456 = vmatprep.subr.bf16.mxu0 0
        %457 = vmatpush1.bf16.msra.mxu0 0
        %458 = vmatprep.subr.bf16.mxu0 0
        %459 = vmatpush1.bf16.msra.mxu0 0
        %460 = vmatprep.subr.bf16.mxu0 0
        %461 = vmatpush1.bf16.msra.mxu0 0
        %462 = vmatprep.subr.bf16.mxu0 0
        %463 = vmatpush1.bf16.msra.mxu0 0
        %464 = vmatprep.subr.bf16.mxu0 0
        %465 = vmatpush1.bf16.msra.mxu0 0
        %466 = vmatprep.subr.bf16.mxu0 0
        %467 = vmatpush1.bf16.msra.mxu0 0
        %468 = vmatprep.subr.bf16.mxu0 0
        %469 = vmatpush1.bf16.msra.mxu0 0
        %470 = vmatprep.subr.bf16.mxu0 0
        %471 = vmatpush1.bf16.msra.mxu0 0
        %472 = vmatprep.mubr.bf16.mxu0 0
        %473 = vmatmul.mubr.bf16.gmra.mrb[0].mxu0 %v434
        %v474 = vpop.f32.mrb[0].mxu0
        %v475 = vadd.f32 0.0, %v474
        %v476 = vpop.f32.mrb[0].mxu0
        %v477 = vpop.f32.mrb[0].mxu0
        %v478 = vpop.f32.mrb[0].mxu0
        %479 = vdwg.mxu0
        %v480 = vadd.f32 %v428, %v475
        %481 = vst.msk [vmem:[%s421] sm:$0xff] %vm347, %v480
        %482 = vst.msk [vmem:[%s395] sm:$0xff] %vm419, %v400
      $region41: #{transformer_forward.38} parent=31 // loop_footer
        %s340 = sadd.s32 1, %s336
      $region42: #{transformer_forward.38} parent=31 // loop_footer_branch
        %335 = sbr.rel target = $region38
      $region43: #{transformer_forward.38} parent=31 // loop_exit
        _
      // Predicated region
      $region44: #{transformer_forward.38} parent=31 // pred_check
        %p483 = pneg %p261
      $region45: #{transformer_forward.38} parent=31 // pred_check_branch
        %485 = sbr.rel (%p483) target = $region47
      $region46: #{transformer_forward.38} parent=31 // pred_region
        %v486 = vld [vmem:[#allocation7] sm:$0xff]
        %v487 = vld [vmem:[#allocation6] sm:$0xff]
        %489 = vset.pattern.permute.xlu0 0
        %490 = vperm.xlu0 %489, %v487
        %v491 = vpop.permute.xlu0 %490
        %v493 = vrcp.pop %v491
        %v494 = vmul.f32 %v486, %v493
        %v495 = vpack.c.bf16 %v494, %v494
        %496 = vst.msk [vmem:[%s259] sm:$0xf] %vm300, %v495
        %s497 = scalar_lea.vmem [#allocation7], 8
        %v498 = vld [vmem:[%s497] sm:$0xff]
        %s499 = scalar_lea.vmem [#allocation6], 8
        %v500 = vld [vmem:[%s499] sm:$0xff]
        %502 = vset.pattern.permute.xlu0 0
        %503 = vperm.xlu0 %502, %v500
        %v504 = vpop.permute.xlu0 %503
        %v506 = vrcp.pop %v504
        %v507 = vmul.f32 %v498, %v506
        %v508 = vpack.c.bf16 %v507, %v507
        %v510 = vunpack.c.l.b16 %v508
        %v511 = vpack.c.b16 %v510, %v510
        %512 = vrot.lane.b32.xlu0 %v511, 8
        %v513 = vpop.permute.xlu0 %512
        %vm515 = vcmask 126016
        %516 = vst.msk [vmem:[%s259] sm:$0xf] %vm515, %v513
        %s517 = scalar_lea.vmem [#allocation7], 16
        %v518 = vld [vmem:[%s517] sm:$0xff]
        %s519 = scalar_lea.vmem [#allocation6], 16
        %v520 = vld [vmem:[%s519] sm:$0xff]
        %522 = vset.pattern.permute.xlu0 0
        %523 = vperm.xlu0 %522, %v520
        %v524 = vpop.permute.xlu0 %523
        %v526 = vrcp.pop %v524
        %v527 = vmul.f32 %v518, %v526
        %v528 = vpack.c.bf16 %v527, %v527
        %v530 = vunpack.c.l.b16 %v528
        %v531 = vpack.c.b16 %v530, %v530
        %532 = vrot.lane.b32.xlu0 %v531, 16
        %v533 = vpop.permute.xlu0 %532
        %vm535 = vcmask 191616
        %536 = vst.msk [vmem:[%s259] sm:$0xf] %vm535, %v533
        %s537 = scalar_lea.vmem [#allocation7], 24
        %v538 = vld [vmem:[%s537] sm:$0xff]
        %s539 = scalar_lea.vmem [#allocation6], 24
        %v540 = vld [vmem:[%s539] sm:$0xff]
        %542 = vset.pattern.permute.xlu0 0
        %543 = vperm.xlu0 %542, %v540
        %v544 = vpop.permute.xlu0 %543
        %v546 = vrcp.pop %v544
        %v547 = vmul.f32 %v538, %v546
        %v548 = vpack.c.bf16 %v547, %v547
        %v550 = vunpack.c.l.b16 %v548
        %v551 = vpack.c.b16 %v550, %v550
        %552 = vrot.lane.b32.xlu0 %v551, 24
        %v553 = vpop.permute.xlu0 %552
        %vm555 = vcmask 257216
        %556 = vst.msk [vmem:[%s259] sm:$0xf] %vm555, %v553
      $region47: #{transformer_forward.38} parent=31 // pred_fallthru
        _
      %p557 = scmp.lt.s32.totalorder %s19, 1
      %s558 = scalar_select %p557, %s19, 1
      %p559 = scmp.lt.s32.totalorder %s20, 0
      %s560 = scalar_select %p559, %s20, 0
      %s561 = sadd.s32 %s560, %s558
      %s562 = smul.addr %s561, 4
      %s563 = scalar_lea.vmem %s3, %s562
      // Predicated region
      $region48: #{transformer_forward.38} parent=31 // pred_check
        %p564 = pneg %p137
      $region49: #{transformer_forward.38} parent=31 // pred_check_branch
        %566 = sbr.rel (%p564) target = $region51
      $region50: #{transformer_forward.38} parent=31 // pred_region
        _
      $region51: #{transformer_forward.38} parent=31 // pred_fallthru
        _
    $region32: #{transformer_forward.38} parent=5 // pred_fallthru
      _
    %p567 = scmp.le.s32.totalorder 2, %s9
    // Predicated region
    $region52: #{transformer_forward.38} parent=5 // pred_check
      %p568 = pneg %p567
    $region53: #{transformer_forward.38} parent=5 // pred_check_branch
      %570 = sbr.rel (%p568) target = $region55
    $region54: #{transformer_forward.38} parent=5 // pred_region
      %s571 = ssub.s32 %s9, 2
      // Predicated region
      $region56: #{transformer_forward.38} parent=54 // pred_check
        %p572 = pneg %p143
      $region57: #{transformer_forward.38} parent=54 // pred_check_branch
        %574 = sbr.rel (%p572) target = $region59
      $region58: #{transformer_forward.38} parent=54 // pred_region
        %p575 = scmp.lt.s32.totalorder %s22, 1
        %s576 = scalar_select %p575, %s22, 1
        %p577 = scmp.lt.s32.totalorder %s23, 0
        %s578 = scalar_select %p577, %s23, 0
        %s579 = sadd.s32 %s578, %s576
        %s580 = smul.addr %s579, 4
        %s581 = scalar_lea.vmem %s3, %s580
      $region59: #{transformer_forward.38} parent=54 // pred_fallthru
        _
    $region55: #{transformer_forward.38} parent=5 // pred_fallthru
      _
  $region6: #{transformer_forward.38} parent=0 // loop_footer
    %s13 = sadd.s32 1, %s9
  $region7: #{transformer_forward.38} parent=0 // loop_footer_branch
    %8 = sbr.rel target = $region3
  $region8: #{transformer_forward.38} parent=0 // loop_exit
    _

// kernel: transformer_forward.49
$region0: #{transformer_forward.49}
  #allocation0 [shape = 'u32[]', space=smem, size = 0x4, offset = 0x4, fixed_abs, tag = 'smem constant byte address 0x4 - core index']
  #allocation1 [shape = 'u32[144,128]{1,0:T(1,128)}', space=vmem, size = 0x12000, scoped, tag = 'internal scratch']
  #allocation2 [shape = 'f32[16,128]{1,0:T(8,128)}', space=vmem, size = 0x2000, scoped, tag = 'scratch operand']
  %s0 = inlined_call_operand.vmem [shape: bf16[16,32], index: 0, kind: input, shape index: {}]
  %s1 = inlined_call_operand.vmem [shape: bf16[32,128], index: 1, kind: input, shape index: {}]
  %s2 = inlined_call_operand.vmem [shape: f32[1,128], index: 2, kind: input, shape index: {}]
  %s3 = inlined_call_operand.vmem [shape: f32[16,128], index: 3, kind: output, shape index: {}]
  %s4 = sld [smem:[#allocation0]]
  $region30: #{transformer_forward.49} parent=0
    _
  %s6 = ssub.s32 1, %s4
  %s7 = scalar_select 0, %s6, %s4
  // Predicated region
  $region2: #{transformer_forward.49} parent=0 // pred_check
    _
  $region3: #{transformer_forward.49} parent=0 // pred_check_branch
    %9 = sbr.rel (0) target = $region5
  $region4: #{transformer_forward.49} parent=0 // pred_region
    _
  $region5: #{transformer_forward.49} parent=0 // pred_fallthru
    _
  // Predicated region
  $region6: #{transformer_forward.49} parent=0 // pred_check
    _
  $region7: #{transformer_forward.49} parent=0 // pred_check_branch
    %11 = sbr.rel (0) target = $region9
  $region8: #{transformer_forward.49} parent=0 // pred_region
    _
  $region9: #{transformer_forward.49} parent=0 // pred_fallthru
    _
  // Predicated region
  $region10: #{transformer_forward.49} parent=0 // pred_check
    _
  $region11: #{transformer_forward.49} parent=0 // pred_check_branch
    %13 = sbr.rel (0) target = $region13
  $region12: #{transformer_forward.49} parent=0 // pred_region
    _
  $region13: #{transformer_forward.49} parent=0 // pred_fallthru
    _
  %p15 = scmp.eq.s32.totalorder 0, 0
  // Predicated region
  $region14: #{transformer_forward.49} parent=0 // pred_check
    %p16 = pneg %p15
  $region15: #{transformer_forward.49} parent=0 // pred_check_branch
    %18 = sbr.rel (%p16) target = $region17
  $region16: #{transformer_forward.49} parent=0 // pred_region
    %19 = vst [vmem:[#allocation2] sm:$0xff] 0.0
    %20 = vst [vmem:[#allocation2 + $0x8] sm:$0xff] 0.0
  $region17: #{transformer_forward.49} parent=0 // pred_fallthru
    _
  %v21 = vld [vmem:[#allocation2] sm:$0xff]
  %v22 = vld [vmem:[#allocation2 + $0x8] sm:$0xff]
  %v23 = vld [vmem:[%s0] sm:$0xf]
  %v24 = vld [vmem:[%s0 + $0x4] sm:$0xf]
  %v25 = vld [vmem:[%s1] sm:$0xf]
  %v26 = vld [vmem:[%s1 + $0x4] sm:$0xf]
  %v27 = vld [vmem:[%s1 + $0x8] sm:$0xf]
  %v28 = vld [vmem:[%s1 + $0xc] sm:$0xf]
  %v31 = vunpack.c.l.b16 %v23
  %v32 = vunpack.c.l.b16 %v24
  %v33 = vpack.c.b16 %v32, %v31
  %v38 = vunpack.c.l.b16 %v25
  %v39 = vunpack.c.l.b16 %v26
  %v40 = vunpack.c.l.b16 %v27
  %v41 = vunpack.c.l.b16 %v28
  %v42 = vpack.c.b16 %v39, %v38
  %v43 = vpack.c.b16 %v41, %v40
  %vm46 = vcmask 261120
  %v48 = vsel %vm46, %v33, 0
  %50 = vmatprep.subr.bf16.mxu0 0
  %51 = vmatpush1.bf16.msra.mxu0 %v42
  %52 = vmatprep.subr.bf16.mxu0 0
  %53 = vmatpush1.bf16.msra.mxu0 %v43
  %54 = vmatprep.subr.bf16.mxu0 0
  %55 = vmatpush1.bf16.msra.mxu0 0
  %56 = vmatprep.subr.bf16.mxu0 0
  %57 = vmatpush1.bf16.msra.mxu0 0
  %58 = vmatprep.subr.bf16.mxu0 0
  %59 = vmatpush1.bf16.msra.mxu0 0
  %60 = vmatprep.subr.bf16.mxu0 0
  %61 = vmatpush1.bf16.msra.mxu0 0
  %62 = vmatprep.subr.bf16.mxu0 0
  %63 = vmatpush1.bf16.msra.mxu0 0
  %64 = vmatprep.subr.bf16.mxu0 0
  %65 = vmatpush1.bf16.msra.mxu0 0
  %66 = vmatprep.subr.bf16.mxu0 0
  %67 = vmatpush1.bf16.msra.mxu0 0
  %68 = vmatprep.subr.bf16.mxu0 0
  %69 = vmatpush1.bf16.msra.mxu0 0
  %70 = vmatprep.subr.bf16.mxu0 0
  %71 = vmatpush1.bf16.msra.mxu0 0
  %72 = vmatprep.subr.bf16.mxu0 0
  %73 = vmatpush1.bf16.msra.mxu0 0
  %74 = vmatprep.subr.bf16.mxu0 0
  %75 = vmatpush1.bf16.msra.mxu0 0
  %76 = vmatprep.subr.bf16.mxu0 0
  %77 = vmatpush1.bf16.msra.mxu0 0
  %78 = vmatprep.subr.bf16.mxu0 0
  %79 = vmatpush1.bf16.msra.mxu0 0
  %80 = vmatprep.subr.bf16.mxu0 0
  %81 = vmatpush1.bf16.msra.mxu0 0
  %82 = vmatprep.mubr.bf16.mxu0 0
  %83 = vmatmul.mubr.bf16.gmra.mrb[0].mxu0 %v48
  %v84 = vpop.f32.mrb[0].mxu0
  %v85 = vadd.f32 0.0, %v84
  %v86 = vpop.f32.mrb[0].mxu0
  %v87 = vpop.f32.mrb[0].mxu0
  %v88 = vadd.f32 0.0, %v87
  %v89 = vpop.f32.mrb[0].mxu0
  %90 = vdwg.mxu0
  %v91 = vadd.f32 %v21, %v85
  %v92 = vadd.f32 %v22, %v88
  %93 = vst [vmem:[#allocation2] sm:$0xff] %v91
  %94 = vst [vmem:[#allocation2 + $0x8] sm:$0xff] %v92
  // Predicated region
  $region18: #{transformer_forward.49} parent=0 // pred_check
    %p95 = pneg %p15
  $region19: #{transformer_forward.49} parent=0 // pred_check_branch
    %97 = sbr.rel (%p95) target = $region21
  $region20: #{transformer_forward.49} parent=0 // pred_region
    %v98 = vld [vmem:[#allocation2] sm:$0xff]
    %v99 = vld [vmem:[#allocation2 + $0x8] sm:$0xff]
    %v100 = vld [vmem:[%s2] sm:$0x1]
    %v102 = vlaneseq
    %v103 = vshrl.u32 %v102, 7
    %v104 = vsub.s32 0, %v103
    %v105 = vrot.slane %v100, %v104
    %v107 = vadd.f32 %v98, %v105
    %v108 = vadd.f32 %v99, %v105
    %109 = vst [vmem:[%s3] sm:$0xff] %v107
    %110 = vst [vmem:[%s3 + $0x8] sm:$0xff] %v108
  $region21: #{transformer_forward.49} parent=0 // pred_fallthru
    _
  // Predicated region
  $region22: #{transformer_forward.49} parent=0 // pred_check
    _
  $region23: #{transformer_forward.49} parent=0 // pred_check_branch
    %112 = sbr.rel (0) target = $region25
  $region24: #{transformer_forward.49} parent=0 // pred_region
    _
  $region25: #{transformer_forward.49} parent=0 // pred_fallthru
    _
  // Predicated region
  $region26: #{transformer_forward.49} parent=0 // pred_check
    _
  $region27: #{transformer_forward.49} parent=0 // pred_check_branch
    %114 = sbr.rel (0) target = $region29
  $region28: #{transformer_forward.49} parent=0 // pred_region
    _
  $region29: #{transformer_forward.49} parent=0 // pred_fallthru
    _

</llo_original>
